<compile_context>
chip_gen: v7x
topology: tpu7x:2x2x1
jax: 0.10.0
libtpu: 0.0.40
codegen_flags: <defaults>
</compile_context>

<pallas_src>
import numpy as np
import jax
import jax.numpy as jnp
from jax.experimental import pallas as pl
from jax.experimental.pallas import tpu as pltpu

_BN_EPS = 1e-5


def _round_up(x, m):
    return (x + m - 1) // m * m


def _vmem_limit_bytes():
    # Stay inside physical VMEM on every generation (v7x: 64 MiB per TensorCore).
    try:
        cap = int(pltpu.get_tpu_info().vmem_capacity_bytes)
    except Exception:
        cap = 64 * 1024 * 1024
    return int(min(cap * 3 // 4, 96 * 1024 * 1024))


def _vmem_array_bytes(shape, itemsize):
    # VMEM stores the minor two dims in (8, 128)-padded tiles: account for lane/sublane
    # padding when sizing the batch tile (channels << 128 blow up by up to 32x).
    *major, s, l = shape
    m = 1
    for d in major:
        m *= d
    return m * _round_up(max(s, 1), 8) * _round_up(max(l, 1), 128) * itemsize


def _pick_bt(n, h, w, wp, cin, cmid, cout):
    """Largest batch tile that divides n, keeps grid >= 2 (megacore split) and fits VMEM."""
    hp, ho, wo = h + 2, h // 2, w // 2
    per_img = (_vmem_array_bytes((hp, wp, cin), 4)       # xpad scratch
               + _vmem_array_bytes((hp, wp, cmid), 4)    # mid scratch
               + _vmem_array_bytes((ho, wp, cout), 4)    # pool scratch
               + 2 * _vmem_array_bytes((h, w, cin), 4)   # double-buffered input tile
               + 2 * _vmem_array_bytes((ho, wo, cout), 4))  # double-buffered output tile
    budget = _vmem_limit_bytes() // 3                    # headroom for matmul temporaries
    best = 1
    for bt in range(1, n + 1):
        if n % bt:
            continue
        if n >= 2 and n // bt < 2:
            continue
        if bt * per_img <= budget:
            best = bt
    return best


# ---------------------------------------------------------------------------
# 3x3 'same' conv over a zero-ringed (bt, h+2, wp, c) slab resident in VMEM.
# The 9 taps are produced with sublane rolls and concatenated along channels so
# the whole conv is a single MXU matmul with K = 9*c.
# Returns an f32 (bt*h*wp, cout) value; only columns < w of each row are valid.
# ---------------------------------------------------------------------------
def _conv3x3_im2col(src_ref, w_ref):
    bt, hp, wp, c = src_ref.shape
    h = hp - 2
    taps = []
    for ky in range(3):
        slab = src_ref[:, ky:ky + h, :, :]                       # (bt, h, wp, c) f32
        for kx in range(3):
            shift = (1 - kx) % wp                                # tap column = x + kx - 1
            taps.append(slab if shift == 0
                        else pltpu.roll(slab, shift=shift, axis=2))
    patches = jnp.concatenate(taps, axis=3)                      # (bt, h, wp, 9c)
    op = patches.reshape(bt * h * wp, 9 * c).astype(jnp.bfloat16)  # one cast per conv
    return jnp.dot(op, w_ref[...], preferred_element_type=jnp.float32)


# ---------------------------------------------------------------------------
# Fused kernel: stage -> conv1(+BN)+ReLU -> conv2(+BN)+ReLU -> 2x2 max pool.
# ---------------------------------------------------------------------------
def _block_kernel(x_ref, w1_ref, b1_ref, w2_ref, b2_ref, o_ref,
                  xpad_ref, mid_ref, hm_ref):
    bt, h, w, cin = x_ref.shape
    _, hp, wp, _ = xpad_ref.shape
    cmid = mid_ref.shape[3]
    _, ho, wo, cout = o_ref.shape

    # ---- stage the input into a zero-ringed slab (all minor dims stored dense;
    #      re-written every grid step -> safe under megacore grid splitting) ----------
    zrow_in = jnp.zeros((bt, 1, wp, cin), jnp.float32)
    xpad_ref[:, 0:1, :, :] = zrow_in
    xpad_ref[:, hp - 1:hp, :, :] = zrow_in
    xpad_ref[:, 1:h + 1, :, :] = jnp.concatenate(
        [x_ref[...], jnp.zeros((bt, h, wp - w, cin), jnp.float32)], axis=2)

    # column-validity mask: pad columns >= w must stay zero for conv2's right halo
    colmask = (jax.lax.broadcasted_iota(jnp.int32, (1, 1, wp, cmid), 2)
               < w).astype(jnp.float32)

    # ---- conv1 (BN scale folded into weights) + bias + ReLU + mask -------------------
    y1 = _conv3x3_im2col(xpad_ref, w1_ref) + b1_ref[...]
    y1 = jnp.maximum(y1, 0.0).reshape(bt, h, wp, cmid) * colmask
    zrow_mid = jnp.zeros((bt, 1, wp, cmid), jnp.float32)
    mid_ref[:, 0:1, :, :] = zrow_mid
    mid_ref[:, hp - 1:hp, :, :] = zrow_mid
    mid_ref[:, 1:h + 1, :, :] = y1                        # dense full-width store

    # ---- conv2 (BN scale folded into weights) + bias + ReLU --------------------------
    y2 = _conv3x3_im2col(mid_ref, w2_ref) + b2_ref[...]
    y2 = jnp.maximum(y2, 0.0).reshape(bt, h, wp, cout)

    # ---- 2x2 max pool (stride 2) ------------------------------------------------------
    y2 = y2.reshape(bt, ho, 2, wp, cout)                  # major-dim split: free
    hm = jnp.maximum(y2[:, :, 0, :, :], y2[:, :, 1, :, :])
    # pair column j with j+1 via an XLU roll (column wp-1 wraps a zero pad column)
    hm = jnp.maximum(hm, pltpu.roll(hm, shift=wp - 1, axis=2))
    hm_ref[...] = hm
    o_ref[...] = hm_ref[:, :, pl.ds(0, wo, stride=2), :].astype(o_ref.dtype)


# ---------------------------------------------------------------------------
# Public wrapper (NCHW in / NCHW out, like the PyTorch module).
# ---------------------------------------------------------------------------
def _fold_conv_bn(w, conv_b, gamma, beta, mean, var):
    """Fold inference-mode BN into the conv: scale -> weights (f32, then bf16), bias kept."""
    scale = gamma * jax.lax.rsqrt(var + _BN_EPS)                        # (cout,)
    wf = (w.astype(jnp.float32) * scale).astype(jnp.bfloat16)           # fold in f32 first
    kh, kw, ci, co = w.shape
    wf = wf.reshape(kh * kw * ci, co)                                   # matches tap order
    bias = (beta + (conv_b - mean) * scale).reshape(1, co).astype(jnp.float32)
    return wf, bias


def conv3x3_block_x2(x_nchw, params):
    x = jnp.transpose(x_nchw, (0, 2, 3, 1)).astype(jnp.float32)         # NCHW -> NHWC
    n, h, w, cin = x.shape
    assert h % 2 == 0 and w % 2 == 0, "MaxPool2d(2) needs even spatial dims"
    assert params["w1"].shape[:3] == (3, 3, cin)
    cmid = params["w1"].shape[-1]
    cout = params["w2"].shape[-1]
    assert params["w2"].shape == (3, 3, cmid, cout)
    ho, wo = h // 2, w // 2
    hp = h + 2
    wp = _round_up(w + 1, 8)       # sublane aligned, >= 1 zero column on the right
    assert wp >= w + 1, "cyclic-roll 'same' padding needs a guaranteed-zero wrap column"

    w1f, b1 = _fold_conv_bn(params["w1"], params["cb1"], params["g1"],
                            params["be1"], params["m1"], params["v1"])
    w2f, b2 = _fold_conv_bn(params["w2"], params["cb2"], params["g2"],
                            params["be2"], params["m2"], params["v2"])

    bt = _pick_bt(n, h, w, wp, cin, cmid, cout)

    out = pl.pallas_call(
        _block_kernel,
        out_shape=jax.ShapeDtypeStruct((n, ho, wo, cout), jnp.float32),
        grid=(n // bt,),
        in_specs=[
            pl.BlockSpec((bt, h, w, cin), lambda i: (i, 0, 0, 0)),
            pl.BlockSpec((9 * cin, cmid), lambda i: (0, 0)),
            pl.BlockSpec((1, cmid), lambda i: (0, 0)),
            pl.BlockSpec((9 * cmid, cout), lambda i: (0, 0)),
            pl.BlockSpec((1, cout), lambda i: (0, 0)),
        ],
        out_specs=pl.BlockSpec((bt, ho, wo, cout), lambda i: (i, 0, 0, 0)),
        scratch_shapes=[
            pltpu.VMEM((bt, hp, wp, cin), jnp.float32),    # zero-ringed staged input
            pltpu.VMEM((bt, hp, wp, cmid), jnp.float32),   # zero-ringed conv1 output
            pltpu.VMEM((bt, ho, wp, cout), jnp.float32),   # H+W max-pooled rows
        ],
        compiler_params=pltpu.CompilerParams(
            dimension_semantics=("parallel",),
            vmem_limit_bytes=_vmem_limit_bytes(),
        ),
    )(x, w1f, b1, w2f, b2)

    return jnp.transpose(out, (0, 3, 1, 2))                # NHWC -> NCHW


# ---------------------------------------------------------------------------
# Deterministic parameter construction (shapes follow the PyTorch __init__).
# ---------------------------------------------------------------------------
def make_params(key, in_ch, out_ch):
    ks = jax.random.split(key, 12)

    def conv_init(kw, kb, cin, cout):
        fan_in = cin * 9
        wgt = jax.random.normal(kw, (3, 3, cin, cout), jnp.float32) * np.sqrt(2.0 / fan_in)
        b = 0.05 * jax.random.normal(kb, (cout,), jnp.float32)
        return wgt, b

    def bn_init(kg, kb, km, kv, c):
        gamma = 1.0 + 0.1 * jax.random.normal(kg, (c,), jnp.float32)
        beta = 0.1 * jax.random.normal(kb, (c,), jnp.float32)
        mean = 0.1 * jax.random.normal(km, (c,), jnp.float32)
        var = 1.0 + 0.1 * jnp.abs(jax.random.normal(kv, (c,), jnp.float32))
        return gamma, beta, mean, var

    w1, cb1 = conv_init(ks[0], ks[1], in_ch, out_ch)
    g1, be1, m1, v1 = bn_init(ks[2], ks[3], ks[4], ks[5], out_ch)
    w2, cb2 = conv_init(ks[6], ks[7], out_ch, out_ch)
    g2, be2, m2, v2 = bn_init(ks[8], ks[9], ks[10], ks[11], out_ch)
    return dict(w1=w1, cb1=cb1, g1=g1, be1=be1, m1=m1, v1=v1,
                w2=w2, cb2=cb2, g2=g2, be2=be2, m2=m2, v2=v2)


# ---------------------------------------------------------------------------
# Pure-JAX (XLA) reference of the PyTorch module for the correctness check.
# ---------------------------------------------------------------------------
def _reference_forward(x_nchw, p):
    x = jnp.transpose(x_nchw, (0, 2, 3, 1)).astype(jnp.float32)

    def conv_bn_relu(y, wgt, cb, gamma, beta, mean, var):
        y = jax.lax.conv_general_dilated(
            y, wgt, window_strides=(1, 1), padding="SAME",
            dimension_numbers=("NHWC", "HWIO", "NHWC")) + cb
        y = (y - mean) / jnp.sqrt(var + _BN_EPS) * gamma + beta
        return jnp.maximum(y, 0.0)

    y = conv_bn_relu(x, p["w1"], p["cb1"], p["g1"], p["be1"], p["m1"], p["v1"])
    y = conv_bn_relu(y, p["w2"], p["cb2"], p["g2"], p["be2"], p["m2"], p["v2"])
    n, h, w, c = y.shape
    y = y.reshape(n, h // 2, 2, w // 2, 2, c).max(axis=(2, 4))
    return jnp.transpose(y, (0, 3, 1, 2))


if __name__ == "__main__":
    key = jax.random.PRNGKey(0)
    kp, kx = jax.random.split(key)
    in_ch, out_ch = 4, 32
    params = make_params(kp, in_ch, out_ch)
    x = jax.random.normal(kx, (2, in_ch, 16, 16), jnp.float32)   # NCHW, like PyTorch

    fwd = jax.jit(conv3x3_block_x2)
    out = jax.block_until_ready(fwd(x, params))
    assert out.shape == (2, out_ch, 8, 8), out.shape
    assert bool(jnp.all(jnp.isfinite(out)))

    ref = _reference_forward(x, params)
    rel_err = float(jnp.sqrt(jnp.sum((out - ref) ** 2)) /
                    (jnp.sqrt(jnp.sum(ref ** 2)) + 1e-8))
    assert rel_err < 3e-2, f"relative L2 error too high: {rel_err}"   # bf16 MXU tolerance
    print("KERNEL_OK")
</pallas_src>

<mosaic_0001>
module attributes {stable_mosaic.version = 11 : i64} {
  func.func @_block_kernel(%arg0: i32, %arg1: memref<1x16x16x4xf32, #tpu.memory_space<vmem>>, %arg2: memref<36x32xbf16, #tpu.memory_space<vmem>>, %arg3: memref<1x32xf32, #tpu.memory_space<vmem>>, %arg4: memref<288x32xbf16, #tpu.memory_space<vmem>>, %arg5: memref<1x32xf32, #tpu.memory_space<vmem>>, %arg6: memref<1x8x8x32xf32, #tpu.memory_space<vmem>>, %arg7: memref<1x18x24x4xf32, #tpu.memory_space<vmem>>, %arg8: memref<1x18x24x32xf32, #tpu.memory_space<vmem>>, %arg9: memref<1x8x24x32xf32, #tpu.memory_space<vmem>>) attributes {dimension_semantics = [#tpu.dimension_semantics<parallel>], iteration_bounds = array<i64: 2>, scalar_prefetch = 0 : i64, scratch_operands = 3 : i64, tpu.core_type = #tpu.core_type<tc>, window_params = [{transform_indices = @transform_0, window_bounds = array<i64: 1, 16, 16, 4>}, {pipeline_mode = #tpu.pipeline_mode<synchronous>, transform_indices = @transform_1, window_bounds = array<i64: 36, 32>}, {pipeline_mode = #tpu.pipeline_mode<synchronous>, transform_indices = @transform_2, window_bounds = array<i64: 1, 32>}, {pipeline_mode = #tpu.pipeline_mode<synchronous>, transform_indices = @transform_3, window_bounds = array<i64: 288, 32>}, {pipeline_mode = #tpu.pipeline_mode<synchronous>, transform_indices = @transform_4, window_bounds = array<i64: 1, 32>}, {transform_indices = @transform_5, window_bounds = array<i64: 1, 8, 8, 32>}]} {
    %cst = arith.constant 0.000000e+00 : f32
    %0 = vector.broadcast %cst : f32 to vector<1x1x24x4xf32>
    %c0 = arith.constant 0 : index
    %c0_0 = arith.constant 0 : index
    %c0_1 = arith.constant 0 : index
    %c0_2 = arith.constant 0 : index
    %1 = vector.load %arg7[%c0, %c0_0, %c0_1, %c0_2] : memref<1x18x24x4xf32, #tpu.memory_space<vmem>>, vector<1x1x24x4xf32>
    tpu.vector_store %arg7[%c0, %c0_0, %c0_1, %c0_2], %0 {strides = array<i32>} : memref<1x18x24x4xf32, #tpu.memory_space<vmem>>, vector<1x1x24x4xf32>,
    %c0_3 = arith.constant 0 : index
    %c17 = arith.constant 17 : index
    %c0_4 = arith.constant 0 : index
    %c0_5 = arith.constant 0 : index
    %2 = vector.load %arg7[%c0_3, %c17, %c0_4, %c0_5] : memref<1x18x24x4xf32, #tpu.memory_space<vmem>>, vector<1x1x24x4xf32>
    tpu.vector_store %arg7[%c0_3, %c17, %c0_4, %c0_5], %0 {strides = array<i32>} : memref<1x18x24x4xf32, #tpu.memory_space<vmem>>, vector<1x1x24x4xf32>,
    %c0_6 = arith.constant 0 : index
    %c0_7 = arith.constant 0 : index
    %c0_8 = arith.constant 0 : index
    %c0_9 = arith.constant 0 : index
    %3 = vector.load %arg1[%c0_6, %c0_7, %c0_8, %c0_9] : memref<1x16x16x4xf32, #tpu.memory_space<vmem>>, vector<1x16x16x4xf32>
    %cst_10 = arith.constant 0.000000e+00 : f32
    %4 = vector.broadcast %cst_10 : f32 to vector<1x16x8x4xf32>
    %5 = tpu.concatenate %3, %4 in 2 : vector<1x16x16x4xf32>, vector<1x16x8x4xf32> -> vector<1x16x24x4xf32>
    %c0_11 = arith.constant 0 : index
    %c1 = arith.constant 1 : index
    %c0_12 = arith.constant 0 : index
    %c0_13 = arith.constant 0 : index
    %6 = vector.load %arg7[%c0_11, %c1, %c0_12, %c0_13] : memref<1x18x24x4xf32, #tpu.memory_space<vmem>>, vector<1x16x24x4xf32>
    tpu.vector_store %arg7[%c0_11, %c1, %c0_12, %c0_13], %5 {strides = array<i32>} : memref<1x18x24x4xf32, #tpu.memory_space<vmem>>, vector<1x16x24x4xf32>,
    %7 = tpu.iota {dimensions = array<i32: 2>} : vector<1x1x24x32xi32>
    %c16_i32 = arith.constant 16 : i32
    %8 = vector.broadcast %c16_i32 : i32 to vector<1x1x24x32xi32>
    %9 = arith.cmpi slt, %7, %8 : vector<1x1x24x32xi32>
    %10 = arith.extui %9 : vector<1x1x24x32xi1> to vector<1x1x24x32xi32>
    %11 = arith.sitofp %10 : vector<1x1x24x32xi32> to vector<1x1x24x32xf32>
    %c0_14 = arith.constant 0 : index
    %c0_15 = arith.constant 0 : index
    %c0_16 = arith.constant 0 : index
    %c0_17 = arith.constant 0 : index
    %12 = vector.load %arg7[%c0_14, %c0_15, %c0_16, %c0_17] : memref<1x18x24x4xf32, #tpu.memory_space<vmem>>, vector<1x16x24x4xf32>
    %c1_i32 = arith.constant 1 : i32
    %13 = tpu.dynamic_rotate %12 by %c1_i32 dim 2 : vector<1x16x24x4xf32>, i32 -> vector<1x16x24x4xf32>
    %c23_i32 = arith.constant 23 : i32
    %14 = tpu.dynamic_rotate %12 by %c23_i32 dim 2 : vector<1x16x24x4xf32>, i32 -> vector<1x16x24x4xf32>
    %c0_18 = arith.constant 0 : index
    %c1_19 = arith.constant 1 : index
    %c0_20 = arith.constant 0 : index
    %c0_21 = arith.constant 0 : index
    %15 = vector.load %arg7[%c0_18, %c1_19, %c0_20, %c0_21] : memref<1x18x24x4xf32, #tpu.memory_space<vmem>>, vector<1x16x24x4xf32>
    %c1_i32_22 = arith.constant 1 : i32
    %16 = tpu.dynamic_rotate %15 by %c1_i32_22 dim 2 : vector<1x16x24x4xf32>, i32 -> vector<1x16x24x4xf32>
    %c23_i32_23 = arith.constant 23 : i32
    %17 = tpu.dynamic_rotate %15 by %c23_i32_23 dim 2 : vector<1x16x24x4xf32>, i32 -> vector<1x16x24x4xf32>
    %c0_24 = arith.constant 0 : index
    %c2 = arith.constant 2 : index
    %c0_25 = arith.constant 0 : index
    %c0_26 = arith.constant 0 : index
    %18 = vector.load %arg7[%c0_24, %c2, %c0_25, %c0_26] : memref<1x18x24x4xf32, #tpu.memory_space<vmem>>, vector<1x16x24x4xf32>
    %c1_i32_27 = arith.constant 1 : i32
    %19 = tpu.dynamic_rotate %18 by %c1_i32_27 dim 2 : vector<1x16x24x4xf32>, i32 -> vector<1x16x24x4xf32>
    %c23_i32_28 = arith.constant 23 : i32
    %20 = tpu.dynamic_rotate %18 by %c23_i32_28 dim 2 : vector<1x16x24x4xf32>, i32 -> vector<1x16x24x4xf32>
    %21 = tpu.concatenate %13, %12, %14, %16, %15, %17, %19, %18, %20 in 3 : vector<1x16x24x4xf32>, vector<1x16x24x4xf32>, vector<1x16x24x4xf32>, vector<1x16x24x4xf32>, vector<1x16x24x4xf32>, vector<1x16x24x4xf32>, vector<1x16x24x4xf32>, vector<1x16x24x4xf32>, vector<1x16x24x4xf32> -> vector<1x16x24x36xf32>
    %22 = vector.shape_cast %21 : vector<1x16x24x36xf32> to vector<384x36xf32>
    %23 = arith.truncf %22 : vector<384x36xf32> to vector<384x36xbf16>
    %c0_29 = arith.constant 0 : index
    %c0_30 = arith.constant 0 : index
    %24 = vector.load %arg2[%c0_29, %c0_30] : memref<36x32xbf16, #tpu.memory_space<vmem>>, vector<36x32xbf16>
    %cst_31 = arith.constant dense<0.000000e+00> : vector<384x32xf32>
    %25 = tpu.matmul %23, %24, %cst_31 {dimension_numbers = #tpu.dot_dimension_numbers<[1], [0], [0], [1], [0, 0, 1, 1], [], []>} : vector<384x36xbf16>, vector<36x32xbf16>, vector<384x32xf32> -> vector<384x32xf32>
    %c0_32 = arith.constant 0 : index
    %c0_33 = arith.constant 0 : index
    %26 = vector.load %arg3[%c0_32, %c0_33] : memref<1x32xf32, #tpu.memory_space<vmem>>, vector<1x32xf32>
    %27 = vector.broadcast %26 : vector<1x32xf32> to vector<384x32xf32>
    %28 = arith.addf %25, %27 : vector<384x32xf32>
    %cst_34 = arith.constant 0.000000e+00 : f32
    %29 = vector.broadcast %cst_34 : f32 to vector<384x32xf32>
    %30 = arith.maximumf %28, %29 : vector<384x32xf32>
    %31 = vector.shape_cast %30 : vector<384x32xf32> to vector<1x16x24x32xf32>
    %32 = vector.broadcast %11 : vector<1x1x24x32xf32> to vector<1x16x24x32xf32>
    %33 = arith.mulf %31, %32 : vector<1x16x24x32xf32>
    %cst_35 = arith.constant 0.000000e+00 : f32
    %34 = vector.broadcast %cst_35 : f32 to vector<1x1x24x32xf32>
    %c0_36 = arith.constant 0 : index
    %c0_37 = arith.constant 0 : index
    %c0_38 = arith.constant 0 : index
    %c0_39 = arith.constant 0 : index
    %35 = vector.load %arg8[%c0_36, %c0_37, %c0_38, %c0_39] : memref<1x18x24x32xf32, #tpu.memory_space<vmem>>, vector<1x1x24x32xf32>
    tpu.vector_store %arg8[%c0_36, %c0_37, %c0_38, %c0_39], %34 {strides = array<i32>} : memref<1x18x24x32xf32, #tpu.memory_space<vmem>>, vector<1x1x24x32xf32>,
    %c0_40 = arith.constant 0 : index
    %c17_41 = arith.constant 17 : index
    %c0_42 = arith.constant 0 : index
    %c0_43 = arith.constant 0 : index
    %36 = vector.load %arg8[%c0_40, %c17_41, %c0_42, %c0_43] : memref<1x18x24x32xf32, #tpu.memory_space<vmem>>, vector<1x1x24x32xf32>
    tpu.vector_store %arg8[%c0_40, %c17_41, %c0_42, %c0_43], %34 {strides = array<i32>} : memref<1x18x24x32xf32, #tpu.memory_space<vmem>>, vector<1x1x24x32xf32>,
    %c0_44 = arith.constant 0 : index
    %c1_45 = arith.constant 1 : index
    %c0_46 = arith.constant 0 : index
    %c0_47 = arith.constant 0 : index
    %37 = vector.load %arg8[%c0_44, %c1_45, %c0_46, %c0_47] : memref<1x18x24x32xf32, #tpu.memory_space<vmem>>, vector<1x16x24x32xf32>
    tpu.vector_store %arg8[%c0_44, %c1_45, %c0_46, %c0_47], %33 {strides = array<i32>} : memref<1x18x24x32xf32, #tpu.memory_space<vmem>>, vector<1x16x24x32xf32>,
    %c0_48 = arith.constant 0 : index
    %c0_49 = arith.constant 0 : index
    %c0_50 = arith.constant 0 : index
    %c0_51 = arith.constant 0 : index
    %38 = vector.load %arg8[%c0_48, %c0_49, %c0_50, %c0_51] : memref<1x18x24x32xf32, #tpu.memory_space<vmem>>, vector<1x16x24x32xf32>
    %c1_i32_52 = arith.constant 1 : i32
    %39 = tpu.dynamic_rotate %38 by %c1_i32_52 dim 2 : vector<1x16x24x32xf32>, i32 -> vector<1x16x24x32xf32>
    %c23_i32_53 = arith.constant 23 : i32
    %40 = tpu.dynamic_rotate %38 by %c23_i32_53 dim 2 : vector<1x16x24x32xf32>, i32 -> vector<1x16x24x32xf32>
    %c0_54 = arith.constant 0 : index
    %c1_55 = arith.constant 1 : index
    %c0_56 = arith.constant 0 : index
    %c0_57 = arith.constant 0 : index
    %41 = vector.load %arg8[%c0_54, %c1_55, %c0_56, %c0_57] : memref<1x18x24x32xf32, #tpu.memory_space<vmem>>, vector<1x16x24x32xf32>
    %c1_i32_58 = arith.constant 1 : i32
    %42 = tpu.dynamic_rotate %41 by %c1_i32_58 dim 2 : vector<1x16x24x32xf32>, i32 -> vector<1x16x24x32xf32>
    %c23_i32_59 = arith.constant 23 : i32
    %43 = tpu.dynamic_rotate %41 by %c23_i32_59 dim 2 : vector<1x16x24x32xf32>, i32 -> vector<1x16x24x32xf32>
    %c0_60 = arith.constant 0 : index
    %c2_61 = arith.constant 2 : index
    %c0_62 = arith.constant 0 : index
    %c0_63 = arith.constant 0 : index
    %44 = vector.load %arg8[%c0_60, %c2_61, %c0_62, %c0_63] : memref<1x18x24x32xf32, #tpu.memory_space<vmem>>, vector<1x16x24x32xf32>
    %c1_i32_64 = arith.constant 1 : i32
    %45 = tpu.dynamic_rotate %44 by %c1_i32_64 dim 2 : vector<1x16x24x32xf32>, i32 -> vector<1x16x24x32xf32>
    %c23_i32_65 = arith.constant 23 : i32
    %46 = tpu.dynamic_rotate %44 by %c23_i32_65 dim 2 : vector<1x16x24x32xf32>, i32 -> vector<1x16x24x32xf32>
    %47 = tpu.concatenate %39, %38, %40, %42, %41, %43, %45, %44, %46 in 3 : vector<1x16x24x32xf32>, vector<1x16x24x32xf32>, vector<1x16x24x32xf32>, vector<1x16x24x32xf32>, vector<1x16x24x32xf32>, vector<1x16x24x32xf32>, vector<1x16x24x32xf32>, vector<1x16x24x32xf32>, vector<1x16x24x32xf32> -> vector<1x16x24x288xf32>
    %48 = vector.shape_cast %47 : vector<1x16x24x288xf32> to vector<384x288xf32>
    %49 = arith.truncf %48 : vector<384x288xf32> to vector<384x288xbf16>
    %c0_66 = arith.constant 0 : index
    %c0_67 = arith.constant 0 : index
    %50 = vector.load %arg4[%c0_66, %c0_67] : memref<288x32xbf16, #tpu.memory_space<vmem>>, vector<288x32xbf16>
    %cst_68 = arith.constant dense<0.000000e+00> : vector<384x32xf32>
    %51 = tpu.matmul %49, %50, %cst_68 {dimension_numbers = #tpu.dot_dimension_numbers<[1], [0], [0], [1], [0, 0, 1, 1], [], []>} : vector<384x288xbf16>, vector<288x32xbf16>, vector<384x32xf32> -> vector<384x32xf32>
    %c0_69 = arith.constant 0 : index
    %c0_70 = arith.constant 0 : index
    %52 = vector.load %arg5[%c0_69, %c0_70] : memref<1x32xf32, #tpu.memory_space<vmem>>, vector<1x32xf32>
    %53 = vector.broadcast %52 : vector<1x32xf32> to vector<384x32xf32>
    %54 = arith.addf %51, %53 : vector<384x32xf32>
    %cst_71 = arith.constant 0.000000e+00 : f32
    %55 = vector.broadcast %cst_71 : f32 to vector<384x32xf32>
    %56 = arith.maximumf %54, %55 : vector<384x32xf32>
    %57 = vector.shape_cast %56 : vector<384x32xf32> to vector<1x16x24x32xf32>
    %58 = vector.shape_cast %57 : vector<1x16x24x32xf32> to vector<1x8x2x24x32xf32>
    %59 = vector.extract_strided_slice %58 {offsets = [0, 0, 0, 0, 0], sizes = [1, 8, 1, 24, 32], strides = [1, 1, 1, 1, 1]} : vector<1x8x2x24x32xf32> to vector<1x8x1x24x32xf32>
    %60 = vector.shape_cast %59 : vector<1x8x1x24x32xf32> to vector<1x8x24x32xf32>
    %61 = vector.extract_strided_slice %58 {offsets = [0, 0, 1, 0, 0], sizes = [1, 8, 1, 24, 32], strides = [1, 1, 1, 1, 1]} : vector<1x8x2x24x32xf32> to vector<1x8x1x24x32xf32>
    %62 = vector.shape_cast %61 : vector<1x8x1x24x32xf32> to vector<1x8x24x32xf32>
    %63 = arith.maximumf %60, %62 : vector<1x8x24x32xf32>
    %c23_i32_72 = arith.constant 23 : i32
    %64 = tpu.dynamic_rotate %63 by %c23_i32_72 dim 2 : vector<1x8x24x32xf32>, i32 -> vector<1x8x24x32xf32>
    %65 = arith.maximumf %63, %64 : vector<1x8x24x32xf32>
    %c0_73 = arith.constant 0 : index
    %c0_74 = arith.constant 0 : index
    %c0_75 = arith.constant 0 : index
    %c0_76 = arith.constant 0 : index
    %66 = vector.load %arg9[%c0_73, %c0_74, %c0_75, %c0_76] : memref<1x8x24x32xf32, #tpu.memory_space<vmem>>, vector<1x8x24x32xf32>
    tpu.vector_store %arg9[%c0_73, %c0_74, %c0_75, %c0_76], %65 {strides = array<i32>} : memref<1x8x24x32xf32, #tpu.memory_space<vmem>>, vector<1x8x24x32xf32>,
    %c0_77 = arith.constant 0 : index
    %c0_78 = arith.constant 0 : index
    %c0_79 = arith.constant 0 : index
    %c0_80 = arith.constant 0 : index
    %67 = tpu.strided_load %arg9[%c0_77, %c0_78, %c0_79, %c0_80] {strides = array<i32: 1, 1, 2, 1>} : memref<1x8x24x32xf32, #tpu.memory_space<vmem>>, vector<1x8x8x32xf32>
    %c0_81 = arith.constant 0 : index
    %c0_82 = arith.constant 0 : index
    %c0_83 = arith.constant 0 : index
    %c0_84 = arith.constant 0 : index
    %68 = vector.load %arg6[%c0_81, %c0_82, %c0_83, %c0_84] : memref<1x8x8x32xf32, #tpu.memory_space<vmem>>, vector<1x8x8x32xf32>
    tpu.vector_store %arg6[%c0_81, %c0_82, %c0_83, %c0_84], %67 {strides = array<i32>} : memref<1x8x8x32xf32, #tpu.memory_space<vmem>>, vector<1x8x8x32xf32>,
    return
  }
  func.func @transform_0(%arg0: i32) -> (i32, i32, i32, i32) {
    %c0_i32 = arith.constant 0 : i32
    %c0_i32_0 = arith.constant 0 : i32
    %c0_i32_1 = arith.constant 0 : i32
    %c0_i32_2 = arith.constant 0 : i32
    return %arg0, %c0_i32, %c0_i32_0, %c0_i32_1 : i32, i32, i32, i32
  }
  func.func @transform_1(%arg0: i32) -> (i32, i32) {
    %c0_i32 = arith.constant 0 : i32
    %c0_i32_0 = arith.constant 0 : i32
    %c0_i32_1 = arith.constant 0 : i32
    return %c0_i32, %c0_i32_0 : i32, i32
  }
  func.func @transform_2(%arg0: i32) -> (i32, i32) {
    %c0_i32 = arith.constant 0 : i32
    %c0_i32_0 = arith.constant 0 : i32
    %c0_i32_1 = arith.constant 0 : i32
    return %c0_i32, %c0_i32_0 : i32, i32
  }
  func.func @transform_3(%arg0: i32) -> (i32, i32) {
    %c0_i32 = arith.constant 0 : i32
    %c0_i32_0 = arith.constant 0 : i32
    %c0_i32_1 = arith.constant 0 : i32
    return %c0_i32, %c0_i32_0 : i32, i32
  }
  func.func @transform_4(%arg0: i32) -> (i32, i32) {
    %c0_i32 = arith.constant 0 : i32
    %c0_i32_0 = arith.constant 0 : i32
    %c0_i32_1 = arith.constant 0 : i32
    return %c0_i32, %c0_i32_0 : i32, i32
  }
  func.func @transform_5(%arg0: i32) -> (i32, i32, i32, i32) {
    %c0_i32 = arith.constant 0 : i32
    %c0_i32_0 = arith.constant 0 : i32
    %c0_i32_1 = arith.constant 0 : i32
    %c0_i32_2 = arith.constant 0 : i32
    return %arg0, %c0_i32, %c0_i32_0, %c0_i32_1 : i32, i32, i32, i32
  }
}

</mosaic_0001>

<llo_original>
// kernel: conv3x3_block_x2.1
$region0: #{conv3x3_block_x2.1}
  #allocation0 [shape = 'u32[]', space=smem, size = 0x4, offset = 0x4, fixed_abs, tag = 'smem constant byte address 0x4 - core index']
  #allocation1 [shape = 'u32[144,128]{1,0:T(1,128)}', space=vmem, size = 0x12000, scoped, tag = 'internal scratch']
  #allocation2 [shape = 'f32[1,18,24,4]{3,2,1,0:T(8,128)}', space=vmem, size = 0x36000, scoped, tag = 'scratch operand']
  #allocation3 [shape = 'f32[1,18,24,32]{3,2,1,0:T(8,128)}', space=vmem, size = 0x36000, scoped, tag = 'scratch operand']
  #allocation4 [shape = 'f32[1,8,24,32]{3,2,1,0:T(8,128)}', space=vmem, size = 0x18000, scoped, tag = 'scratch operand']
  %s0 = inlined_call_operand.vmem [shape: f32[2,16,16,4], index: 0, kind: input, shape index: {}]
  %s1 = inlined_call_operand.vmem [shape: bf16[36,32], index: 1, kind: input, shape index: {}]
  %s2 = inlined_call_operand.vmem [shape: f32[1,32], index: 2, kind: input, shape index: {}]
  %s3 = inlined_call_operand.vmem [shape: bf16[288,32], index: 3, kind: input, shape index: {}]
  %s4 = inlined_call_operand.vmem [shape: f32[1,32], index: 4, kind: input, shape index: {}]
  %s5 = inlined_call_operand.hbm [shape: f32[2,8,8,32], index: 5, kind: output, shape index: {}]
  %s6 = sld [smem:[#allocation0]]
  $region53: #{conv3x3_block_x2.1} parent=0
    _
  %s8 = ssub.s32 1, %s6
  %s9 = scalar_select 0, %s8, %s6
  $region1: #{conv3x3_block_x2.1} parent=0
    #allocation5 [shape = 'u8[65536]{0}', space=vmem, size = 0x10000, scoped, tag = 'output window, operand 0']
    #allocation6 [shape = 's32[2]{0}', space=sflag, size = 0x8, scoped, tag = 'scoped memory for conv3x3_block_x2.1']
    %10 = vsyncpa [#allocation6], 0
    %s11 = scalar_lea.sflag [#allocation6], 1
    %12 = vsyncpa %s11, 0
    loop: start=0, step=1, limit=4
    $region2: #{conv3x3_block_x2.1} parent=1 // loop_pre_header
      _
    $region3: #{conv3x3_block_x2.1} parent=1 // loop_header
      %s14 = sphi 0, %s18
      %p15 = scmp.ge.s32.totalorder %s14, 4
      %s24 = sphi 0, %s26
      %s27 = sphi 0, %s24
      %s28 = sphi 0, %s27
      %s44 = sphi 0, %s28
      %s48 = sphi 0, %s48
      %s50 = sphi 0, %s48
      %s51 = sphi 0, %s50
      %s65 = sphi 0, %s51
      %s69 = sphi 0, %s69
      %s71 = sphi 0, %s69
      %s72 = sphi 0, %s71
      %s86 = sphi 0, %s72
      %s90 = sphi 0, %s90
      %s92 = sphi 0, %s90
      %s93 = sphi 0, %s92
      %s107 = sphi 0, %s93
      %s111 = sphi 0, %s111
      %s113 = sphi 0, %s111
      %s114 = sphi 0, %s113
      %s128 = sphi 0, %s114
      %s134 = sphi 0, %s136
      %s137 = sphi 0, %s134
      %s138 = sphi 0, %s137
      %s154 = sphi 0, %s138
    $region4: #{conv3x3_block_x2.1} parent=1 // loop_header_branch
      %17 = sbr.rel (%p15) target = $region8
    $region5: #{conv3x3_block_x2.1} parent=1 // loop_body
      %s19 = ssub.s32 %s14, 1
      %s20 = ssub.s32 %s14, 2
      %s21 = sadd.s32 %s14, 1
      %s22 = ssub.s32 %s14, %s21
      %p23 = scmp.eq.s32.totalorder %s22, 0
      %s25 = sadd.s32 %s24, 1
      %s26 = scalar_select %p23, %s24, %s25
      %p29 = pneg %p23
      %p30 = scmp.eq.s32.totalorder %s14, 1
      %p31 = por %p29, %p30
      %p32 = scmp.ne.s32.totalorder %s24, %s27
      %p33 = scmp.eq.s32.totalorder %s14, 0
      %p34 = por %p32, %p33
      %p35 = scmp.ne.s32.totalorder %s24, %s27
      %p36 = scmp.eq.s32.totalorder %s19, 1
      %p37 = por %p35, %p36
      %p38 = scmp.ne.s32.totalorder %s27, %s28
      %p39 = scmp.eq.s32.totalorder %s19, 0
      %p40 = por %p38, %p39
      %p41 = scmp.ne.s32.totalorder %s27, %s28
      %p42 = scmp.eq.s32.totalorder %s20, 1
      %p43 = por %p41, %p42
      %p45 = scmp.ne.s32.totalorder %s28, %s44
      %p46 = scmp.eq.s32.totalorder %s20, 0
      %p47 = por %p45, %p46
      %s49 = sadd.s32 %s48, 1
      %p52 = scmp.eq.s32.totalorder %s14, 1
      %p53 = scmp.ne.s32.totalorder %s48, %s50
      %p54 = scmp.eq.s32.totalorder %s14, 0
      %p55 = por %p53, %p54
      %p56 = scmp.ne.s32.totalorder %s48, %s50
      %p57 = scmp.eq.s32.totalorder %s19, 1
      %p58 = por %p56, %p57
      %p59 = scmp.ne.s32.totalorder %s50, %s51
      %p60 = scmp.eq.s32.totalorder %s19, 0
      %p61 = por %p59, %p60
      %p62 = scmp.ne.s32.totalorder %s50, %s51
      %p63 = scmp.eq.s32.totalorder %s20, 1
      %p64 = por %p62, %p63
      %p66 = scmp.ne.s32.totalorder %s51, %s65
      %p67 = scmp.eq.s32.totalorder %s20, 0
      %p68 = por %p66, %p67
      %s70 = sadd.s32 %s69, 1
      %p73 = scmp.eq.s32.totalorder %s14, 1
      %p74 = scmp.ne.s32.totalorder %s69, %s71
      %p75 = scmp.eq.s32.totalorder %s14, 0
      %p76 = por %p74, %p75
      %p77 = scmp.ne.s32.totalorder %s69, %s71
      %p78 = scmp.eq.s32.totalorder %s19, 1
      %p79 = por %p77, %p78
      %p80 = scmp.ne.s32.totalorder %s71, %s72
      %p81 = scmp.eq.s32.totalorder %s19, 0
      %p82 = por %p80, %p81
      %p83 = scmp.ne.s32.totalorder %s71, %s72
      %p84 = scmp.eq.s32.totalorder %s20, 1
      %p85 = por %p83, %p84
      %p87 = scmp.ne.s32.totalorder %s72, %s86
      %p88 = scmp.eq.s32.totalorder %s20, 0
      %p89 = por %p87, %p88
      %s91 = sadd.s32 %s90, 1
      %p94 = scmp.eq.s32.totalorder %s14, 1
      %p95 = scmp.ne.s32.totalorder %s90, %s92
      %p96 = scmp.eq.s32.totalorder %s14, 0
      %p97 = por %p95, %p96
      %p98 = scmp.ne.s32.totalorder %s90, %s92
      %p99 = scmp.eq.s32.totalorder %s19, 1
      %p100 = por %p98, %p99
      %p101 = scmp.ne.s32.totalorder %s92, %s93
      %p102 = scmp.eq.s32.totalorder %s19, 0
      %p103 = por %p101, %p102
      %p104 = scmp.ne.s32.totalorder %s92, %s93
      %p105 = scmp.eq.s32.totalorder %s20, 1
      %p106 = por %p104, %p105
      %p108 = scmp.ne.s32.totalorder %s93, %s107
      %p109 = scmp.eq.s32.totalorder %s20, 0
      %p110 = por %p108, %p109
      %s112 = sadd.s32 %s111, 1
      %p115 = scmp.eq.s32.totalorder %s14, 1
      %p116 = scmp.ne.s32.totalorder %s111, %s113
      %p117 = scmp.eq.s32.totalorder %s14, 0
      %p118 = por %p116, %p117
      %p119 = scmp.ne.s32.totalorder %s111, %s113
      %p120 = scmp.eq.s32.totalorder %s19, 1
      %p121 = por %p119, %p120
      %p122 = scmp.ne.s32.totalorder %s113, %s114
      %p123 = scmp.eq.s32.totalorder %s19, 0
      %p124 = por %p122, %p123
      %p125 = scmp.ne.s32.totalorder %s113, %s114
      %p126 = scmp.eq.s32.totalorder %s20, 1
      %p127 = por %p125, %p126
      %p129 = scmp.ne.s32.totalorder %s114, %s128
      %p130 = scmp.eq.s32.totalorder %s20, 0
      %p131 = por %p129, %p130
      %s132 = ssub.s32 %s14, %s21
      %p133 = scmp.eq.s32.totalorder %s132, 0
      %s135 = sadd.s32 %s134, 1
      %s136 = scalar_select %p133, %s134, %s135
      %p139 = pneg %p133
      %p140 = scmp.eq.s32.totalorder %s14, 1
      %p141 = por %p139, %p140
      %p142 = scmp.ne.s32.totalorder %s134, %s137
      %p143 = scmp.eq.s32.totalorder %s14, 0
      %p144 = por %p142, %p143
      %p145 = scmp.ne.s32.totalorder %s134, %s137
      %p146 = scmp.eq.s32.totalorder %s19, 1
      %p147 = por %p145, %p146
      %p148 = scmp.ne.s32.totalorder %s137, %s138
      %p149 = scmp.eq.s32.totalorder %s19, 0
      %p150 = por %p148, %p149
      %p151 = scmp.ne.s32.totalorder %s137, %s138
      %p152 = scmp.eq.s32.totalorder %s20, 1
      %p153 = por %p151, %p152
      %p155 = scmp.ne.s32.totalorder %s138, %s154
      %p156 = scmp.eq.s32.totalorder %s20, 0
      %p157 = por %p155, %p156
      %p158 = scmp.le.s32.totalorder 1, %s14
      %p159 = scmp.lt.s32.totalorder %s14, 3
      %p160 = pnand %p158, %p159
      %p161 = pneg %p160
      // Predicated region
      $region9: #{conv3x3_block_x2.1} parent=5 // pred_check
        _
      $region10: #{conv3x3_block_x2.1} parent=5 // pred_check_branch
        %163 = sbr.rel (%p160) target = $region12
      $region11: #{conv3x3_block_x2.1} parent=5 // pred_region
        %s164 = ssub.s32 %s14, 1
        // Predicated region
        $region13: #{conv3x3_block_x2.1} parent=11 // pred_check
          %p165 = pneg %p61
        $region14: #{conv3x3_block_x2.1} parent=11 // pred_check_branch
          %167 = sbr.rel (%p165) target = $region16
        $region15: #{conv3x3_block_x2.1} parent=11 // pred_region
          _
        $region16: #{conv3x3_block_x2.1} parent=11 // pred_fallthru
          _
        // Predicated region
        $region17: #{conv3x3_block_x2.1} parent=11 // pred_check
          %p168 = pneg %p82
        $region18: #{conv3x3_block_x2.1} parent=11 // pred_check_branch
          %170 = sbr.rel (%p168) target = $region20
        $region19: #{conv3x3_block_x2.1} parent=11 // pred_region
          _
        $region20: #{conv3x3_block_x2.1} parent=11 // pred_fallthru
          _
        // Predicated region
        $region21: #{conv3x3_block_x2.1} parent=11 // pred_check
          %p171 = pneg %p103
        $region22: #{conv3x3_block_x2.1} parent=11 // pred_check_branch
          %173 = sbr.rel (%p171) target = $region24
        $region23: #{conv3x3_block_x2.1} parent=11 // pred_region
          _
        $region24: #{conv3x3_block_x2.1} parent=11 // pred_fallthru
          _
        // Predicated region
        $region25: #{conv3x3_block_x2.1} parent=11 // pred_check
          %p174 = pneg %p124
        $region26: #{conv3x3_block_x2.1} parent=11 // pred_check_branch
          %176 = sbr.rel (%p174) target = $region28
        $region27: #{conv3x3_block_x2.1} parent=11 // pred_region
          _
        $region28: #{conv3x3_block_x2.1} parent=11 // pred_fallthru
          _
      $region12: #{conv3x3_block_x2.1} parent=5 // pred_fallthru
        _
      %p177 = scmp.lt.s32.totalorder %s14, 2
      // Predicated region
      $region29: #{conv3x3_block_x2.1} parent=5 // pred_check
        %p178 = pneg %p177
      $region30: #{conv3x3_block_x2.1} parent=5 // pred_check_branch
        %180 = sbr.rel (%p178) target = $region32
      $region31: #{conv3x3_block_x2.1} parent=5 // pred_region
        // Predicated region
        $region33: #{conv3x3_block_x2.1} parent=31 // pred_check
          %p181 = pneg %p34
        $region34: #{conv3x3_block_x2.1} parent=31 // pred_check_branch
          %183 = sbr.rel (%p181) target = $region36
        $region35: #{conv3x3_block_x2.1} parent=31 // pred_region
          %p184 = scmp.lt.s32.totalorder %s14, 1
          %s185 = scalar_select %p184, %s14, 1
          %s186 = smul.addr %s185, 32
          %s187 = smul.addr %s186, 8
          %s188 = scalar_lea.vmem %s0, %s187
        $region36: #{conv3x3_block_x2.1} parent=31 // pred_fallthru
          _
      $region32: #{conv3x3_block_x2.1} parent=5 // pred_fallthru
        _
      %p189 = scmp.le.s32.totalorder 1, %s14
      %p190 = scmp.lt.s32.totalorder %s14, 3
      %p191 = pnand %p189, %p190
      %p192 = pneg %p191
      // Predicated region
      $region37: #{conv3x3_block_x2.1} parent=5 // pred_check
        _
      $region38: #{conv3x3_block_x2.1} parent=5 // pred_check_branch
        %194 = sbr.rel (%p191) target = $region40
      $region39: #{conv3x3_block_x2.1} parent=5 // pred_region
        %s195 = ssub.s32 %s14, 1
        %p196 = scmp.lt.s32.totalorder %s19, 1
        %s197 = scalar_select %p196, %s19, 1
        %s198 = smul.addr %s197, 32
        %s199 = smul.addr %s198, 8
        %s200 = scalar_lea.vmem %s0, %s199
        %p201 = pneg %p40
        %p202 = pneg %p37
        %p203 = pneg %p61
        %p204 = pneg %p58
        %p205 = pneg %p82
        %p206 = pneg %p79
        %p207 = pneg %p103
        %p208 = pneg %p100
        %p209 = pneg %p124
        %p210 = pneg %p121
        %p211 = pneg %p150
        %p212 = pneg %p147
        %s213 = sand.u32 %s137, 1
        %s214 = scalar_lea.sflag [#allocation6], %s213
        %s215 = sand.u32 %s137, 1
        %s216 = smul.addr %s215, 64
        %s217 = scalar_lea.vmem [#allocation5], %s216
        %p218 = scmp.lt.s32.totalorder %s19, 1
        %s219 = scalar_select %p218, %s19, 1
        %s220 = smul.addr %s219, 32
        %s221 = smul.addr %s220, 8
        %s222 = scalar_lea.vmem %s0, %s221
        %vm224 = vcmask 31744
        %225 = vst.msk [vmem:[#allocation2] sm:$0xff] %vm224, 0.0
        %226 = vst.msk [vmem:[#allocation2 + $0x8] sm:$0xff] %vm224, 0.0
        %227 = vst.msk [vmem:[#allocation2 + $0x10] sm:$0xff] %vm224, 0.0
        %s228 = scalar_lea.vmem [#allocation2], 408
        %229 = vst.msk [vmem:[%s228] sm:$0xff] %vm224, 0.0
        %230 = vst.msk [vmem:[%s228 + $0x8] sm:$0xff] %vm224, 0.0
        %231 = vst.msk [vmem:[%s228 + $0x10] sm:$0xff] %vm224, 0.0
        %v232 = vld [vmem:[%s222] sm:$0xff]
        %v233 = vld [vmem:[%s222 + $0x8] sm:$0xff]
        %v234 = vld [vmem:[%s222 + $0x10] sm:$0xff]
        %v235 = vld [vmem:[%s222 + $0x18] sm:$0xff]
        %v236 = vld [vmem:[%s222 + $0x20] sm:$0xff]
        %v237 = vld [vmem:[%s222 + $0x28] sm:$0xff]
        %v238 = vld [vmem:[%s222 + $0x30] sm:$0xff]
        %v239 = vld [vmem:[%s222 + $0x38] sm:$0xff]
        %v240 = vld [vmem:[%s222 + $0x40] sm:$0xff]
        %v241 = vld [vmem:[%s222 + $0x48] sm:$0xff]
        %v242 = vld [vmem:[%s222 + $0x50] sm:$0xff]
        %v243 = vld [vmem:[%s222 + $0x58] sm:$0xff]
        %v244 = vld [vmem:[%s222 + $0x60] sm:$0xff]
        %v245 = vld [vmem:[%s222 + $0x68] sm:$0xff]
        %v246 = vld [vmem:[%s222 + $0x70] sm:$0xff]
        %v247 = vld [vmem:[%s222 + $0x78] sm:$0xff]
        %v248 = vld [vmem:[%s222 + $0x80] sm:$0xff]
        %v249 = vld [vmem:[%s222 + $0x88] sm:$0xff]
        %v250 = vld [vmem:[%s222 + $0x90] sm:$0xff]
        %v251 = vld [vmem:[%s222 + $0x98] sm:$0xff]
        %v252 = vld [vmem:[%s222 + $0xa0] sm:$0xff]
        %v253 = vld [vmem:[%s222 + $0xa8] sm:$0xff]
        %v254 = vld [vmem:[%s222 + $0xb0] sm:$0xff]
        %v255 = vld [vmem:[%s222 + $0xb8] sm:$0xff]
        %v256 = vld [vmem:[%s222 + $0xc0] sm:$0xff]
        %v257 = vld [vmem:[%s222 + $0xc8] sm:$0xff]
        %v258 = vld [vmem:[%s222 + $0xd0] sm:$0xff]
        %v259 = vld [vmem:[%s222 + $0xd8] sm:$0xff]
        %v260 = vld [vmem:[%s222 + $0xe0] sm:$0xff]
        %v261 = vld [vmem:[%s222 + $0xe8] sm:$0xff]
        %v262 = vld [vmem:[%s222 + $0xf0] sm:$0xff]
        %v263 = vld [vmem:[%s222 + $0xf8] sm:$0xff]
        %s264 = scalar_lea.vmem [#allocation2], 24
        %265 = vst.msk [vmem:[%s264] sm:$0xff] %vm224, %v232
        %266 = vst.msk [vmem:[%s264 + $0x8] sm:$0xff] %vm224, %v233
        %267 = vst.msk [vmem:[%s264 + $0x10] sm:$0xff] %vm224, 0.0
        %268 = vst.msk [vmem:[%s264 + $0x18] sm:$0xff] %vm224, %v234
        %269 = vst.msk [vmem:[%s264 + $0x20] sm:$0xff] %vm224, %v235
        %270 = vst.msk [vmem:[%s264 + $0x28] sm:$0xff] %vm224, 0.0
        %271 = vst.msk [vmem:[%s264 + $0x30] sm:$0xff] %vm224, %v236
        %272 = vst.msk [vmem:[%s264 + $0x38] sm:$0xff] %vm224, %v237
        %273 = vst.msk [vmem:[%s264 + $0x40] sm:$0xff] %vm224, 0.0
        %274 = vst.msk [vmem:[%s264 + $0x48] sm:$0xff] %vm224, %v238
        %275 = vst.msk [vmem:[%s264 + $0x50] sm:$0xff] %vm224, %v239
        %276 = vst.msk [vmem:[%s264 + $0x58] sm:$0xff] %vm224, 0.0
        %277 = vst.msk [vmem:[%s264 + $0x60] sm:$0xff] %vm224, %v240
        %278 = vst.msk [vmem:[%s264 + $0x68] sm:$0xff] %vm224, %v241
        %279 = vst.msk [vmem:[%s264 + $0x70] sm:$0xff] %vm224, 0.0
        %280 = vst.msk [vmem:[%s264 + $0x78] sm:$0xff] %vm224, %v242
        %281 = vst.msk [vmem:[%s264 + $0x80] sm:$0xff] %vm224, %v243
        %282 = vst.msk [vmem:[%s264 + $0x88] sm:$0xff] %vm224, 0.0
        %283 = vst.msk [vmem:[%s264 + $0x90] sm:$0xff] %vm224, %v244
        %284 = vst.msk [vmem:[%s264 + $0x98] sm:$0xff] %vm224, %v245
        %285 = vst.msk [vmem:[%s264 + $0xa0] sm:$0xff] %vm224, 0.0
        %286 = vst.msk [vmem:[%s264 + $0xa8] sm:$0xff] %vm224, %v246
        %287 = vst.msk [vmem:[%s264 + $0xb0] sm:$0xff] %vm224, %v247
        %288 = vst.msk [vmem:[%s264 + $0xb8] sm:$0xff] %vm224, 0.0
        %289 = vst.msk [vmem:[%s264 + $0xc0] sm:$0xff] %vm224, %v248
        %290 = vst.msk [vmem:[%s264 + $0xc8] sm:$0xff] %vm224, %v249
        %291 = vst.msk [vmem:[%s264 + $0xd0] sm:$0xff] %vm224, 0.0
        %292 = vst.msk [vmem:[%s264 + $0xd8] sm:$0xff] %vm224, %v250
        %293 = vst.msk [vmem:[%s264 + $0xe0] sm:$0xff] %vm224, %v251
        %294 = vst.msk [vmem:[%s264 + $0xe8] sm:$0xff] %vm224, 0.0
        %295 = vst.msk [vmem:[%s264 + $0xf0] sm:$0xff] %vm224, %v252
        %296 = vst.msk [vmem:[%s264 + $0xf8] sm:$0xff] %vm224, %v253
        %297 = vst.msk [vmem:[%s264 + $0x100] sm:$0xff] %vm224, 0.0
        %298 = vst.msk [vmem:[%s264 + $0x108] sm:$0xff] %vm224, %v254
        %299 = vst.msk [vmem:[%s264 + $0x110] sm:$0xff] %vm224, %v255
        %300 = vst.msk [vmem:[%s264 + $0x118] sm:$0xff] %vm224, 0.0
        %301 = vst.msk [vmem:[%s264 + $0x120] sm:$0xff] %vm224, %v256
        %302 = vst.msk [vmem:[%s264 + $0x128] sm:$0xff] %vm224, %v257
        %303 = vst.msk [vmem:[%s264 + $0x130] sm:$0xff] %vm224, 0.0
        %304 = vst.msk [vmem:[%s264 + $0x138] sm:$0xff] %vm224, %v258
        %305 = vst.msk [vmem:[%s264 + $0x140] sm:$0xff] %vm224, %v259
        %306 = vst.msk [vmem:[%s264 + $0x148] sm:$0xff] %vm224, 0.0
        %307 = vst.msk [vmem:[%s264 + $0x150] sm:$0xff] %vm224, %v260
        %308 = vst.msk [vmem:[%s264 + $0x158] sm:$0xff] %vm224, %v261
        %309 = vst.msk [vmem:[%s264 + $0x160] sm:$0xff] %vm224, 0.0
        %310 = vst.msk [vmem:[%s264 + $0x168] sm:$0xff] %vm224, %v262
        %311 = vst.msk [vmem:[%s264 + $0x170] sm:$0xff] %vm224, %v263
        %312 = vst.msk [vmem:[%s264 + $0x178] sm:$0xff] %vm224, 0.0
        %v313 = vlaneseq
        %v314 = vshrl.u32 %v313, 7
        %v315 = vadd.s32 %v314, 8
        %v316 = vadd.s32 %v314, 16
        %vm317 = vcmp.lt.s32.totalorder %v314, 16
        %vm318 = vcmp.lt.s32.totalorder %v315, 16
        %vm319 = vcmp.lt.s32.totalorder %v316, 16
        %v320 = vsel %vm317, 1, 0
        %v321 = vsel %vm318, 1, 0
        %v322 = vsel %vm319, 1, 0
        %v323 = vcvt.s32.f32 %v320
        %v324 = vcvt.s32.f32 %v321
        %v325 = vcvt.s32.f32 %v322
        %v326 = vld [vmem:[#allocation2] sm:$0xff]
        %v327 = vld [vmem:[#allocation2 + $0x8] sm:$0xff]
        %v328 = vld [vmem:[#allocation2 + $0x10] sm:$0xff]
        %v329 = vld [vmem:[#allocation2 + $0x18] sm:$0xff]
        %v330 = vld [vmem:[#allocation2 + $0x20] sm:$0xff]
        %v331 = vld [vmem:[#allocation2 + $0x28] sm:$0xff]
        %v332 = vld [vmem:[#allocation2 + $0x30] sm:$0xff]
        %v333 = vld [vmem:[#allocation2 + $0x38] sm:$0xff]
        %v334 = vld [vmem:[#allocation2 + $0x40] sm:$0xff]
        %v335 = vld [vmem:[#allocation2 + $0x48] sm:$0xff]
        %v336 = vld [vmem:[#allocation2 + $0x50] sm:$0xff]
        %v337 = vld [vmem:[#allocation2 + $0x58] sm:$0xff]
        %v338 = vld [vmem:[#allocation2 + $0x60] sm:$0xff]
        %v339 = vld [vmem:[#allocation2 + $0x68] sm:$0xff]
        %v340 = vld [vmem:[#allocation2 + $0x70] sm:$0xff]
        %v341 = vld [vmem:[#allocation2 + $0x78] sm:$0xff]
        %v342 = vld [vmem:[#allocation2 + $0x80] sm:$0xff]
        %v343 = vld [vmem:[#allocation2 + $0x88] sm:$0xff]
        %v344 = vld [vmem:[#allocation2 + $0x90] sm:$0xff]
        %v345 = vld [vmem:[#allocation2 + $0x98] sm:$0xff]
        %v346 = vld [vmem:[#allocation2 + $0xa0] sm:$0xff]
        %v347 = vld [vmem:[#allocation2 + $0xa8] sm:$0xff]
        %v348 = vld [vmem:[#allocation2 + $0xb0] sm:$0xff]
        %v349 = vld [vmem:[#allocation2 + $0xb8] sm:$0xff]
        %v350 = vld [vmem:[#allocation2 + $0xc0] sm:$0xff]
        %v351 = vld [vmem:[#allocation2 + $0xc8] sm:$0xff]
        %v352 = vld [vmem:[#allocation2 + $0xd0] sm:$0xff]
        %v353 = vld [vmem:[#allocation2 + $0xd8] sm:$0xff]
        %v354 = vld [vmem:[#allocation2 + $0xe0] sm:$0xff]
        %v355 = vld [vmem:[#allocation2 + $0xe8] sm:$0xff]
        %v356 = vld [vmem:[#allocation2 + $0xf0] sm:$0xff]
        %v357 = vld [vmem:[#allocation2 + $0xf8] sm:$0xff]
        %v358 = vld [vmem:[#allocation2 + $0x100] sm:$0xff]
        %v359 = vld [vmem:[#allocation2 + $0x108] sm:$0xff]
        %v360 = vld [vmem:[#allocation2 + $0x110] sm:$0xff]
        %v361 = vld [vmem:[#allocation2 + $0x118] sm:$0xff]
        %v362 = vld [vmem:[#allocation2 + $0x120] sm:$0xff]
        %v363 = vld [vmem:[#allocation2 + $0x128] sm:$0xff]
        %v364 = vld [vmem:[#allocation2 + $0x130] sm:$0xff]
        %v365 = vld [vmem:[#allocation2 + $0x138] sm:$0xff]
        %v366 = vld [vmem:[#allocation2 + $0x140] sm:$0xff]
        %v367 = vld [vmem:[#allocation2 + $0x148] sm:$0xff]
        %v368 = vld [vmem:[#allocation2 + $0x150] sm:$0xff]
        %v369 = vld [vmem:[#allocation2 + $0x158] sm:$0xff]
        %v370 = vld [vmem:[#allocation2 + $0x160] sm:$0xff]
        %v371 = vld [vmem:[#allocation2 + $0x168] sm:$0xff]
        %v372 = vld [vmem:[#allocation2 + $0x170] sm:$0xff]
        %v373 = vld [vmem:[#allocation2 + $0x178] sm:$0xff]
        %v374 = vrot.slane %v326, 7
        %v375 = vrot.slane %v329, 7
        %v376 = vrot.slane %v332, 7
        %v377 = vrot.slane %v335, 7
        %v378 = vrot.slane %v338, 7
        %v379 = vrot.slane %v341, 7
        %v380 = vrot.slane %v344, 7
        %v381 = vrot.slane %v347, 7
        %v382 = vrot.slane %v350, 7
        %v383 = vrot.slane %v353, 7
        %v384 = vrot.slane %v356, 7
        %v385 = vrot.slane %v359, 7
        %v386 = vrot.slane %v362, 7
        %v387 = vrot.slane %v365, 7
        %v388 = vrot.slane %v368, 7
        %v389 = vrot.slane %v371, 7
        %v390 = vrot.slane %v327, 7
        %v391 = vrot.slane %v330, 7
        %v392 = vrot.slane %v333, 7
        %v393 = vrot.slane %v336, 7
        %v394 = vrot.slane %v339, 7
        %v395 = vrot.slane %v342, 7
        %v396 = vrot.slane %v345, 7
        %v397 = vrot.slane %v348, 7
        %v398 = vrot.slane %v351, 7
        %v399 = vrot.slane %v354, 7
        %v400 = vrot.slane %v357, 7
        %v401 = vrot.slane %v360, 7
        %v402 = vrot.slane %v363, 7
        %v403 = vrot.slane %v366, 7
        %v404 = vrot.slane %v369, 7
        %v405 = vrot.slane %v372, 7
        %v406 = vrot.slane %v328, 7
        %v407 = vrot.slane %v331, 7
        %v408 = vrot.slane %v334, 7
        %v409 = vrot.slane %v337, 7
        %v410 = vrot.slane %v340, 7
        %v411 = vrot.slane %v343, 7
        %v412 = vrot.slane %v346, 7
        %v413 = vrot.slane %v349, 7
        %v414 = vrot.slane %v352, 7
        %v415 = vrot.slane %v355, 7
        %v416 = vrot.slane %v358, 7
        %v417 = vrot.slane %v361, 7
        %v418 = vrot.slane %v364, 7
        %v419 = vrot.slane %v367, 7
        %v420 = vrot.slane %v370, 7
        %v421 = vrot.slane %v373, 7
        %vm422 = vcmp.lt.s32.totalorder %v314, 1
        %v423 = vsel %vm422, %v390, %v406
        %v424 = vsel %vm422, %v391, %v407
        %v425 = vsel %vm422, %v392, %v408
        %v426 = vsel %vm422, %v393, %v409
        %v427 = vsel %vm422, %v394, %v410
        %v428 = vsel %vm422, %v395, %v411
        %v429 = vsel %vm422, %v396, %v412
        %v430 = vsel %vm422, %v397, %v413
        %v431 = vsel %vm422, %v398, %v414
        %v432 = vsel %vm422, %v399, %v415
        %v433 = vsel %vm422, %v400, %v416
        %v434 = vsel %vm422, %v401, %v417
        %v435 = vsel %vm422, %v402, %v418
        %v436 = vsel %vm422, %v403, %v419
        %v437 = vsel %vm422, %v404, %v420
        %v438 = vsel %vm422, %v405, %v421
        %v439 = vsel %vm422, %v374, %v390
        %v440 = vsel %vm422, %v375, %v391
        %v441 = vsel %vm422, %v376, %v392
        %v442 = vsel %vm422, %v377, %v393
        %v443 = vsel %vm422, %v378, %v394
        %v444 = vsel %vm422, %v379, %v395
        %v445 = vsel %vm422, %v380, %v396
        %v446 = vsel %vm422, %v381, %v397
        %v447 = vsel %vm422, %v382, %v398
        %v448 = vsel %vm422, %v383, %v399
        %v449 = vsel %vm422, %v384, %v400
        %v450 = vsel %vm422, %v385, %v401
        %v451 = vsel %vm422, %v386, %v402
        %v452 = vsel %vm422, %v387, %v403
        %v453 = vsel %vm422, %v388, %v404
        %v454 = vsel %vm422, %v389, %v405
        %v455 = vsel %vm422, %v406, %v374
        %v456 = vsel %vm422, %v407, %v375
        %v457 = vsel %vm422, %v408, %v376
        %v458 = vsel %vm422, %v409, %v377
        %v459 = vsel %vm422, %v410, %v378
        %v460 = vsel %vm422, %v411, %v379
        %v461 = vsel %vm422, %v412, %v380
        %v462 = vsel %vm422, %v413, %v381
        %v463 = vsel %vm422, %v414, %v382
        %v464 = vsel %vm422, %v415, %v383
        %v465 = vsel %vm422, %v416, %v384
        %v466 = vsel %vm422, %v417, %v385
        %v467 = vsel %vm422, %v418, %v386
        %v468 = vsel %vm422, %v419, %v387
        %v469 = vsel %vm422, %v420, %v388
        %v470 = vsel %vm422, %v421, %v389
        %v471 = vrot.slane %v326, 1
        %v472 = vrot.slane %v329, 1
        %v473 = vrot.slane %v332, 1
        %v474 = vrot.slane %v335, 1
        %v475 = vrot.slane %v338, 1
        %v476 = vrot.slane %v341, 1
        %v477 = vrot.slane %v344, 1
        %v478 = vrot.slane %v347, 1
        %v479 = vrot.slane %v350, 1
        %v480 = vrot.slane %v353, 1
        %v481 = vrot.slane %v356, 1
        %v482 = vrot.slane %v359, 1
        %v483 = vrot.slane %v362, 1
        %v484 = vrot.slane %v365, 1
        %v485 = vrot.slane %v368, 1
        %v486 = vrot.slane %v371, 1
        %v487 = vrot.slane %v327, 1
        %v488 = vrot.slane %v330, 1
        %v489 = vrot.slane %v333, 1
        %v490 = vrot.slane %v336, 1
        %v491 = vrot.slane %v339, 1
        %v492 = vrot.slane %v342, 1
        %v493 = vrot.slane %v345, 1
        %v494 = vrot.slane %v348, 1
        %v495 = vrot.slane %v351, 1
        %v496 = vrot.slane %v354, 1
        %v497 = vrot.slane %v357, 1
        %v498 = vrot.slane %v360, 1
        %v499 = vrot.slane %v363, 1
        %v500 = vrot.slane %v366, 1
        %v501 = vrot.slane %v369, 1
        %v502 = vrot.slane %v372, 1
        %v503 = vrot.slane %v328, 1
        %v504 = vrot.slane %v331, 1
        %v505 = vrot.slane %v334, 1
        %v506 = vrot.slane %v337, 1
        %v507 = vrot.slane %v340, 1
        %v508 = vrot.slane %v343, 1
        %v509 = vrot.slane %v346, 1
        %v510 = vrot.slane %v349, 1
        %v511 = vrot.slane %v352, 1
        %v512 = vrot.slane %v355, 1
        %v513 = vrot.slane %v358, 1
        %v514 = vrot.slane %v361, 1
        %v515 = vrot.slane %v364, 1
        %v516 = vrot.slane %v367, 1
        %v517 = vrot.slane %v370, 1
        %v518 = vrot.slane %v373, 1
        %vm519 = vcmp.lt.s32.totalorder %v314, 7
        %v520 = vsel %vm519, %v487, %v503
        %v521 = vsel %vm519, %v488, %v504
        %v522 = vsel %vm519, %v489, %v505
        %v523 = vsel %vm519, %v490, %v506
        %v524 = vsel %vm519, %v491, %v507
        %v525 = vsel %vm519, %v492, %v508
        %v526 = vsel %vm519, %v493, %v509
        %v527 = vsel %vm519, %v494, %v510
        %v528 = vsel %vm519, %v495, %v511
        %v529 = vsel %vm519, %v496, %v512
        %v530 = vsel %vm519, %v497, %v513
        %v531 = vsel %vm519, %v498, %v514
        %v532 = vsel %vm519, %v499, %v515
        %v533 = vsel %vm519, %v500, %v516
        %v534 = vsel %vm519, %v501, %v517
        %v535 = vsel %vm519, %v502, %v518
        %v536 = vsel %vm519, %v471, %v487
        %v537 = vsel %vm519, %v472, %v488
        %v538 = vsel %vm519, %v473, %v489
        %v539 = vsel %vm519, %v474, %v490
        %v540 = vsel %vm519, %v475, %v491
        %v541 = vsel %vm519, %v476, %v492
        %v542 = vsel %vm519, %v477, %v493
        %v543 = vsel %vm519, %v478, %v494
        %v544 = vsel %vm519, %v479, %v495
        %v545 = vsel %vm519, %v480, %v496
        %v546 = vsel %vm519, %v481, %v497
        %v547 = vsel %vm519, %v482, %v498
        %v548 = vsel %vm519, %v483, %v499
        %v549 = vsel %vm519, %v484, %v500
        %v550 = vsel %vm519, %v485, %v501
        %v551 = vsel %vm519, %v486, %v502
        %v552 = vsel %vm519, %v503, %v471
        %v553 = vsel %vm519, %v504, %v472
        %v554 = vsel %vm519, %v505, %v473
        %v555 = vsel %vm519, %v506, %v474
        %v556 = vsel %vm519, %v507, %v475
        %v557 = vsel %vm519, %v508, %v476
        %v558 = vsel %vm519, %v509, %v477
        %v559 = vsel %vm519, %v510, %v478
        %v560 = vsel %vm519, %v511, %v479
        %v561 = vsel %vm519, %v512, %v480
        %v562 = vsel %vm519, %v513, %v481
        %v563 = vsel %vm519, %v514, %v482
        %v564 = vsel %vm519, %v515, %v483
        %v565 = vsel %vm519, %v516, %v484
        %v566 = vsel %vm519, %v517, %v485
        %v567 = vsel %vm519, %v518, %v486
        %v568 = vld [vmem:[%s264] sm:$0xff]
        %v569 = vld [vmem:[%s264 + $0x8] sm:$0xff]
        %v570 = vld [vmem:[%s264 + $0x10] sm:$0xff]
        %v571 = vld [vmem:[%s264 + $0x18] sm:$0xff]
        %v572 = vld [vmem:[%s264 + $0x20] sm:$0xff]
        %v573 = vld [vmem:[%s264 + $0x28] sm:$0xff]
        %v574 = vld [vmem:[%s264 + $0x30] sm:$0xff]
        %v575 = vld [vmem:[%s264 + $0x38] sm:$0xff]
        %v576 = vld [vmem:[%s264 + $0x40] sm:$0xff]
        %v577 = vld [vmem:[%s264 + $0x48] sm:$0xff]
        %v578 = vld [vmem:[%s264 + $0x50] sm:$0xff]
        %v579 = vld [vmem:[%s264 + $0x58] sm:$0xff]
        %v580 = vld [vmem:[%s264 + $0x60] sm:$0xff]
        %v581 = vld [vmem:[%s264 + $0x68] sm:$0xff]
        %v582 = vld [vmem:[%s264 + $0x70] sm:$0xff]
        %v583 = vld [vmem:[%s264 + $0x78] sm:$0xff]
        %v584 = vld [vmem:[%s264 + $0x80] sm:$0xff]
        %v585 = vld [vmem:[%s264 + $0x88] sm:$0xff]
        %v586 = vld [vmem:[%s264 + $0x90] sm:$0xff]
        %v587 = vld [vmem:[%s264 + $0x98] sm:$0xff]
        %v588 = vld [vmem:[%s264 + $0xa0] sm:$0xff]
        %v589 = vld [vmem:[%s264 + $0xa8] sm:$0xff]
        %v590 = vld [vmem:[%s264 + $0xb0] sm:$0xff]
        %v591 = vld [vmem:[%s264 + $0xb8] sm:$0xff]
        %v592 = vld [vmem:[%s264 + $0xc0] sm:$0xff]
        %v593 = vld [vmem:[%s264 + $0xc8] sm:$0xff]
        %v594 = vld [vmem:[%s264 + $0xd0] sm:$0xff]
        %v595 = vld [vmem:[%s264 + $0xd8] sm:$0xff]
        %v596 = vld [vmem:[%s264 + $0xe0] sm:$0xff]
        %v597 = vld [vmem:[%s264 + $0xe8] sm:$0xff]
        %v598 = vld [vmem:[%s264 + $0xf0] sm:$0xff]
        %v599 = vld [vmem:[%s264 + $0xf8] sm:$0xff]
        %v600 = vld [vmem:[%s264 + $0x100] sm:$0xff]
        %v601 = vld [vmem:[%s264 + $0x108] sm:$0xff]
        %v602 = vld [vmem:[%s264 + $0x110] sm:$0xff]
        %v603 = vld [vmem:[%s264 + $0x118] sm:$0xff]
        %v604 = vld [vmem:[%s264 + $0x120] sm:$0xff]
        %v605 = vld [vmem:[%s264 + $0x128] sm:$0xff]
        %v606 = vld [vmem:[%s264 + $0x130] sm:$0xff]
        %v607 = vld [vmem:[%s264 + $0x138] sm:$0xff]
        %v608 = vld [vmem:[%s264 + $0x140] sm:$0xff]
        %v609 = vld [vmem:[%s264 + $0x148] sm:$0xff]
        %v610 = vld [vmem:[%s264 + $0x150] sm:$0xff]
        %v611 = vld [vmem:[%s264 + $0x158] sm:$0xff]
        %v612 = vld [vmem:[%s264 + $0x160] sm:$0xff]
        %v613 = vld [vmem:[%s264 + $0x168] sm:$0xff]
        %v614 = vld [vmem:[%s264 + $0x170] sm:$0xff]
        %v615 = vld [vmem:[%s264 + $0x178] sm:$0xff]
        %v616 = vrot.slane %v568, 7
        %v617 = vrot.slane %v571, 7
        %v618 = vrot.slane %v574, 7
        %v619 = vrot.slane %v577, 7
        %v620 = vrot.slane %v580, 7
        %v621 = vrot.slane %v583, 7
        %v622 = vrot.slane %v586, 7
        %v623 = vrot.slane %v589, 7
        %v624 = vrot.slane %v592, 7
        %v625 = vrot.slane %v595, 7
        %v626 = vrot.slane %v598, 7
        %v627 = vrot.slane %v601, 7
        %v628 = vrot.slane %v604, 7
        %v629 = vrot.slane %v607, 7
        %v630 = vrot.slane %v610, 7
        %v631 = vrot.slane %v613, 7
        %v632 = vrot.slane %v569, 7
        %v633 = vrot.slane %v572, 7
        %v634 = vrot.slane %v575, 7
        %v635 = vrot.slane %v578, 7
        %v636 = vrot.slane %v581, 7
        %v637 = vrot.slane %v584, 7
        %v638 = vrot.slane %v587, 7
        %v639 = vrot.slane %v590, 7
        %v640 = vrot.slane %v593, 7
        %v641 = vrot.slane %v596, 7
        %v642 = vrot.slane %v599, 7
        %v643 = vrot.slane %v602, 7
        %v644 = vrot.slane %v605, 7
        %v645 = vrot.slane %v608, 7
        %v646 = vrot.slane %v611, 7
        %v647 = vrot.slane %v614, 7
        %v648 = vrot.slane %v570, 7
        %v649 = vrot.slane %v573, 7
        %v650 = vrot.slane %v576, 7
        %v651 = vrot.slane %v579, 7
        %v652 = vrot.slane %v582, 7
        %v653 = vrot.slane %v585, 7
        %v654 = vrot.slane %v588, 7
        %v655 = vrot.slane %v591, 7
        %v656 = vrot.slane %v594, 7
        %v657 = vrot.slane %v597, 7
        %v658 = vrot.slane %v600, 7
        %v659 = vrot.slane %v603, 7
        %v660 = vrot.slane %v606, 7
        %v661 = vrot.slane %v609, 7
        %v662 = vrot.slane %v612, 7
        %v663 = vrot.slane %v615, 7
        %v664 = vsel %vm422, %v632, %v648
        %v665 = vsel %vm422, %v633, %v649
        %v666 = vsel %vm422, %v634, %v650
        %v667 = vsel %vm422, %v635, %v651
        %v668 = vsel %vm422, %v636, %v652
        %v669 = vsel %vm422, %v637, %v653
        %v670 = vsel %vm422, %v638, %v654
        %v671 = vsel %vm422, %v639, %v655
        %v672 = vsel %vm422, %v640, %v656
        %v673 = vsel %vm422, %v641, %v657
        %v674 = vsel %vm422, %v642, %v658
        %v675 = vsel %vm422, %v643, %v659
        %v676 = vsel %vm422, %v644, %v660
        %v677 = vsel %vm422, %v645, %v661
        %v678 = vsel %vm422, %v646, %v662
        %v679 = vsel %vm422, %v647, %v663
        %v680 = vsel %vm422, %v616, %v632
        %v681 = vsel %vm422, %v617, %v633
        %v682 = vsel %vm422, %v618, %v634
        %v683 = vsel %vm422, %v619, %v635
        %v684 = vsel %vm422, %v620, %v636
        %v685 = vsel %vm422, %v621, %v637
        %v686 = vsel %vm422, %v622, %v638
        %v687 = vsel %vm422, %v623, %v639
        %v688 = vsel %vm422, %v624, %v640
        %v689 = vsel %vm422, %v625, %v641
        %v690 = vsel %vm422, %v626, %v642
        %v691 = vsel %vm422, %v627, %v643
        %v692 = vsel %vm422, %v628, %v644
        %v693 = vsel %vm422, %v629, %v645
        %v694 = vsel %vm422, %v630, %v646
        %v695 = vsel %vm422, %v631, %v647
        %v696 = vsel %vm422, %v648, %v616
        %v697 = vsel %vm422, %v649, %v617
        %v698 = vsel %vm422, %v650, %v618
        %v699 = vsel %vm422, %v651, %v619
        %v700 = vsel %vm422, %v652, %v620
        %v701 = vsel %vm422, %v653, %v621
        %v702 = vsel %vm422, %v654, %v622
        %v703 = vsel %vm422, %v655, %v623
        %v704 = vsel %vm422, %v656, %v624
        %v705 = vsel %vm422, %v657, %v625
        %v706 = vsel %vm422, %v658, %v626
        %v707 = vsel %vm422, %v659, %v627
        %v708 = vsel %vm422, %v660, %v628
        %v709 = vsel %vm422, %v661, %v629
        %v710 = vsel %vm422, %v662, %v630
        %v711 = vsel %vm422, %v663, %v631
        %v712 = vrot.slane %v568, 1
        %v713 = vrot.slane %v571, 1
        %v714 = vrot.slane %v574, 1
        %v715 = vrot.slane %v577, 1
        %v716 = vrot.slane %v580, 1
        %v717 = vrot.slane %v583, 1
        %v718 = vrot.slane %v586, 1
        %v719 = vrot.slane %v589, 1
        %v720 = vrot.slane %v592, 1
        %v721 = vrot.slane %v595, 1
        %v722 = vrot.slane %v598, 1
        %v723 = vrot.slane %v601, 1
        %v724 = vrot.slane %v604, 1
        %v725 = vrot.slane %v607, 1
        %v726 = vrot.slane %v610, 1
        %v727 = vrot.slane %v613, 1
        %v728 = vrot.slane %v569, 1
        %v729 = vrot.slane %v572, 1
        %v730 = vrot.slane %v575, 1
        %v731 = vrot.slane %v578, 1
        %v732 = vrot.slane %v581, 1
        %v733 = vrot.slane %v584, 1
        %v734 = vrot.slane %v587, 1
        %v735 = vrot.slane %v590, 1
        %v736 = vrot.slane %v593, 1
        %v737 = vrot.slane %v596, 1
        %v738 = vrot.slane %v599, 1
        %v739 = vrot.slane %v602, 1
        %v740 = vrot.slane %v605, 1
        %v741 = vrot.slane %v608, 1
        %v742 = vrot.slane %v611, 1
        %v743 = vrot.slane %v614, 1
        %v744 = vrot.slane %v570, 1
        %v745 = vrot.slane %v573, 1
        %v746 = vrot.slane %v576, 1
        %v747 = vrot.slane %v579, 1
        %v748 = vrot.slane %v582, 1
        %v749 = vrot.slane %v585, 1
        %v750 = vrot.slane %v588, 1
        %v751 = vrot.slane %v591, 1
        %v752 = vrot.slane %v594, 1
        %v753 = vrot.slane %v597, 1
        %v754 = vrot.slane %v600, 1
        %v755 = vrot.slane %v603, 1
        %v756 = vrot.slane %v606, 1
        %v757 = vrot.slane %v609, 1
        %v758 = vrot.slane %v612, 1
        %v759 = vrot.slane %v615, 1
        %v760 = vsel %vm519, %v728, %v744
        %v761 = vsel %vm519, %v729, %v745
        %v762 = vsel %vm519, %v730, %v746
        %v763 = vsel %vm519, %v731, %v747
        %v764 = vsel %vm519, %v732, %v748
        %v765 = vsel %vm519, %v733, %v749
        %v766 = vsel %vm519, %v734, %v750
        %v767 = vsel %vm519, %v735, %v751
        %v768 = vsel %vm519, %v736, %v752
        %v769 = vsel %vm519, %v737, %v753
        %v770 = vsel %vm519, %v738, %v754
        %v771 = vsel %vm519, %v739, %v755
        %v772 = vsel %vm519, %v740, %v756
        %v773 = vsel %vm519, %v741, %v757
        %v774 = vsel %vm519, %v742, %v758
        %v775 = vsel %vm519, %v743, %v759
        %v776 = vsel %vm519, %v712, %v728
        %v777 = vsel %vm519, %v713, %v729
        %v778 = vsel %vm519, %v714, %v730
        %v779 = vsel %vm519, %v715, %v731
        %v780 = vsel %vm519, %v716, %v732
        %v781 = vsel %vm519, %v717, %v733
        %v782 = vsel %vm519, %v718, %v734
        %v783 = vsel %vm519, %v719, %v735
        %v784 = vsel %vm519, %v720, %v736
        %v785 = vsel %vm519, %v721, %v737
        %v786 = vsel %vm519, %v722, %v738
        %v787 = vsel %vm519, %v723, %v739
        %v788 = vsel %vm519, %v724, %v740
        %v789 = vsel %vm519, %v725, %v741
        %v790 = vsel %vm519, %v726, %v742
        %v791 = vsel %vm519, %v727, %v743
        %v792 = vsel %vm519, %v744, %v712
        %v793 = vsel %vm519, %v745, %v713
        %v794 = vsel %vm519, %v746, %v714
        %v795 = vsel %vm519, %v747, %v715
        %v796 = vsel %vm519, %v748, %v716
        %v797 = vsel %vm519, %v749, %v717
        %v798 = vsel %vm519, %v750, %v718
        %v799 = vsel %vm519, %v751, %v719
        %v800 = vsel %vm519, %v752, %v720
        %v801 = vsel %vm519, %v753, %v721
        %v802 = vsel %vm519, %v754, %v722
        %v803 = vsel %vm519, %v755, %v723
        %v804 = vsel %vm519, %v756, %v724
        %v805 = vsel %vm519, %v757, %v725
        %v806 = vsel %vm519, %v758, %v726
        %v807 = vsel %vm519, %v759, %v727
        %s808 = scalar_lea.vmem [#allocation2], 48
        %v809 = vld [vmem:[%s808] sm:$0xff]
        %v810 = vld [vmem:[%s808 + $0x8] sm:$0xff]
        %v811 = vld [vmem:[%s808 + $0x10] sm:$0xff]
        %v812 = vld [vmem:[%s808 + $0x18] sm:$0xff]
        %v813 = vld [vmem:[%s808 + $0x20] sm:$0xff]
        %v814 = vld [vmem:[%s808 + $0x28] sm:$0xff]
        %v815 = vld [vmem:[%s808 + $0x30] sm:$0xff]
        %v816 = vld [vmem:[%s808 + $0x38] sm:$0xff]
        %v817 = vld [vmem:[%s808 + $0x40] sm:$0xff]
        %v818 = vld [vmem:[%s808 + $0x48] sm:$0xff]
        %v819 = vld [vmem:[%s808 + $0x50] sm:$0xff]
        %v820 = vld [vmem:[%s808 + $0x58] sm:$0xff]
        %v821 = vld [vmem:[%s808 + $0x60] sm:$0xff]
        %v822 = vld [vmem:[%s808 + $0x68] sm:$0xff]
        %v823 = vld [vmem:[%s808 + $0x70] sm:$0xff]
        %v824 = vld [vmem:[%s808 + $0x78] sm:$0xff]
        %v825 = vld [vmem:[%s808 + $0x80] sm:$0xff]
        %v826 = vld [vmem:[%s808 + $0x88] sm:$0xff]
        %v827 = vld [vmem:[%s808 + $0x90] sm:$0xff]
        %v828 = vld [vmem:[%s808 + $0x98] sm:$0xff]
        %v829 = vld [vmem:[%s808 + $0xa0] sm:$0xff]
        %v830 = vld [vmem:[%s808 + $0xa8] sm:$0xff]
        %v831 = vld [vmem:[%s808 + $0xb0] sm:$0xff]
        %v832 = vld [vmem:[%s808 + $0xb8] sm:$0xff]
        %v833 = vld [vmem:[%s808 + $0xc0] sm:$0xff]
        %v834 = vld [vmem:[%s808 + $0xc8] sm:$0xff]
        %v835 = vld [vmem:[%s808 + $0xd0] sm:$0xff]
        %v836 = vld [vmem:[%s808 + $0xd8] sm:$0xff]
        %v837 = vld [vmem:[%s808 + $0xe0] sm:$0xff]
        %v838 = vld [vmem:[%s808 + $0xe8] sm:$0xff]
        %v839 = vld [vmem:[%s808 + $0xf0] sm:$0xff]
        %v840 = vld [vmem:[%s808 + $0xf8] sm:$0xff]
        %v841 = vld [vmem:[%s808 + $0x100] sm:$0xff]
        %v842 = vld [vmem:[%s808 + $0x108] sm:$0xff]
        %v843 = vld [vmem:[%s808 + $0x110] sm:$0xff]
        %v844 = vld [vmem:[%s808 + $0x118] sm:$0xff]
        %v845 = vld [vmem:[%s808 + $0x120] sm:$0xff]
        %v846 = vld [vmem:[%s808 + $0x128] sm:$0xff]
        %v847 = vld [vmem:[%s808 + $0x130] sm:$0xff]
        %v848 = vld [vmem:[%s808 + $0x138] sm:$0xff]
        %v849 = vld [vmem:[%s808 + $0x140] sm:$0xff]
        %v850 = vld [vmem:[%s808 + $0x148] sm:$0xff]
        %v851 = vld [vmem:[%s808 + $0x150] sm:$0xff]
        %v852 = vld [vmem:[%s808 + $0x158] sm:$0xff]
        %v853 = vld [vmem:[%s808 + $0x160] sm:$0xff]
        %v854 = vld [vmem:[%s808 + $0x168] sm:$0xff]
        %v855 = vld [vmem:[%s808 + $0x170] sm:$0xff]
        %v856 = vld [vmem:[%s808 + $0x178] sm:$0xff]
        %v857 = vrot.slane %v809, 7
        %v858 = vrot.slane %v812, 7
        %v859 = vrot.slane %v815, 7
        %v860 = vrot.slane %v818, 7
        %v861 = vrot.slane %v821, 7
        %v862 = vrot.slane %v824, 7
        %v863 = vrot.slane %v827, 7
        %v864 = vrot.slane %v830, 7
        %v865 = vrot.slane %v833, 7
        %v866 = vrot.slane %v836, 7
        %v867 = vrot.slane %v839, 7
        %v868 = vrot.slane %v842, 7
        %v869 = vrot.slane %v845, 7
        %v870 = vrot.slane %v848, 7
        %v871 = vrot.slane %v851, 7
        %v872 = vrot.slane %v854, 7
        %v873 = vrot.slane %v810, 7
        %v874 = vrot.slane %v813, 7
        %v875 = vrot.slane %v816, 7
        %v876 = vrot.slane %v819, 7
        %v877 = vrot.slane %v822, 7
        %v878 = vrot.slane %v825, 7
        %v879 = vrot.slane %v828, 7
        %v880 = vrot.slane %v831, 7
        %v881 = vrot.slane %v834, 7
        %v882 = vrot.slane %v837, 7
        %v883 = vrot.slane %v840, 7
        %v884 = vrot.slane %v843, 7
        %v885 = vrot.slane %v846, 7
        %v886 = vrot.slane %v849, 7
        %v887 = vrot.slane %v852, 7
        %v888 = vrot.slane %v855, 7
        %v889 = vrot.slane %v811, 7
        %v890 = vrot.slane %v814, 7
        %v891 = vrot.slane %v817, 7
        %v892 = vrot.slane %v820, 7
        %v893 = vrot.slane %v823, 7
        %v894 = vrot.slane %v826, 7
        %v895 = vrot.slane %v829, 7
        %v896 = vrot.slane %v832, 7
        %v897 = vrot.slane %v835, 7
        %v898 = vrot.slane %v838, 7
        %v899 = vrot.slane %v841, 7
        %v900 = vrot.slane %v844, 7
        %v901 = vrot.slane %v847, 7
        %v902 = vrot.slane %v850, 7
        %v903 = vrot.slane %v853, 7
        %v904 = vrot.slane %v856, 7
        %v905 = vsel %vm422, %v873, %v889
        %v906 = vsel %vm422, %v874, %v890
        %v907 = vsel %vm422, %v875, %v891
        %v908 = vsel %vm422, %v876, %v892
        %v909 = vsel %vm422, %v877, %v893
        %v910 = vsel %vm422, %v878, %v894
        %v911 = vsel %vm422, %v879, %v895
        %v912 = vsel %vm422, %v880, %v896
        %v913 = vsel %vm422, %v881, %v897
        %v914 = vsel %vm422, %v882, %v898
        %v915 = vsel %vm422, %v883, %v899
        %v916 = vsel %vm422, %v884, %v900
        %v917 = vsel %vm422, %v885, %v901
        %v918 = vsel %vm422, %v886, %v902
        %v919 = vsel %vm422, %v887, %v903
        %v920 = vsel %vm422, %v888, %v904
        %v921 = vsel %vm422, %v857, %v873
        %v922 = vsel %vm422, %v858, %v874
        %v923 = vsel %vm422, %v859, %v875
        %v924 = vsel %vm422, %v860, %v876
        %v925 = vsel %vm422, %v861, %v877
        %v926 = vsel %vm422, %v862, %v878
        %v927 = vsel %vm422, %v863, %v879
        %v928 = vsel %vm422, %v864, %v880
        %v929 = vsel %vm422, %v865, %v881
        %v930 = vsel %vm422, %v866, %v882
        %v931 = vsel %vm422, %v867, %v883
        %v932 = vsel %vm422, %v868, %v884
        %v933 = vsel %vm422, %v869, %v885
        %v934 = vsel %vm422, %v870, %v886
        %v935 = vsel %vm422, %v871, %v887
        %v936 = vsel %vm422, %v872, %v888
        %v937 = vsel %vm422, %v889, %v857
        %v938 = vsel %vm422, %v890, %v858
        %v939 = vsel %vm422, %v891, %v859
        %v940 = vsel %vm422, %v892, %v860
        %v941 = vsel %vm422, %v893, %v861
        %v942 = vsel %vm422, %v894, %v862
        %v943 = vsel %vm422, %v895, %v863
        %v944 = vsel %vm422, %v896, %v864
        %v945 = vsel %vm422, %v897, %v865
        %v946 = vsel %vm422, %v898, %v866
        %v947 = vsel %vm422, %v899, %v867
        %v948 = vsel %vm422, %v900, %v868
        %v949 = vsel %vm422, %v901, %v869
        %v950 = vsel %vm422, %v902, %v870
        %v951 = vsel %vm422, %v903, %v871
        %v952 = vsel %vm422, %v904, %v872
        %v953 = vrot.slane %v809, 1
        %v954 = vrot.slane %v812, 1
        %v955 = vrot.slane %v815, 1
        %v956 = vrot.slane %v818, 1
        %v957 = vrot.slane %v821, 1
        %v958 = vrot.slane %v824, 1
        %v959 = vrot.slane %v827, 1
        %v960 = vrot.slane %v830, 1
        %v961 = vrot.slane %v833, 1
        %v962 = vrot.slane %v836, 1
        %v963 = vrot.slane %v839, 1
        %v964 = vrot.slane %v842, 1
        %v965 = vrot.slane %v845, 1
        %v966 = vrot.slane %v848, 1
        %v967 = vrot.slane %v851, 1
        %v968 = vrot.slane %v854, 1
        %v969 = vrot.slane %v810, 1
        %v970 = vrot.slane %v813, 1
        %v971 = vrot.slane %v816, 1
        %v972 = vrot.slane %v819, 1
        %v973 = vrot.slane %v822, 1
        %v974 = vrot.slane %v825, 1
        %v975 = vrot.slane %v828, 1
        %v976 = vrot.slane %v831, 1
        %v977 = vrot.slane %v834, 1
        %v978 = vrot.slane %v837, 1
        %v979 = vrot.slane %v840, 1
        %v980 = vrot.slane %v843, 1
        %v981 = vrot.slane %v846, 1
        %v982 = vrot.slane %v849, 1
        %v983 = vrot.slane %v852, 1
        %v984 = vrot.slane %v855, 1
        %v985 = vrot.slane %v811, 1
        %v986 = vrot.slane %v814, 1
        %v987 = vrot.slane %v817, 1
        %v988 = vrot.slane %v820, 1
        %v989 = vrot.slane %v823, 1
        %v990 = vrot.slane %v826, 1
        %v991 = vrot.slane %v829, 1
        %v992 = vrot.slane %v832, 1
        %v993 = vrot.slane %v835, 1
        %v994 = vrot.slane %v838, 1
        %v995 = vrot.slane %v841, 1
        %v996 = vrot.slane %v844, 1
        %v997 = vrot.slane %v847, 1
        %v998 = vrot.slane %v850, 1
        %v999 = vrot.slane %v853, 1
        %v1000 = vrot.slane %v856, 1
        %v1001 = vsel %vm519, %v969, %v985
        %v1002 = vsel %vm519, %v970, %v986
        %v1003 = vsel %vm519, %v971, %v987
        %v1004 = vsel %vm519, %v972, %v988
        %v1005 = vsel %vm519, %v973, %v989
        %v1006 = vsel %vm519, %v974, %v990
        %v1007 = vsel %vm519, %v975, %v991
        %v1008 = vsel %vm519, %v976, %v992
        %v1009 = vsel %vm519, %v977, %v993
        %v1010 = vsel %vm519, %v978, %v994
        %v1011 = vsel %vm519, %v979, %v995
        %v1012 = vsel %vm519, %v980, %v996
        %v1013 = vsel %vm519, %v981, %v997
        %v1014 = vsel %vm519, %v982, %v998
        %v1015 = vsel %vm519, %v983, %v999
        %v1016 = vsel %vm519, %v984, %v1000
        %v1017 = vsel %vm519, %v953, %v969
        %v1018 = vsel %vm519, %v954, %v970
        %v1019 = vsel %vm519, %v955, %v971
        %v1020 = vsel %vm519, %v956, %v972
        %v1021 = vsel %vm519, %v957, %v973
        %v1022 = vsel %vm519, %v958, %v974
        %v1023 = vsel %vm519, %v959, %v975
        %v1024 = vsel %vm519, %v960, %v976
        %v1025 = vsel %vm519, %v961, %v977
        %v1026 = vsel %vm519, %v962, %v978
        %v1027 = vsel %vm519, %v963, %v979
        %v1028 = vsel %vm519, %v964, %v980
        %v1029 = vsel %vm519, %v965, %v981
        %v1030 = vsel %vm519, %v966, %v982
        %v1031 = vsel %vm519, %v967, %v983
        %v1032 = vsel %vm519, %v968, %v984
        %v1033 = vsel %vm519, %v985, %v953
        %v1034 = vsel %vm519, %v986, %v954
        %v1035 = vsel %vm519, %v987, %v955
        %v1036 = vsel %vm519, %v988, %v956
        %v1037 = vsel %vm519, %v989, %v957
        %v1038 = vsel %vm519, %v990, %v958
        %v1039 = vsel %vm519, %v991, %v959
        %v1040 = vsel %vm519, %v992, %v960
        %v1041 = vsel %vm519, %v993, %v961
        %v1042 = vsel %vm519, %v994, %v962
        %v1043 = vsel %vm519, %v995, %v963
        %v1044 = vsel %vm519, %v996, %v964
        %v1045 = vsel %vm519, %v997, %v965
        %v1046 = vsel %vm519, %v998, %v966
        %v1047 = vsel %vm519, %v999, %v967
        %v1048 = vsel %vm519, %v1000, %v968
        %1097 = vrot.lane.b32.xlu0 %v326, 4
        %v1098 = vpop.permute.xlu0 %1097
        %1099 = vrot.lane.b32.xlu0 %v327, 4
        %v1100 = vpop.permute.xlu0 %1099
        %1101 = vrot.lane.b32.xlu0 %v328, 4
        %v1102 = vpop.permute.xlu0 %1101
        %1103 = vrot.lane.b32.xlu0 %v329, 4
        %v1104 = vpop.permute.xlu0 %1103
        %1105 = vrot.lane.b32.xlu0 %v330, 4
        %v1106 = vpop.permute.xlu0 %1105
        %1107 = vrot.lane.b32.xlu0 %v331, 4
        %v1108 = vpop.permute.xlu0 %1107
        %1109 = vrot.lane.b32.xlu0 %v332, 4
        %v1110 = vpop.permute.xlu0 %1109
        %1111 = vrot.lane.b32.xlu0 %v333, 4
        %v1112 = vpop.permute.xlu0 %1111
        %1113 = vrot.lane.b32.xlu0 %v334, 4
        %v1114 = vpop.permute.xlu0 %1113
        %1115 = vrot.lane.b32.xlu0 %v335, 4
        %v1116 = vpop.permute.xlu0 %1115
        %1117 = vrot.lane.b32.xlu0 %v336, 4
        %v1118 = vpop.permute.xlu0 %1117
        %1119 = vrot.lane.b32.xlu0 %v337, 4
        %v1120 = vpop.permute.xlu0 %1119
        %1121 = vrot.lane.b32.xlu0 %v338, 4
        %v1122 = vpop.permute.xlu0 %1121
        %1123 = vrot.lane.b32.xlu0 %v339, 4
        %v1124 = vpop.permute.xlu0 %1123
        %1125 = vrot.lane.b32.xlu0 %v340, 4
        %v1126 = vpop.permute.xlu0 %1125
        %1127 = vrot.lane.b32.xlu0 %v341, 4
        %v1128 = vpop.permute.xlu0 %1127
        %1129 = vrot.lane.b32.xlu0 %v342, 4
        %v1130 = vpop.permute.xlu0 %1129
        %1131 = vrot.lane.b32.xlu0 %v343, 4
        %v1132 = vpop.permute.xlu0 %1131
        %1133 = vrot.lane.b32.xlu0 %v344, 4
        %v1134 = vpop.permute.xlu0 %1133
        %1135 = vrot.lane.b32.xlu0 %v345, 4
        %v1136 = vpop.permute.xlu0 %1135
        %1137 = vrot.lane.b32.xlu0 %v346, 4
        %v1138 = vpop.permute.xlu0 %1137
        %1139 = vrot.lane.b32.xlu0 %v347, 4
        %v1140 = vpop.permute.xlu0 %1139
        %1141 = vrot.lane.b32.xlu0 %v348, 4
        %v1142 = vpop.permute.xlu0 %1141
        %1143 = vrot.lane.b32.xlu0 %v349, 4
        %v1144 = vpop.permute.xlu0 %1143
        %1145 = vrot.lane.b32.xlu0 %v350, 4
        %v1146 = vpop.permute.xlu0 %1145
        %1147 = vrot.lane.b32.xlu0 %v351, 4
        %v1148 = vpop.permute.xlu0 %1147
        %1149 = vrot.lane.b32.xlu0 %v352, 4
        %v1150 = vpop.permute.xlu0 %1149
        %1151 = vrot.lane.b32.xlu0 %v353, 4
        %v1152 = vpop.permute.xlu0 %1151
        %1153 = vrot.lane.b32.xlu0 %v354, 4
        %v1154 = vpop.permute.xlu0 %1153
        %1155 = vrot.lane.b32.xlu0 %v355, 4
        %v1156 = vpop.permute.xlu0 %1155
        %1157 = vrot.lane.b32.xlu0 %v356, 4
        %v1158 = vpop.permute.xlu0 %1157
        %1159 = vrot.lane.b32.xlu0 %v357, 4
        %v1160 = vpop.permute.xlu0 %1159
        %1161 = vrot.lane.b32.xlu0 %v358, 4
        %v1162 = vpop.permute.xlu0 %1161
        %1163 = vrot.lane.b32.xlu0 %v359, 4
        %v1164 = vpop.permute.xlu0 %1163
        %1165 = vrot.lane.b32.xlu0 %v360, 4
        %v1166 = vpop.permute.xlu0 %1165
        %1167 = vrot.lane.b32.xlu0 %v361, 4
        %v1168 = vpop.permute.xlu0 %1167
        %1169 = vrot.lane.b32.xlu0 %v362, 4
        %v1170 = vpop.permute.xlu0 %1169
        %1171 = vrot.lane.b32.xlu0 %v363, 4
        %v1172 = vpop.permute.xlu0 %1171
        %1173 = vrot.lane.b32.xlu0 %v364, 4
        %v1174 = vpop.permute.xlu0 %1173
        %1175 = vrot.lane.b32.xlu0 %v365, 4
        %v1176 = vpop.permute.xlu0 %1175
        %1177 = vrot.lane.b32.xlu0 %v366, 4
        %v1178 = vpop.permute.xlu0 %1177
        %1179 = vrot.lane.b32.xlu0 %v367, 4
        %v1180 = vpop.permute.xlu0 %1179
        %1181 = vrot.lane.b32.xlu0 %v368, 4
        %v1182 = vpop.permute.xlu0 %1181
        %1183 = vrot.lane.b32.xlu0 %v369, 4
        %v1184 = vpop.permute.xlu0 %1183
        %1185 = vrot.lane.b32.xlu0 %v370, 4
        %v1186 = vpop.permute.xlu0 %1185
        %1187 = vrot.lane.b32.xlu0 %v371, 4
        %v1188 = vpop.permute.xlu0 %1187
        %1189 = vrot.lane.b32.xlu0 %v372, 4
        %v1190 = vpop.permute.xlu0 %1189
        %1191 = vrot.lane.b32.xlu0 %v373, 4
        %v1192 = vpop.permute.xlu0 %1191
        %1289 = vrot.lane.b32.xlu0 %v536, 8
        %v1290 = vpop.permute.xlu0 %1289
        %1291 = vrot.lane.b32.xlu0 %v520, 8
        %v1292 = vpop.permute.xlu0 %1291
        %1293 = vrot.lane.b32.xlu0 %v552, 8
        %v1294 = vpop.permute.xlu0 %1293
        %1295 = vrot.lane.b32.xlu0 %v537, 8
        %v1296 = vpop.permute.xlu0 %1295
        %1297 = vrot.lane.b32.xlu0 %v521, 8
        %v1298 = vpop.permute.xlu0 %1297
        %1299 = vrot.lane.b32.xlu0 %v553, 8
        %v1300 = vpop.permute.xlu0 %1299
        %1301 = vrot.lane.b32.xlu0 %v538, 8
        %v1302 = vpop.permute.xlu0 %1301
        %1303 = vrot.lane.b32.xlu0 %v522, 8
        %v1304 = vpop.permute.xlu0 %1303
        %1305 = vrot.lane.b32.xlu0 %v554, 8
        %v1306 = vpop.permute.xlu0 %1305
        %1307 = vrot.lane.b32.xlu0 %v539, 8
        %v1308 = vpop.permute.xlu0 %1307
        %1309 = vrot.lane.b32.xlu0 %v523, 8
        %v1310 = vpop.permute.xlu0 %1309
        %1311 = vrot.lane.b32.xlu0 %v555, 8
        %v1312 = vpop.permute.xlu0 %1311
        %1313 = vrot.lane.b32.xlu0 %v540, 8
        %v1314 = vpop.permute.xlu0 %1313
        %1315 = vrot.lane.b32.xlu0 %v524, 8
        %v1316 = vpop.permute.xlu0 %1315
        %1317 = vrot.lane.b32.xlu0 %v556, 8
        %v1318 = vpop.permute.xlu0 %1317
        %1319 = vrot.lane.b32.xlu0 %v541, 8
        %v1320 = vpop.permute.xlu0 %1319
        %1321 = vrot.lane.b32.xlu0 %v525, 8
        %v1322 = vpop.permute.xlu0 %1321
        %1323 = vrot.lane.b32.xlu0 %v557, 8
        %v1324 = vpop.permute.xlu0 %1323
        %1325 = vrot.lane.b32.xlu0 %v542, 8
        %v1326 = vpop.permute.xlu0 %1325
        %1327 = vrot.lane.b32.xlu0 %v526, 8
        %v1328 = vpop.permute.xlu0 %1327
        %1329 = vrot.lane.b32.xlu0 %v558, 8
        %v1330 = vpop.permute.xlu0 %1329
        %1331 = vrot.lane.b32.xlu0 %v543, 8
        %v1332 = vpop.permute.xlu0 %1331
        %1333 = vrot.lane.b32.xlu0 %v527, 8
        %v1334 = vpop.permute.xlu0 %1333
        %1335 = vrot.lane.b32.xlu0 %v559, 8
        %v1336 = vpop.permute.xlu0 %1335
        %1337 = vrot.lane.b32.xlu0 %v544, 8
        %v1338 = vpop.permute.xlu0 %1337
        %1339 = vrot.lane.b32.xlu0 %v528, 8
        %v1340 = vpop.permute.xlu0 %1339
        %1341 = vrot.lane.b32.xlu0 %v560, 8
        %v1342 = vpop.permute.xlu0 %1341
        %1343 = vrot.lane.b32.xlu0 %v545, 8
        %v1344 = vpop.permute.xlu0 %1343
        %1345 = vrot.lane.b32.xlu0 %v529, 8
        %v1346 = vpop.permute.xlu0 %1345
        %1347 = vrot.lane.b32.xlu0 %v561, 8
        %v1348 = vpop.permute.xlu0 %1347
        %1349 = vrot.lane.b32.xlu0 %v546, 8
        %v1350 = vpop.permute.xlu0 %1349
        %1351 = vrot.lane.b32.xlu0 %v530, 8
        %v1352 = vpop.permute.xlu0 %1351
        %1353 = vrot.lane.b32.xlu0 %v562, 8
        %v1354 = vpop.permute.xlu0 %1353
        %1355 = vrot.lane.b32.xlu0 %v547, 8
        %v1356 = vpop.permute.xlu0 %1355
        %1357 = vrot.lane.b32.xlu0 %v531, 8
        %v1358 = vpop.permute.xlu0 %1357
        %1359 = vrot.lane.b32.xlu0 %v563, 8
        %v1360 = vpop.permute.xlu0 %1359
        %1361 = vrot.lane.b32.xlu0 %v548, 8
        %v1362 = vpop.permute.xlu0 %1361
        %1363 = vrot.lane.b32.xlu0 %v532, 8
        %v1364 = vpop.permute.xlu0 %1363
        %1365 = vrot.lane.b32.xlu0 %v564, 8
        %v1366 = vpop.permute.xlu0 %1365
        %1367 = vrot.lane.b32.xlu0 %v549, 8
        %v1368 = vpop.permute.xlu0 %1367
        %1369 = vrot.lane.b32.xlu0 %v533, 8
        %v1370 = vpop.permute.xlu0 %1369
        %1371 = vrot.lane.b32.xlu0 %v565, 8
        %v1372 = vpop.permute.xlu0 %1371
        %1373 = vrot.lane.b32.xlu0 %v550, 8
        %v1374 = vpop.permute.xlu0 %1373
        %1375 = vrot.lane.b32.xlu0 %v534, 8
        %v1376 = vpop.permute.xlu0 %1375
        %1377 = vrot.lane.b32.xlu0 %v566, 8
        %v1378 = vpop.permute.xlu0 %1377
        %1379 = vrot.lane.b32.xlu0 %v551, 8
        %v1380 = vpop.permute.xlu0 %1379
        %1381 = vrot.lane.b32.xlu0 %v535, 8
        %v1382 = vpop.permute.xlu0 %1381
        %1383 = vrot.lane.b32.xlu0 %v567, 8
        %v1384 = vpop.permute.xlu0 %1383
        %1481 = vrot.lane.b32.xlu0 %v696, 12
        %v1482 = vpop.permute.xlu0 %1481
        %1483 = vrot.lane.b32.xlu0 %v680, 12
        %v1484 = vpop.permute.xlu0 %1483
        %1485 = vrot.lane.b32.xlu0 %v664, 12
        %v1486 = vpop.permute.xlu0 %1485
        %1487 = vrot.lane.b32.xlu0 %v697, 12
        %v1488 = vpop.permute.xlu0 %1487
        %1489 = vrot.lane.b32.xlu0 %v681, 12
        %v1490 = vpop.permute.xlu0 %1489
        %1491 = vrot.lane.b32.xlu0 %v665, 12
        %v1492 = vpop.permute.xlu0 %1491
        %1493 = vrot.lane.b32.xlu0 %v698, 12
        %v1494 = vpop.permute.xlu0 %1493
        %1495 = vrot.lane.b32.xlu0 %v682, 12
        %v1496 = vpop.permute.xlu0 %1495
        %1497 = vrot.lane.b32.xlu0 %v666, 12
        %v1498 = vpop.permute.xlu0 %1497
        %1499 = vrot.lane.b32.xlu0 %v699, 12
        %v1500 = vpop.permute.xlu0 %1499
        %1501 = vrot.lane.b32.xlu0 %v683, 12
        %v1502 = vpop.permute.xlu0 %1501
        %1503 = vrot.lane.b32.xlu0 %v667, 12
        %v1504 = vpop.permute.xlu0 %1503
        %1505 = vrot.lane.b32.xlu0 %v700, 12
        %v1506 = vpop.permute.xlu0 %1505
        %1507 = vrot.lane.b32.xlu0 %v684, 12
        %v1508 = vpop.permute.xlu0 %1507
        %1509 = vrot.lane.b32.xlu0 %v668, 12
        %v1510 = vpop.permute.xlu0 %1509
        %1511 = vrot.lane.b32.xlu0 %v701, 12
        %v1512 = vpop.permute.xlu0 %1511
        %1513 = vrot.lane.b32.xlu0 %v685, 12
        %v1514 = vpop.permute.xlu0 %1513
        %1515 = vrot.lane.b32.xlu0 %v669, 12
        %v1516 = vpop.permute.xlu0 %1515
        %1517 = vrot.lane.b32.xlu0 %v702, 12
        %v1518 = vpop.permute.xlu0 %1517
        %1519 = vrot.lane.b32.xlu0 %v686, 12
        %v1520 = vpop.permute.xlu0 %1519
        %1521 = vrot.lane.b32.xlu0 %v670, 12
        %v1522 = vpop.permute.xlu0 %1521
        %1523 = vrot.lane.b32.xlu0 %v703, 12
        %v1524 = vpop.permute.xlu0 %1523
        %1525 = vrot.lane.b32.xlu0 %v687, 12
        %v1526 = vpop.permute.xlu0 %1525
        %1527 = vrot.lane.b32.xlu0 %v671, 12
        %v1528 = vpop.permute.xlu0 %1527
        %1529 = vrot.lane.b32.xlu0 %v704, 12
        %v1530 = vpop.permute.xlu0 %1529
        %1531 = vrot.lane.b32.xlu0 %v688, 12
        %v1532 = vpop.permute.xlu0 %1531
        %1533 = vrot.lane.b32.xlu0 %v672, 12
        %v1534 = vpop.permute.xlu0 %1533
        %1535 = vrot.lane.b32.xlu0 %v705, 12
        %v1536 = vpop.permute.xlu0 %1535
        %1537 = vrot.lane.b32.xlu0 %v689, 12
        %v1538 = vpop.permute.xlu0 %1537
        %1539 = vrot.lane.b32.xlu0 %v673, 12
        %v1540 = vpop.permute.xlu0 %1539
        %1541 = vrot.lane.b32.xlu0 %v706, 12
        %v1542 = vpop.permute.xlu0 %1541
        %1543 = vrot.lane.b32.xlu0 %v690, 12
        %v1544 = vpop.permute.xlu0 %1543
        %1545 = vrot.lane.b32.xlu0 %v674, 12
        %v1546 = vpop.permute.xlu0 %1545
        %1547 = vrot.lane.b32.xlu0 %v707, 12
        %v1548 = vpop.permute.xlu0 %1547
        %1549 = vrot.lane.b32.xlu0 %v691, 12
        %v1550 = vpop.permute.xlu0 %1549
        %1551 = vrot.lane.b32.xlu0 %v675, 12
        %v1552 = vpop.permute.xlu0 %1551
        %1553 = vrot.lane.b32.xlu0 %v708, 12
        %v1554 = vpop.permute.xlu0 %1553
        %1555 = vrot.lane.b32.xlu0 %v692, 12
        %v1556 = vpop.permute.xlu0 %1555
        %1557 = vrot.lane.b32.xlu0 %v676, 12
        %v1558 = vpop.permute.xlu0 %1557
        %1559 = vrot.lane.b32.xlu0 %v709, 12
        %v1560 = vpop.permute.xlu0 %1559
        %1561 = vrot.lane.b32.xlu0 %v693, 12
        %v1562 = vpop.permute.xlu0 %1561
        %1563 = vrot.lane.b32.xlu0 %v677, 12
        %v1564 = vpop.permute.xlu0 %1563
        %1565 = vrot.lane.b32.xlu0 %v710, 12
        %v1566 = vpop.permute.xlu0 %1565
        %1567 = vrot.lane.b32.xlu0 %v694, 12
        %v1568 = vpop.permute.xlu0 %1567
        %1569 = vrot.lane.b32.xlu0 %v678, 12
        %v1570 = vpop.permute.xlu0 %1569
        %1571 = vrot.lane.b32.xlu0 %v711, 12
        %v1572 = vpop.permute.xlu0 %1571
        %1573 = vrot.lane.b32.xlu0 %v695, 12
        %v1574 = vpop.permute.xlu0 %1573
        %1575 = vrot.lane.b32.xlu0 %v679, 12
        %v1576 = vpop.permute.xlu0 %1575
        %1673 = vrot.lane.b32.xlu0 %v568, 16
        %v1674 = vpop.permute.xlu0 %1673
        %1675 = vrot.lane.b32.xlu0 %v569, 16
        %v1676 = vpop.permute.xlu0 %1675
        %1677 = vrot.lane.b32.xlu0 %v570, 16
        %v1678 = vpop.permute.xlu0 %1677
        %1679 = vrot.lane.b32.xlu0 %v571, 16
        %v1680 = vpop.permute.xlu0 %1679
        %1681 = vrot.lane.b32.xlu0 %v572, 16
        %v1682 = vpop.permute.xlu0 %1681
        %1683 = vrot.lane.b32.xlu0 %v573, 16
        %v1684 = vpop.permute.xlu0 %1683
        %1685 = vrot.lane.b32.xlu0 %v574, 16
        %v1686 = vpop.permute.xlu0 %1685
        %1687 = vrot.lane.b32.xlu0 %v575, 16
        %v1688 = vpop.permute.xlu0 %1687
        %1689 = vrot.lane.b32.xlu0 %v576, 16
        %v1690 = vpop.permute.xlu0 %1689
        %1691 = vrot.lane.b32.xlu0 %v577, 16
        %v1692 = vpop.permute.xlu0 %1691
        %1693 = vrot.lane.b32.xlu0 %v578, 16
        %v1694 = vpop.permute.xlu0 %1693
        %1695 = vrot.lane.b32.xlu0 %v579, 16
        %v1696 = vpop.permute.xlu0 %1695
        %1697 = vrot.lane.b32.xlu0 %v580, 16
        %v1698 = vpop.permute.xlu0 %1697
        %1699 = vrot.lane.b32.xlu0 %v581, 16
        %v1700 = vpop.permute.xlu0 %1699
        %1701 = vrot.lane.b32.xlu0 %v582, 16
        %v1702 = vpop.permute.xlu0 %1701
        %1703 = vrot.lane.b32.xlu0 %v583, 16
        %v1704 = vpop.permute.xlu0 %1703
        %1705 = vrot.lane.b32.xlu0 %v584, 16
        %v1706 = vpop.permute.xlu0 %1705
        %1707 = vrot.lane.b32.xlu0 %v585, 16
        %v1708 = vpop.permute.xlu0 %1707
        %1709 = vrot.lane.b32.xlu0 %v586, 16
        %v1710 = vpop.permute.xlu0 %1709
        %1711 = vrot.lane.b32.xlu0 %v587, 16
        %v1712 = vpop.permute.xlu0 %1711
        %1713 = vrot.lane.b32.xlu0 %v588, 16
        %v1714 = vpop.permute.xlu0 %1713
        %1715 = vrot.lane.b32.xlu0 %v589, 16
        %v1716 = vpop.permute.xlu0 %1715
        %1717 = vrot.lane.b32.xlu0 %v590, 16
        %v1718 = vpop.permute.xlu0 %1717
        %1719 = vrot.lane.b32.xlu0 %v591, 16
        %v1720 = vpop.permute.xlu0 %1719
        %1721 = vrot.lane.b32.xlu0 %v592, 16
        %v1722 = vpop.permute.xlu0 %1721
        %1723 = vrot.lane.b32.xlu0 %v593, 16
        %v1724 = vpop.permute.xlu0 %1723
        %1725 = vrot.lane.b32.xlu0 %v594, 16
        %v1726 = vpop.permute.xlu0 %1725
        %1727 = vrot.lane.b32.xlu0 %v595, 16
        %v1728 = vpop.permute.xlu0 %1727
        %1729 = vrot.lane.b32.xlu0 %v596, 16
        %v1730 = vpop.permute.xlu0 %1729
        %1731 = vrot.lane.b32.xlu0 %v597, 16
        %v1732 = vpop.permute.xlu0 %1731
        %1733 = vrot.lane.b32.xlu0 %v598, 16
        %v1734 = vpop.permute.xlu0 %1733
        %1735 = vrot.lane.b32.xlu0 %v599, 16
        %v1736 = vpop.permute.xlu0 %1735
        %1737 = vrot.lane.b32.xlu0 %v600, 16
        %v1738 = vpop.permute.xlu0 %1737
        %1739 = vrot.lane.b32.xlu0 %v601, 16
        %v1740 = vpop.permute.xlu0 %1739
        %1741 = vrot.lane.b32.xlu0 %v602, 16
        %v1742 = vpop.permute.xlu0 %1741
        %1743 = vrot.lane.b32.xlu0 %v603, 16
        %v1744 = vpop.permute.xlu0 %1743
        %1745 = vrot.lane.b32.xlu0 %v604, 16
        %v1746 = vpop.permute.xlu0 %1745
        %1747 = vrot.lane.b32.xlu0 %v605, 16
        %v1748 = vpop.permute.xlu0 %1747
        %1749 = vrot.lane.b32.xlu0 %v606, 16
        %v1750 = vpop.permute.xlu0 %1749
        %1751 = vrot.lane.b32.xlu0 %v607, 16
        %v1752 = vpop.permute.xlu0 %1751
        %1753 = vrot.lane.b32.xlu0 %v608, 16
        %v1754 = vpop.permute.xlu0 %1753
        %1755 = vrot.lane.b32.xlu0 %v609, 16
        %v1756 = vpop.permute.xlu0 %1755
        %1757 = vrot.lane.b32.xlu0 %v610, 16
        %v1758 = vpop.permute.xlu0 %1757
        %1759 = vrot.lane.b32.xlu0 %v611, 16
        %v1760 = vpop.permute.xlu0 %1759
        %1761 = vrot.lane.b32.xlu0 %v612, 16
        %v1762 = vpop.permute.xlu0 %1761
        %1763 = vrot.lane.b32.xlu0 %v613, 16
        %v1764 = vpop.permute.xlu0 %1763
        %1765 = vrot.lane.b32.xlu0 %v614, 16
        %v1766 = vpop.permute.xlu0 %1765
        %1767 = vrot.lane.b32.xlu0 %v615, 16
        %v1768 = vpop.permute.xlu0 %1767
        %1865 = vrot.lane.b32.xlu0 %v776, 20
        %v1866 = vpop.permute.xlu0 %1865
        %1867 = vrot.lane.b32.xlu0 %v760, 20
        %v1868 = vpop.permute.xlu0 %1867
        %1869 = vrot.lane.b32.xlu0 %v792, 20
        %v1870 = vpop.permute.xlu0 %1869
        %1871 = vrot.lane.b32.xlu0 %v777, 20
        %v1872 = vpop.permute.xlu0 %1871
        %1873 = vrot.lane.b32.xlu0 %v761, 20
        %v1874 = vpop.permute.xlu0 %1873
        %1875 = vrot.lane.b32.xlu0 %v793, 20
        %v1876 = vpop.permute.xlu0 %1875
        %1877 = vrot.lane.b32.xlu0 %v778, 20
        %v1878 = vpop.permute.xlu0 %1877
        %1879 = vrot.lane.b32.xlu0 %v762, 20
        %v1880 = vpop.permute.xlu0 %1879
        %1881 = vrot.lane.b32.xlu0 %v794, 20
        %v1882 = vpop.permute.xlu0 %1881
        %1883 = vrot.lane.b32.xlu0 %v779, 20
        %v1884 = vpop.permute.xlu0 %1883
        %1885 = vrot.lane.b32.xlu0 %v763, 20
        %v1886 = vpop.permute.xlu0 %1885
        %1887 = vrot.lane.b32.xlu0 %v795, 20
        %v1888 = vpop.permute.xlu0 %1887
        %1889 = vrot.lane.b32.xlu0 %v780, 20
        %v1890 = vpop.permute.xlu0 %1889
        %1891 = vrot.lane.b32.xlu0 %v764, 20
        %v1892 = vpop.permute.xlu0 %1891
        %1893 = vrot.lane.b32.xlu0 %v796, 20
        %v1894 = vpop.permute.xlu0 %1893
        %1895 = vrot.lane.b32.xlu0 %v781, 20
        %v1896 = vpop.permute.xlu0 %1895
        %1897 = vrot.lane.b32.xlu0 %v765, 20
        %v1898 = vpop.permute.xlu0 %1897
        %1899 = vrot.lane.b32.xlu0 %v797, 20
        %v1900 = vpop.permute.xlu0 %1899
        %1901 = vrot.lane.b32.xlu0 %v782, 20
        %v1902 = vpop.permute.xlu0 %1901
        %1903 = vrot.lane.b32.xlu0 %v766, 20
        %v1904 = vpop.permute.xlu0 %1903
        %1905 = vrot.lane.b32.xlu0 %v798, 20
        %v1906 = vpop.permute.xlu0 %1905
        %1907 = vrot.lane.b32.xlu0 %v783, 20
        %v1908 = vpop.permute.xlu0 %1907
        %1909 = vrot.lane.b32.xlu0 %v767, 20
        %v1910 = vpop.permute.xlu0 %1909
        %1911 = vrot.lane.b32.xlu0 %v799, 20
        %v1912 = vpop.permute.xlu0 %1911
        %1913 = vrot.lane.b32.xlu0 %v784, 20
        %v1914 = vpop.permute.xlu0 %1913
        %1915 = vrot.lane.b32.xlu0 %v768, 20
        %v1916 = vpop.permute.xlu0 %1915
        %1917 = vrot.lane.b32.xlu0 %v800, 20
        %v1918 = vpop.permute.xlu0 %1917
        %1919 = vrot.lane.b32.xlu0 %v785, 20
        %v1920 = vpop.permute.xlu0 %1919
        %1921 = vrot.lane.b32.xlu0 %v769, 20
        %v1922 = vpop.permute.xlu0 %1921
        %1923 = vrot.lane.b32.xlu0 %v801, 20
        %v1924 = vpop.permute.xlu0 %1923
        %1925 = vrot.lane.b32.xlu0 %v786, 20
        %v1926 = vpop.permute.xlu0 %1925
        %1927 = vrot.lane.b32.xlu0 %v770, 20
        %v1928 = vpop.permute.xlu0 %1927
        %1929 = vrot.lane.b32.xlu0 %v802, 20
        %v1930 = vpop.permute.xlu0 %1929
        %1931 = vrot.lane.b32.xlu0 %v787, 20
        %v1932 = vpop.permute.xlu0 %1931
        %1933 = vrot.lane.b32.xlu0 %v771, 20
        %v1934 = vpop.permute.xlu0 %1933
        %1935 = vrot.lane.b32.xlu0 %v803, 20
        %v1936 = vpop.permute.xlu0 %1935
        %1937 = vrot.lane.b32.xlu0 %v788, 20
        %v1938 = vpop.permute.xlu0 %1937
        %1939 = vrot.lane.b32.xlu0 %v772, 20
        %v1940 = vpop.permute.xlu0 %1939
        %1941 = vrot.lane.b32.xlu0 %v804, 20
        %v1942 = vpop.permute.xlu0 %1941
        %1943 = vrot.lane.b32.xlu0 %v789, 20
        %v1944 = vpop.permute.xlu0 %1943
        %1945 = vrot.lane.b32.xlu0 %v773, 20
        %v1946 = vpop.permute.xlu0 %1945
        %1947 = vrot.lane.b32.xlu0 %v805, 20
        %v1948 = vpop.permute.xlu0 %1947
        %1949 = vrot.lane.b32.xlu0 %v790, 20
        %v1950 = vpop.permute.xlu0 %1949
        %1951 = vrot.lane.b32.xlu0 %v774, 20
        %v1952 = vpop.permute.xlu0 %1951
        %1953 = vrot.lane.b32.xlu0 %v806, 20
        %v1954 = vpop.permute.xlu0 %1953
        %1955 = vrot.lane.b32.xlu0 %v791, 20
        %v1956 = vpop.permute.xlu0 %1955
        %1957 = vrot.lane.b32.xlu0 %v775, 20
        %v1958 = vpop.permute.xlu0 %1957
        %1959 = vrot.lane.b32.xlu0 %v807, 20
        %v1960 = vpop.permute.xlu0 %1959
        %2057 = vrot.lane.b32.xlu0 %v937, 24
        %v2058 = vpop.permute.xlu0 %2057
        %2059 = vrot.lane.b32.xlu0 %v921, 24
        %v2060 = vpop.permute.xlu0 %2059
        %2061 = vrot.lane.b32.xlu0 %v905, 24
        %v2062 = vpop.permute.xlu0 %2061
        %2063 = vrot.lane.b32.xlu0 %v938, 24
        %v2064 = vpop.permute.xlu0 %2063
        %2065 = vrot.lane.b32.xlu0 %v922, 24
        %v2066 = vpop.permute.xlu0 %2065
        %2067 = vrot.lane.b32.xlu0 %v906, 24
        %v2068 = vpop.permute.xlu0 %2067
        %2069 = vrot.lane.b32.xlu0 %v939, 24
        %v2070 = vpop.permute.xlu0 %2069
        %2071 = vrot.lane.b32.xlu0 %v923, 24
        %v2072 = vpop.permute.xlu0 %2071
        %2073 = vrot.lane.b32.xlu0 %v907, 24
        %v2074 = vpop.permute.xlu0 %2073
        %2075 = vrot.lane.b32.xlu0 %v940, 24
        %v2076 = vpop.permute.xlu0 %2075
        %2077 = vrot.lane.b32.xlu0 %v924, 24
        %v2078 = vpop.permute.xlu0 %2077
        %2079 = vrot.lane.b32.xlu0 %v908, 24
        %v2080 = vpop.permute.xlu0 %2079
        %2081 = vrot.lane.b32.xlu0 %v941, 24
        %v2082 = vpop.permute.xlu0 %2081
        %2083 = vrot.lane.b32.xlu0 %v925, 24
        %v2084 = vpop.permute.xlu0 %2083
        %2085 = vrot.lane.b32.xlu0 %v909, 24
        %v2086 = vpop.permute.xlu0 %2085
        %2087 = vrot.lane.b32.xlu0 %v942, 24
        %v2088 = vpop.permute.xlu0 %2087
        %2089 = vrot.lane.b32.xlu0 %v926, 24
        %v2090 = vpop.permute.xlu0 %2089
        %2091 = vrot.lane.b32.xlu0 %v910, 24
        %v2092 = vpop.permute.xlu0 %2091
        %2093 = vrot.lane.b32.xlu0 %v943, 24
        %v2094 = vpop.permute.xlu0 %2093
        %2095 = vrot.lane.b32.xlu0 %v927, 24
        %v2096 = vpop.permute.xlu0 %2095
        %2097 = vrot.lane.b32.xlu0 %v911, 24
        %v2098 = vpop.permute.xlu0 %2097
        %2099 = vrot.lane.b32.xlu0 %v944, 24
        %v2100 = vpop.permute.xlu0 %2099
        %2101 = vrot.lane.b32.xlu0 %v928, 24
        %v2102 = vpop.permute.xlu0 %2101
        %2103 = vrot.lane.b32.xlu0 %v912, 24
        %v2104 = vpop.permute.xlu0 %2103
        %2105 = vrot.lane.b32.xlu0 %v945, 24
        %v2106 = vpop.permute.xlu0 %2105
        %2107 = vrot.lane.b32.xlu0 %v929, 24
        %v2108 = vpop.permute.xlu0 %2107
        %2109 = vrot.lane.b32.xlu0 %v913, 24
        %v2110 = vpop.permute.xlu0 %2109
        %2111 = vrot.lane.b32.xlu0 %v946, 24
        %v2112 = vpop.permute.xlu0 %2111
        %2113 = vrot.lane.b32.xlu0 %v930, 24
        %v2114 = vpop.permute.xlu0 %2113
        %2115 = vrot.lane.b32.xlu0 %v914, 24
        %v2116 = vpop.permute.xlu0 %2115
        %2117 = vrot.lane.b32.xlu0 %v947, 24
        %v2118 = vpop.permute.xlu0 %2117
        %2119 = vrot.lane.b32.xlu0 %v931, 24
        %v2120 = vpop.permute.xlu0 %2119
        %2121 = vrot.lane.b32.xlu0 %v915, 24
        %v2122 = vpop.permute.xlu0 %2121
        %2123 = vrot.lane.b32.xlu0 %v948, 24
        %v2124 = vpop.permute.xlu0 %2123
        %2125 = vrot.lane.b32.xlu0 %v932, 24
        %v2126 = vpop.permute.xlu0 %2125
        %2127 = vrot.lane.b32.xlu0 %v916, 24
        %v2128 = vpop.permute.xlu0 %2127
        %2129 = vrot.lane.b32.xlu0 %v949, 24
        %v2130 = vpop.permute.xlu0 %2129
        %2131 = vrot.lane.b32.xlu0 %v933, 24
        %v2132 = vpop.permute.xlu0 %2131
        %2133 = vrot.lane.b32.xlu0 %v917, 24
        %v2134 = vpop.permute.xlu0 %2133
        %2135 = vrot.lane.b32.xlu0 %v950, 24
        %v2136 = vpop.permute.xlu0 %2135
        %2137 = vrot.lane.b32.xlu0 %v934, 24
        %v2138 = vpop.permute.xlu0 %2137
        %2139 = vrot.lane.b32.xlu0 %v918, 24
        %v2140 = vpop.permute.xlu0 %2139
        %2141 = vrot.lane.b32.xlu0 %v951, 24
        %v2142 = vpop.permute.xlu0 %2141
        %2143 = vrot.lane.b32.xlu0 %v935, 24
        %v2144 = vpop.permute.xlu0 %2143
        %2145 = vrot.lane.b32.xlu0 %v919, 24
        %v2146 = vpop.permute.xlu0 %2145
        %2147 = vrot.lane.b32.xlu0 %v952, 24
        %v2148 = vpop.permute.xlu0 %2147
        %2149 = vrot.lane.b32.xlu0 %v936, 24
        %v2150 = vpop.permute.xlu0 %2149
        %2151 = vrot.lane.b32.xlu0 %v920, 24
        %v2152 = vpop.permute.xlu0 %2151
        %2249 = vrot.lane.b32.xlu0 %v809, 28
        %v2250 = vpop.permute.xlu0 %2249
        %2251 = vrot.lane.b32.xlu0 %v810, 28
        %v2252 = vpop.permute.xlu0 %2251
        %2253 = vrot.lane.b32.xlu0 %v811, 28
        %v2254 = vpop.permute.xlu0 %2253
        %2255 = vrot.lane.b32.xlu0 %v812, 28
        %v2256 = vpop.permute.xlu0 %2255
        %2257 = vrot.lane.b32.xlu0 %v813, 28
        %v2258 = vpop.permute.xlu0 %2257
        %2259 = vrot.lane.b32.xlu0 %v814, 28
        %v2260 = vpop.permute.xlu0 %2259
        %2261 = vrot.lane.b32.xlu0 %v815, 28
        %v2262 = vpop.permute.xlu0 %2261
        %2263 = vrot.lane.b32.xlu0 %v816, 28
        %v2264 = vpop.permute.xlu0 %2263
        %2265 = vrot.lane.b32.xlu0 %v817, 28
        %v2266 = vpop.permute.xlu0 %2265
        %2267 = vrot.lane.b32.xlu0 %v818, 28
        %v2268 = vpop.permute.xlu0 %2267
        %2269 = vrot.lane.b32.xlu0 %v819, 28
        %v2270 = vpop.permute.xlu0 %2269
        %2271 = vrot.lane.b32.xlu0 %v820, 28
        %v2272 = vpop.permute.xlu0 %2271
        %2273 = vrot.lane.b32.xlu0 %v821, 28
        %v2274 = vpop.permute.xlu0 %2273
        %2275 = vrot.lane.b32.xlu0 %v822, 28
        %v2276 = vpop.permute.xlu0 %2275
        %2277 = vrot.lane.b32.xlu0 %v823, 28
        %v2278 = vpop.permute.xlu0 %2277
        %2279 = vrot.lane.b32.xlu0 %v824, 28
        %v2280 = vpop.permute.xlu0 %2279
        %2281 = vrot.lane.b32.xlu0 %v825, 28
        %v2282 = vpop.permute.xlu0 %2281
        %2283 = vrot.lane.b32.xlu0 %v826, 28
        %v2284 = vpop.permute.xlu0 %2283
        %2285 = vrot.lane.b32.xlu0 %v827, 28
        %v2286 = vpop.permute.xlu0 %2285
        %2287 = vrot.lane.b32.xlu0 %v828, 28
        %v2288 = vpop.permute.xlu0 %2287
        %2289 = vrot.lane.b32.xlu0 %v829, 28
        %v2290 = vpop.permute.xlu0 %2289
        %2291 = vrot.lane.b32.xlu0 %v830, 28
        %v2292 = vpop.permute.xlu0 %2291
        %2293 = vrot.lane.b32.xlu0 %v831, 28
        %v2294 = vpop.permute.xlu0 %2293
        %2295 = vrot.lane.b32.xlu0 %v832, 28
        %v2296 = vpop.permute.xlu0 %2295
        %2297 = vrot.lane.b32.xlu0 %v833, 28
        %v2298 = vpop.permute.xlu0 %2297
        %2299 = vrot.lane.b32.xlu0 %v834, 28
        %v2300 = vpop.permute.xlu0 %2299
        %2301 = vrot.lane.b32.xlu0 %v835, 28
        %v2302 = vpop.permute.xlu0 %2301
        %2303 = vrot.lane.b32.xlu0 %v836, 28
        %v2304 = vpop.permute.xlu0 %2303
        %2305 = vrot.lane.b32.xlu0 %v837, 28
        %v2306 = vpop.permute.xlu0 %2305
        %2307 = vrot.lane.b32.xlu0 %v838, 28
        %v2308 = vpop.permute.xlu0 %2307
        %2309 = vrot.lane.b32.xlu0 %v839, 28
        %v2310 = vpop.permute.xlu0 %2309
        %2311 = vrot.lane.b32.xlu0 %v840, 28
        %v2312 = vpop.permute.xlu0 %2311
        %2313 = vrot.lane.b32.xlu0 %v841, 28
        %v2314 = vpop.permute.xlu0 %2313
        %2315 = vrot.lane.b32.xlu0 %v842, 28
        %v2316 = vpop.permute.xlu0 %2315
        %2317 = vrot.lane.b32.xlu0 %v843, 28
        %v2318 = vpop.permute.xlu0 %2317
        %2319 = vrot.lane.b32.xlu0 %v844, 28
        %v2320 = vpop.permute.xlu0 %2319
        %2321 = vrot.lane.b32.xlu0 %v845, 28
        %v2322 = vpop.permute.xlu0 %2321
        %2323 = vrot.lane.b32.xlu0 %v846, 28
        %v2324 = vpop.permute.xlu0 %2323
        %2325 = vrot.lane.b32.xlu0 %v847, 28
        %v2326 = vpop.permute.xlu0 %2325
        %2327 = vrot.lane.b32.xlu0 %v848, 28
        %v2328 = vpop.permute.xlu0 %2327
        %2329 = vrot.lane.b32.xlu0 %v849, 28
        %v2330 = vpop.permute.xlu0 %2329
        %2331 = vrot.lane.b32.xlu0 %v850, 28
        %v2332 = vpop.permute.xlu0 %2331
        %2333 = vrot.lane.b32.xlu0 %v851, 28
        %v2334 = vpop.permute.xlu0 %2333
        %2335 = vrot.lane.b32.xlu0 %v852, 28
        %v2336 = vpop.permute.xlu0 %2335
        %2337 = vrot.lane.b32.xlu0 %v853, 28
        %v2338 = vpop.permute.xlu0 %2337
        %2339 = vrot.lane.b32.xlu0 %v854, 28
        %v2340 = vpop.permute.xlu0 %2339
        %2341 = vrot.lane.b32.xlu0 %v855, 28
        %v2342 = vpop.permute.xlu0 %2341
        %2343 = vrot.lane.b32.xlu0 %v856, 28
        %v2344 = vpop.permute.xlu0 %2343
        %2441 = vrot.lane.b32.xlu0 %v1017, 32
        %v2442 = vpop.permute.xlu0 %2441
        %2443 = vrot.lane.b32.xlu0 %v1001, 32
        %v2444 = vpop.permute.xlu0 %2443
        %2445 = vrot.lane.b32.xlu0 %v1033, 32
        %v2446 = vpop.permute.xlu0 %2445
        %2447 = vrot.lane.b32.xlu0 %v1018, 32
        %v2448 = vpop.permute.xlu0 %2447
        %2449 = vrot.lane.b32.xlu0 %v1002, 32
        %v2450 = vpop.permute.xlu0 %2449
        %2451 = vrot.lane.b32.xlu0 %v1034, 32
        %v2452 = vpop.permute.xlu0 %2451
        %2453 = vrot.lane.b32.xlu0 %v1019, 32
        %v2454 = vpop.permute.xlu0 %2453
        %2455 = vrot.lane.b32.xlu0 %v1003, 32
        %v2456 = vpop.permute.xlu0 %2455
        %2457 = vrot.lane.b32.xlu0 %v1035, 32
        %v2458 = vpop.permute.xlu0 %2457
        %2459 = vrot.lane.b32.xlu0 %v1020, 32
        %v2460 = vpop.permute.xlu0 %2459
        %2461 = vrot.lane.b32.xlu0 %v1004, 32
        %v2462 = vpop.permute.xlu0 %2461
        %2463 = vrot.lane.b32.xlu0 %v1036, 32
        %v2464 = vpop.permute.xlu0 %2463
        %2465 = vrot.lane.b32.xlu0 %v1021, 32
        %v2466 = vpop.permute.xlu0 %2465
        %2467 = vrot.lane.b32.xlu0 %v1005, 32
        %v2468 = vpop.permute.xlu0 %2467
        %2469 = vrot.lane.b32.xlu0 %v1037, 32
        %v2470 = vpop.permute.xlu0 %2469
        %2471 = vrot.lane.b32.xlu0 %v1022, 32
        %v2472 = vpop.permute.xlu0 %2471
        %2473 = vrot.lane.b32.xlu0 %v1006, 32
        %v2474 = vpop.permute.xlu0 %2473
        %2475 = vrot.lane.b32.xlu0 %v1038, 32
        %v2476 = vpop.permute.xlu0 %2475
        %2477 = vrot.lane.b32.xlu0 %v1023, 32
        %v2478 = vpop.permute.xlu0 %2477
        %2479 = vrot.lane.b32.xlu0 %v1007, 32
        %v2480 = vpop.permute.xlu0 %2479
        %2481 = vrot.lane.b32.xlu0 %v1039, 32
        %v2482 = vpop.permute.xlu0 %2481
        %2483 = vrot.lane.b32.xlu0 %v1024, 32
        %v2484 = vpop.permute.xlu0 %2483
        %2485 = vrot.lane.b32.xlu0 %v1008, 32
        %v2486 = vpop.permute.xlu0 %2485
        %2487 = vrot.lane.b32.xlu0 %v1040, 32
        %v2488 = vpop.permute.xlu0 %2487
        %2489 = vrot.lane.b32.xlu0 %v1025, 32
        %v2490 = vpop.permute.xlu0 %2489
        %2491 = vrot.lane.b32.xlu0 %v1009, 32
        %v2492 = vpop.permute.xlu0 %2491
        %2493 = vrot.lane.b32.xlu0 %v1041, 32
        %v2494 = vpop.permute.xlu0 %2493
        %2495 = vrot.lane.b32.xlu0 %v1026, 32
        %v2496 = vpop.permute.xlu0 %2495
        %2497 = vrot.lane.b32.xlu0 %v1010, 32
        %v2498 = vpop.permute.xlu0 %2497
        %2499 = vrot.lane.b32.xlu0 %v1042, 32
        %v2500 = vpop.permute.xlu0 %2499
        %2501 = vrot.lane.b32.xlu0 %v1027, 32
        %v2502 = vpop.permute.xlu0 %2501
        %2503 = vrot.lane.b32.xlu0 %v1011, 32
        %v2504 = vpop.permute.xlu0 %2503
        %2505 = vrot.lane.b32.xlu0 %v1043, 32
        %v2506 = vpop.permute.xlu0 %2505
        %2507 = vrot.lane.b32.xlu0 %v1028, 32
        %v2508 = vpop.permute.xlu0 %2507
        %2509 = vrot.lane.b32.xlu0 %v1012, 32
        %v2510 = vpop.permute.xlu0 %2509
        %2511 = vrot.lane.b32.xlu0 %v1044, 32
        %v2512 = vpop.permute.xlu0 %2511
        %2513 = vrot.lane.b32.xlu0 %v1029, 32
        %v2514 = vpop.permute.xlu0 %2513
        %2515 = vrot.lane.b32.xlu0 %v1013, 32
        %v2516 = vpop.permute.xlu0 %2515
        %2517 = vrot.lane.b32.xlu0 %v1045, 32
        %v2518 = vpop.permute.xlu0 %2517
        %2519 = vrot.lane.b32.xlu0 %v1030, 32
        %v2520 = vpop.permute.xlu0 %2519
        %2521 = vrot.lane.b32.xlu0 %v1014, 32
        %v2522 = vpop.permute.xlu0 %2521
        %2523 = vrot.lane.b32.xlu0 %v1046, 32
        %v2524 = vpop.permute.xlu0 %2523
        %2525 = vrot.lane.b32.xlu0 %v1031, 32
        %v2526 = vpop.permute.xlu0 %2525
        %2527 = vrot.lane.b32.xlu0 %v1015, 32
        %v2528 = vpop.permute.xlu0 %2527
        %2529 = vrot.lane.b32.xlu0 %v1047, 32
        %v2530 = vpop.permute.xlu0 %2529
        %2531 = vrot.lane.b32.xlu0 %v1032, 32
        %v2532 = vpop.permute.xlu0 %2531
        %2533 = vrot.lane.b32.xlu0 %v1016, 32
        %v2534 = vpop.permute.xlu0 %2533
        %2535 = vrot.lane.b32.xlu0 %v1048, 32
        %v2536 = vpop.permute.xlu0 %2535
        %v2585 = vsel %vm224, %v455, %v1098
        %v2586 = vsel %vm224, %v439, %v1100
        %v2587 = vsel %vm224, %v423, %v1102
        %v2588 = vsel %vm224, %v456, %v1104
        %v2589 = vsel %vm224, %v440, %v1106
        %v2590 = vsel %vm224, %v424, %v1108
        %v2591 = vsel %vm224, %v457, %v1110
        %v2592 = vsel %vm224, %v441, %v1112
        %v2593 = vsel %vm224, %v425, %v1114
        %v2594 = vsel %vm224, %v458, %v1116
        %v2595 = vsel %vm224, %v442, %v1118
        %v2596 = vsel %vm224, %v426, %v1120
        %v2597 = vsel %vm224, %v459, %v1122
        %v2598 = vsel %vm224, %v443, %v1124
        %v2599 = vsel %vm224, %v427, %v1126
        %v2600 = vsel %vm224, %v460, %v1128
        %v2601 = vsel %vm224, %v444, %v1130
        %v2602 = vsel %vm224, %v428, %v1132
        %v2603 = vsel %vm224, %v461, %v1134
        %v2604 = vsel %vm224, %v445, %v1136
        %v2605 = vsel %vm224, %v429, %v1138
        %v2606 = vsel %vm224, %v462, %v1140
        %v2607 = vsel %vm224, %v446, %v1142
        %v2608 = vsel %vm224, %v430, %v1144
        %v2609 = vsel %vm224, %v463, %v1146
        %v2610 = vsel %vm224, %v447, %v1148
        %v2611 = vsel %vm224, %v431, %v1150
        %v2612 = vsel %vm224, %v464, %v1152
        %v2613 = vsel %vm224, %v448, %v1154
        %v2614 = vsel %vm224, %v432, %v1156
        %v2615 = vsel %vm224, %v465, %v1158
        %v2616 = vsel %vm224, %v449, %v1160
        %v2617 = vsel %vm224, %v433, %v1162
        %v2618 = vsel %vm224, %v466, %v1164
        %v2619 = vsel %vm224, %v450, %v1166
        %v2620 = vsel %vm224, %v434, %v1168
        %v2621 = vsel %vm224, %v467, %v1170
        %v2622 = vsel %vm224, %v451, %v1172
        %v2623 = vsel %vm224, %v435, %v1174
        %v2624 = vsel %vm224, %v468, %v1176
        %v2625 = vsel %vm224, %v452, %v1178
        %v2626 = vsel %vm224, %v436, %v1180
        %v2627 = vsel %vm224, %v469, %v1182
        %v2628 = vsel %vm224, %v453, %v1184
        %v2629 = vsel %vm224, %v437, %v1186
        %v2630 = vsel %vm224, %v470, %v1188
        %v2631 = vsel %vm224, %v454, %v1190
        %v2632 = vsel %vm224, %v438, %v1192
        %vm2633 = vcmask 64512
        %v2634 = vsel %vm2633, %v2585, %v1290
        %v2635 = vsel %vm2633, %v2586, %v1292
        %v2636 = vsel %vm2633, %v2587, %v1294
        %v2637 = vsel %vm2633, %v2588, %v1296
        %v2638 = vsel %vm2633, %v2589, %v1298
        %v2639 = vsel %vm2633, %v2590, %v1300
        %v2640 = vsel %vm2633, %v2591, %v1302
        %v2641 = vsel %vm2633, %v2592, %v1304
        %v2642 = vsel %vm2633, %v2593, %v1306
        %v2643 = vsel %vm2633, %v2594, %v1308
        %v2644 = vsel %vm2633, %v2595, %v1310
        %v2645 = vsel %vm2633, %v2596, %v1312
        %v2646 = vsel %vm2633, %v2597, %v1314
        %v2647 = vsel %vm2633, %v2598, %v1316
        %v2648 = vsel %vm2633, %v2599, %v1318
        %v2649 = vsel %vm2633, %v2600, %v1320
        %v2650 = vsel %vm2633, %v2601, %v1322
        %v2651 = vsel %vm2633, %v2602, %v1324
        %v2652 = vsel %vm2633, %v2603, %v1326
        %v2653 = vsel %vm2633, %v2604, %v1328
        %v2654 = vsel %vm2633, %v2605, %v1330
        %v2655 = vsel %vm2633, %v2606, %v1332
        %v2656 = vsel %vm2633, %v2607, %v1334
        %v2657 = vsel %vm2633, %v2608, %v1336
        %v2658 = vsel %vm2633, %v2609, %v1338
        %v2659 = vsel %vm2633, %v2610, %v1340
        %v2660 = vsel %vm2633, %v2611, %v1342
        %v2661 = vsel %vm2633, %v2612, %v1344
        %v2662 = vsel %vm2633, %v2613, %v1346
        %v2663 = vsel %vm2633, %v2614, %v1348
        %v2664 = vsel %vm2633, %v2615, %v1350
        %v2665 = vsel %vm2633, %v2616, %v1352
        %v2666 = vsel %vm2633, %v2617, %v1354
        %v2667 = vsel %vm2633, %v2618, %v1356
        %v2668 = vsel %vm2633, %v2619, %v1358
        %v2669 = vsel %vm2633, %v2620, %v1360
        %v2670 = vsel %vm2633, %v2621, %v1362
        %v2671 = vsel %vm2633, %v2622, %v1364
        %v2672 = vsel %vm2633, %v2623, %v1366
        %v2673 = vsel %vm2633, %v2624, %v1368
        %v2674 = vsel %vm2633, %v2625, %v1370
        %v2675 = vsel %vm2633, %v2626, %v1372
        %v2676 = vsel %vm2633, %v2627, %v1374
        %v2677 = vsel %vm2633, %v2628, %v1376
        %v2678 = vsel %vm2633, %v2629, %v1378
        %v2679 = vsel %vm2633, %v2630, %v1380
        %v2680 = vsel %vm2633, %v2631, %v1382
        %v2681 = vsel %vm2633, %v2632, %v1384
        %vm2682 = vcmask 97280
        %v2683 = vsel %vm2682, %v2634, %v1482
        %v2684 = vsel %vm2682, %v2635, %v1484
        %v2685 = vsel %vm2682, %v2636, %v1486
        %v2686 = vsel %vm2682, %v2637, %v1488
        %v2687 = vsel %vm2682, %v2638, %v1490
        %v2688 = vsel %vm2682, %v2639, %v1492
        %v2689 = vsel %vm2682, %v2640, %v1494
        %v2690 = vsel %vm2682, %v2641, %v1496
        %v2691 = vsel %vm2682, %v2642, %v1498
        %v2692 = vsel %vm2682, %v2643, %v1500
        %v2693 = vsel %vm2682, %v2644, %v1502
        %v2694 = vsel %vm2682, %v2645, %v1504
        %v2695 = vsel %vm2682, %v2646, %v1506
        %v2696 = vsel %vm2682, %v2647, %v1508
        %v2697 = vsel %vm2682, %v2648, %v1510
        %v2698 = vsel %vm2682, %v2649, %v1512
        %v2699 = vsel %vm2682, %v2650, %v1514
        %v2700 = vsel %vm2682, %v2651, %v1516
        %v2701 = vsel %vm2682, %v2652, %v1518
        %v2702 = vsel %vm2682, %v2653, %v1520
        %v2703 = vsel %vm2682, %v2654, %v1522
        %v2704 = vsel %vm2682, %v2655, %v1524
        %v2705 = vsel %vm2682, %v2656, %v1526
        %v2706 = vsel %vm2682, %v2657, %v1528
        %v2707 = vsel %vm2682, %v2658, %v1530
        %v2708 = vsel %vm2682, %v2659, %v1532
        %v2709 = vsel %vm2682, %v2660, %v1534
        %v2710 = vsel %vm2682, %v2661, %v1536
        %v2711 = vsel %vm2682, %v2662, %v1538
        %v2712 = vsel %vm2682, %v2663, %v1540
        %v2713 = vsel %vm2682, %v2664, %v1542
        %v2714 = vsel %vm2682, %v2665, %v1544
        %v2715 = vsel %vm2682, %v2666, %v1546
        %v2716 = vsel %vm2682, %v2667, %v1548
        %v2717 = vsel %vm2682, %v2668, %v1550
        %v2718 = vsel %vm2682, %v2669, %v1552
        %v2719 = vsel %vm2682, %v2670, %v1554
        %v2720 = vsel %vm2682, %v2671, %v1556
        %v2721 = vsel %vm2682, %v2672, %v1558
        %v2722 = vsel %vm2682, %v2673, %v1560
        %v2723 = vsel %vm2682, %v2674, %v1562
        %v2724 = vsel %vm2682, %v2675, %v1564
        %v2725 = vsel %vm2682, %v2676, %v1566
        %v2726 = vsel %vm2682, %v2677, %v1568
        %v2727 = vsel %vm2682, %v2678, %v1570
        %v2728 = vsel %vm2682, %v2679, %v1572
        %v2729 = vsel %vm2682, %v2680, %v1574
        %v2730 = vsel %vm2682, %v2681, %v1576
        %vm2731 = vcmask 130048
        %v2732 = vsel %vm2731, %v2683, %v1674
        %v2733 = vsel %vm2731, %v2684, %v1676
        %v2734 = vsel %vm2731, %v2685, %v1678
        %v2735 = vsel %vm2731, %v2686, %v1680
        %v2736 = vsel %vm2731, %v2687, %v1682
        %v2737 = vsel %vm2731, %v2688, %v1684
        %v2738 = vsel %vm2731, %v2689, %v1686
        %v2739 = vsel %vm2731, %v2690, %v1688
        %v2740 = vsel %vm2731, %v2691, %v1690
        %v2741 = vsel %vm2731, %v2692, %v1692
        %v2742 = vsel %vm2731, %v2693, %v1694
        %v2743 = vsel %vm2731, %v2694, %v1696
        %v2744 = vsel %vm2731, %v2695, %v1698
        %v2745 = vsel %vm2731, %v2696, %v1700
        %v2746 = vsel %vm2731, %v2697, %v1702
        %v2747 = vsel %vm2731, %v2698, %v1704
        %v2748 = vsel %vm2731, %v2699, %v1706
        %v2749 = vsel %vm2731, %v2700, %v1708
        %v2750 = vsel %vm2731, %v2701, %v1710
        %v2751 = vsel %vm2731, %v2702, %v1712
        %v2752 = vsel %vm2731, %v2703, %v1714
        %v2753 = vsel %vm2731, %v2704, %v1716
        %v2754 = vsel %vm2731, %v2705, %v1718
        %v2755 = vsel %vm2731, %v2706, %v1720
        %v2756 = vsel %vm2731, %v2707, %v1722
        %v2757 = vsel %vm2731, %v2708, %v1724
        %v2758 = vsel %vm2731, %v2709, %v1726
        %v2759 = vsel %vm2731, %v2710, %v1728
        %v2760 = vsel %vm2731, %v2711, %v1730
        %v2761 = vsel %vm2731, %v2712, %v1732
        %v2762 = vsel %vm2731, %v2713, %v1734
        %v2763 = vsel %vm2731, %v2714, %v1736
        %v2764 = vsel %vm2731, %v2715, %v1738
        %v2765 = vsel %vm2731, %v2716, %v1740
        %v2766 = vsel %vm2731, %v2717, %v1742
        %v2767 = vsel %vm2731, %v2718, %v1744
        %v2768 = vsel %vm2731, %v2719, %v1746
        %v2769 = vsel %vm2731, %v2720, %v1748
        %v2770 = vsel %vm2731, %v2721, %v1750
        %v2771 = vsel %vm2731, %v2722, %v1752
        %v2772 = vsel %vm2731, %v2723, %v1754
        %v2773 = vsel %vm2731, %v2724, %v1756
        %v2774 = vsel %vm2731, %v2725, %v1758
        %v2775 = vsel %vm2731, %v2726, %v1760
        %v2776 = vsel %vm2731, %v2727, %v1762
        %v2777 = vsel %vm2731, %v2728, %v1764
        %v2778 = vsel %vm2731, %v2729, %v1766
        %v2779 = vsel %vm2731, %v2730, %v1768
        %vm2780 = vcmask 162816
        %v2781 = vsel %vm2780, %v2732, %v1866
        %v2782 = vsel %vm2780, %v2733, %v1868
        %v2783 = vsel %vm2780, %v2734, %v1870
        %v2784 = vsel %vm2780, %v2735, %v1872
        %v2785 = vsel %vm2780, %v2736, %v1874
        %v2786 = vsel %vm2780, %v2737, %v1876
        %v2787 = vsel %vm2780, %v2738, %v1878
        %v2788 = vsel %vm2780, %v2739, %v1880
        %v2789 = vsel %vm2780, %v2740, %v1882
        %v2790 = vsel %vm2780, %v2741, %v1884
        %v2791 = vsel %vm2780, %v2742, %v1886
        %v2792 = vsel %vm2780, %v2743, %v1888
        %v2793 = vsel %vm2780, %v2744, %v1890
        %v2794 = vsel %vm2780, %v2745, %v1892
        %v2795 = vsel %vm2780, %v2746, %v1894
        %v2796 = vsel %vm2780, %v2747, %v1896
        %v2797 = vsel %vm2780, %v2748, %v1898
        %v2798 = vsel %vm2780, %v2749, %v1900
        %v2799 = vsel %vm2780, %v2750, %v1902
        %v2800 = vsel %vm2780, %v2751, %v1904
        %v2801 = vsel %vm2780, %v2752, %v1906
        %v2802 = vsel %vm2780, %v2753, %v1908
        %v2803 = vsel %vm2780, %v2754, %v1910
        %v2804 = vsel %vm2780, %v2755, %v1912
        %v2805 = vsel %vm2780, %v2756, %v1914
        %v2806 = vsel %vm2780, %v2757, %v1916
        %v2807 = vsel %vm2780, %v2758, %v1918
        %v2808 = vsel %vm2780, %v2759, %v1920
        %v2809 = vsel %vm2780, %v2760, %v1922
        %v2810 = vsel %vm2780, %v2761, %v1924
        %v2811 = vsel %vm2780, %v2762, %v1926
        %v2812 = vsel %vm2780, %v2763, %v1928
        %v2813 = vsel %vm2780, %v2764, %v1930
        %v2814 = vsel %vm2780, %v2765, %v1932
        %v2815 = vsel %vm2780, %v2766, %v1934
        %v2816 = vsel %vm2780, %v2767, %v1936
        %v2817 = vsel %vm2780, %v2768, %v1938
        %v2818 = vsel %vm2780, %v2769, %v1940
        %v2819 = vsel %vm2780, %v2770, %v1942
        %v2820 = vsel %vm2780, %v2771, %v1944
        %v2821 = vsel %vm2780, %v2772, %v1946
        %v2822 = vsel %vm2780, %v2773, %v1948
        %v2823 = vsel %vm2780, %v2774, %v1950
        %v2824 = vsel %vm2780, %v2775, %v1952
        %v2825 = vsel %vm2780, %v2776, %v1954
        %v2826 = vsel %vm2780, %v2777, %v1956
        %v2827 = vsel %vm2780, %v2778, %v1958
        %v2828 = vsel %vm2780, %v2779, %v1960
        %vm2829 = vcmask 195584
        %v2830 = vsel %vm2829, %v2781, %v2058
        %v2831 = vsel %vm2829, %v2782, %v2060
        %v2832 = vsel %vm2829, %v2783, %v2062
        %v2833 = vsel %vm2829, %v2784, %v2064
        %v2834 = vsel %vm2829, %v2785, %v2066
        %v2835 = vsel %vm2829, %v2786, %v2068
        %v2836 = vsel %vm2829, %v2787, %v2070
        %v2837 = vsel %vm2829, %v2788, %v2072
        %v2838 = vsel %vm2829, %v2789, %v2074
        %v2839 = vsel %vm2829, %v2790, %v2076
        %v2840 = vsel %vm2829, %v2791, %v2078
        %v2841 = vsel %vm2829, %v2792, %v2080
        %v2842 = vsel %vm2829, %v2793, %v2082
        %v2843 = vsel %vm2829, %v2794, %v2084
        %v2844 = vsel %vm2829, %v2795, %v2086
        %v2845 = vsel %vm2829, %v2796, %v2088
        %v2846 = vsel %vm2829, %v2797, %v2090
        %v2847 = vsel %vm2829, %v2798, %v2092
        %v2848 = vsel %vm2829, %v2799, %v2094
        %v2849 = vsel %vm2829, %v2800, %v2096
        %v2850 = vsel %vm2829, %v2801, %v2098
        %v2851 = vsel %vm2829, %v2802, %v2100
        %v2852 = vsel %vm2829, %v2803, %v2102
        %v2853 = vsel %vm2829, %v2804, %v2104
        %v2854 = vsel %vm2829, %v2805, %v2106
        %v2855 = vsel %vm2829, %v2806, %v2108
        %v2856 = vsel %vm2829, %v2807, %v2110
        %v2857 = vsel %vm2829, %v2808, %v2112
        %v2858 = vsel %vm2829, %v2809, %v2114
        %v2859 = vsel %vm2829, %v2810, %v2116
        %v2860 = vsel %vm2829, %v2811, %v2118
        %v2861 = vsel %vm2829, %v2812, %v2120
        %v2862 = vsel %vm2829, %v2813, %v2122
        %v2863 = vsel %vm2829, %v2814, %v2124
        %v2864 = vsel %vm2829, %v2815, %v2126
        %v2865 = vsel %vm2829, %v2816, %v2128
        %v2866 = vsel %vm2829, %v2817, %v2130
        %v2867 = vsel %vm2829, %v2818, %v2132
        %v2868 = vsel %vm2829, %v2819, %v2134
        %v2869 = vsel %vm2829, %v2820, %v2136
        %v2870 = vsel %vm2829, %v2821, %v2138
        %v2871 = vsel %vm2829, %v2822, %v2140
        %v2872 = vsel %vm2829, %v2823, %v2142
        %v2873 = vsel %vm2829, %v2824, %v2144
        %v2874 = vsel %vm2829, %v2825, %v2146
        %v2875 = vsel %vm2829, %v2826, %v2148
        %v2876 = vsel %vm2829, %v2827, %v2150
        %v2877 = vsel %vm2829, %v2828, %v2152
        %vm2878 = vcmask 228352
        %v2879 = vsel %vm2878, %v2830, %v2250
        %v2880 = vsel %vm2878, %v2831, %v2252
        %v2881 = vsel %vm2878, %v2832, %v2254
        %v2882 = vsel %vm2878, %v2833, %v2256
        %v2883 = vsel %vm2878, %v2834, %v2258
        %v2884 = vsel %vm2878, %v2835, %v2260
        %v2885 = vsel %vm2878, %v2836, %v2262
        %v2886 = vsel %vm2878, %v2837, %v2264
        %v2887 = vsel %vm2878, %v2838, %v2266
        %v2888 = vsel %vm2878, %v2839, %v2268
        %v2889 = vsel %vm2878, %v2840, %v2270
        %v2890 = vsel %vm2878, %v2841, %v2272
        %v2891 = vsel %vm2878, %v2842, %v2274
        %v2892 = vsel %vm2878, %v2843, %v2276
        %v2893 = vsel %vm2878, %v2844, %v2278
        %v2894 = vsel %vm2878, %v2845, %v2280
        %v2895 = vsel %vm2878, %v2846, %v2282
        %v2896 = vsel %vm2878, %v2847, %v2284
        %v2897 = vsel %vm2878, %v2848, %v2286
        %v2898 = vsel %vm2878, %v2849, %v2288
        %v2899 = vsel %vm2878, %v2850, %v2290
        %v2900 = vsel %vm2878, %v2851, %v2292
        %v2901 = vsel %vm2878, %v2852, %v2294
        %v2902 = vsel %vm2878, %v2853, %v2296
        %v2903 = vsel %vm2878, %v2854, %v2298
        %v2904 = vsel %vm2878, %v2855, %v2300
        %v2905 = vsel %vm2878, %v2856, %v2302
        %v2906 = vsel %vm2878, %v2857, %v2304
        %v2907 = vsel %vm2878, %v2858, %v2306
        %v2908 = vsel %vm2878, %v2859, %v2308
        %v2909 = vsel %vm2878, %v2860, %v2310
        %v2910 = vsel %vm2878, %v2861, %v2312
        %v2911 = vsel %vm2878, %v2862, %v2314
        %v2912 = vsel %vm2878, %v2863, %v2316
        %v2913 = vsel %vm2878, %v2864, %v2318
        %v2914 = vsel %vm2878, %v2865, %v2320
        %v2915 = vsel %vm2878, %v2866, %v2322
        %v2916 = vsel %vm2878, %v2867, %v2324
        %v2917 = vsel %vm2878, %v2868, %v2326
        %v2918 = vsel %vm2878, %v2869, %v2328
        %v2919 = vsel %vm2878, %v2870, %v2330
        %v2920 = vsel %vm2878, %v2871, %v2332
        %v2921 = vsel %vm2878, %v2872, %v2334
        %v2922 = vsel %vm2878, %v2873, %v2336
        %v2923 = vsel %vm2878, %v2874, %v2338
        %v2924 = vsel %vm2878, %v2875, %v2340
        %v2925 = vsel %vm2878, %v2876, %v2342
        %v2926 = vsel %vm2878, %v2877, %v2344
        %vm2927 = vcmask 261120
        %v2928 = vsel %vm2927, %v2879, %v2442
        %v2929 = vsel %vm2927, %v2880, %v2444
        %v2930 = vsel %vm2927, %v2881, %v2446
        %v2931 = vsel %vm2927, %v2882, %v2448
        %v2932 = vsel %vm2927, %v2883, %v2450
        %v2933 = vsel %vm2927, %v2884, %v2452
        %v2934 = vsel %vm2927, %v2885, %v2454
        %v2935 = vsel %vm2927, %v2886, %v2456
        %v2936 = vsel %vm2927, %v2887, %v2458
        %v2937 = vsel %vm2927, %v2888, %v2460
        %v2938 = vsel %vm2927, %v2889, %v2462
        %v2939 = vsel %vm2927, %v2890, %v2464
        %v2940 = vsel %vm2927, %v2891, %v2466
        %v2941 = vsel %vm2927, %v2892, %v2468
        %v2942 = vsel %vm2927, %v2893, %v2470
        %v2943 = vsel %vm2927, %v2894, %v2472
        %v2944 = vsel %vm2927, %v2895, %v2474
        %v2945 = vsel %vm2927, %v2896, %v2476
        %v2946 = vsel %vm2927, %v2897, %v2478
        %v2947 = vsel %vm2927, %v2898, %v2480
        %v2948 = vsel %vm2927, %v2899, %v2482
        %v2949 = vsel %vm2927, %v2900, %v2484
        %v2950 = vsel %vm2927, %v2901, %v2486
        %v2951 = vsel %vm2927, %v2902, %v2488
        %v2952 = vsel %vm2927, %v2903, %v2490
        %v2953 = vsel %vm2927, %v2904, %v2492
        %v2954 = vsel %vm2927, %v2905, %v2494
        %v2955 = vsel %vm2927, %v2906, %v2496
        %v2956 = vsel %vm2927, %v2907, %v2498
        %v2957 = vsel %vm2927, %v2908, %v2500
        %v2958 = vsel %vm2927, %v2909, %v2502
        %v2959 = vsel %vm2927, %v2910, %v2504
        %v2960 = vsel %vm2927, %v2911, %v2506
        %v2961 = vsel %vm2927, %v2912, %v2508
        %v2962 = vsel %vm2927, %v2913, %v2510
        %v2963 = vsel %vm2927, %v2914, %v2512
        %v2964 = vsel %vm2927, %v2915, %v2514
        %v2965 = vsel %vm2927, %v2916, %v2516
        %v2966 = vsel %vm2927, %v2917, %v2518
        %v2967 = vsel %vm2927, %v2918, %v2520
        %v2968 = vsel %vm2927, %v2919, %v2522
        %v2969 = vsel %vm2927, %v2920, %v2524
        %v2970 = vsel %vm2927, %v2921, %v2526
        %v2971 = vsel %vm2927, %v2922, %v2528
        %v2972 = vsel %vm2927, %v2923, %v2530
        %v2973 = vsel %vm2927, %v2924, %v2532
        %v2974 = vsel %vm2927, %v2925, %v2534
        %v2975 = vsel %vm2927, %v2926, %v2536
        %v2976 = vpack.c.bf16 %v2929, %v2928
        %v2977 = vpack.c.bf16 %v2931, %v2930
        %v2978 = vpack.c.bf16 %v2933, %v2932
        %v2979 = vpack.c.bf16 %v2935, %v2934
        %v2980 = vpack.c.bf16 %v2937, %v2936
        %v2981 = vpack.c.bf16 %v2939, %v2938
        %v2982 = vpack.c.bf16 %v2941, %v2940
        %v2983 = vpack.c.bf16 %v2943, %v2942
        %v2984 = vpack.c.bf16 %v2945, %v2944
        %v2985 = vpack.c.bf16 %v2947, %v2946
        %v2986 = vpack.c.bf16 %v2949, %v2948
        %v2987 = vpack.c.bf16 %v2951, %v2950
        %v2988 = vpack.c.bf16 %v2953, %v2952
        %v2989 = vpack.c.bf16 %v2955, %v2954
        %v2990 = vpack.c.bf16 %v2957, %v2956
        %v2991 = vpack.c.bf16 %v2959, %v2958
        %v2992 = vpack.c.bf16 %v2961, %v2960
        %v2993 = vpack.c.bf16 %v2963, %v2962
        %v2994 = vpack.c.bf16 %v2965, %v2964
        %v2995 = vpack.c.bf16 %v2967, %v2966
        %v2996 = vpack.c.bf16 %v2969, %v2968
        %v2997 = vpack.c.bf16 %v2971, %v2970
        %v2998 = vpack.c.bf16 %v2973, %v2972
        %v2999 = vpack.c.bf16 %v2975, %v2974
        %v3000 = vld [vmem:[%s1] sm:$0xf]
        %v3001 = vld [vmem:[%s1 + $0x4] sm:$0xf]
        %v3002 = vld [vmem:[%s1 + $0x8] sm:$0xf]
        %v3003 = vld [vmem:[%s1 + $0xc] sm:$0xf]
        %v3004 = vld [vmem:[%s1 + $0x10] sm:$0x3]
        %v3005 = vld [vmem:[%s2] sm:$0x1]
        %v3007 = vlaneseq
        %v3008 = vshrl.u32 %v3007, 7
        %v3009 = vsub.s32 0, %v3008
        %v3010 = vrot.slane %v3005, %v3009
        %v3017 = vunpack.c.l.b16 %v3000
        %v3018 = vunpack.c.l.b16 %v3001
        %v3019 = vunpack.c.l.b16 %v3002
        %v3020 = vunpack.c.l.b16 %v3003
        %v3021 = vunpack.c.l.b16 %v3004
        %v3022 = vpack.c.b16 %v3018, %v3017
        %v3023 = vpack.c.b16 %v3020, %v3019
        %v3024 = vpack.c.b16 %v3021, %v3021
        %vm3027 = vcmask 293888
        %v3029 = vsel %vm3027, %v2976, 0
        %v3032 = vsel %vm3027, %v2977, 0
        %v3035 = vsel %vm3027, %v2978, 0
        %v3038 = vsel %vm3027, %v2979, 0
        %v3041 = vsel %vm3027, %v2980, 0
        %v3044 = vsel %vm3027, %v2981, 0
        %v3047 = vsel %vm3027, %v2982, 0
        %v3050 = vsel %vm3027, %v2983, 0
        %v3053 = vsel %vm3027, %v2984, 0
        %v3056 = vsel %vm3027, %v2985, 0
        %v3059 = vsel %vm3027, %v2986, 0
        %v3062 = vsel %vm3027, %v2987, 0
        %v3065 = vsel %vm3027, %v2988, 0
        %v3068 = vsel %vm3027, %v2989, 0
        %v3071 = vsel %vm3027, %v2990, 0
        %v3074 = vsel %vm3027, %v2991, 0
        %v3077 = vsel %vm3027, %v2992, 0
        %v3080 = vsel %vm3027, %v2993, 0
        %v3083 = vsel %vm3027, %v2994, 0
        %v3086 = vsel %vm3027, %v2995, 0
        %v3089 = vsel %vm3027, %v2996, 0
        %v3092 = vsel %vm3027, %v2997, 0
        %v3095 = vsel %vm3027, %v2998, 0
        %v3098 = vsel %vm3027, %v2999, 0
        %vm3100 = vcmask 1041408
        %v3102 = vsel %vm3100, %v3024, 0
        %3104 = vmatprep.subr.bf16.mxu0 0
        %3105 = vmatpush1.bf16.msra.mxu0 %v3022
        %3106 = vmatprep.subr.bf16.mxu0 0
        %3107 = vmatpush1.bf16.msra.mxu0 %v3023
        %3108 = vmatprep.subr.bf16.mxu0 0
        %3109 = vmatpush1.bf16.msra.mxu0 %v3102
        %3110 = vmatprep.subr.bf16.mxu0 0
        %3111 = vmatpush1.bf16.msra.mxu0 0
        %3112 = vmatprep.subr.bf16.mxu0 0
        %3113 = vmatpush1.bf16.msra.mxu0 0
        %3114 = vmatprep.subr.bf16.mxu0 0
        %3115 = vmatpush1.bf16.msra.mxu0 0
        %3116 = vmatprep.subr.bf16.mxu0 0
        %3117 = vmatpush1.bf16.msra.mxu0 0
        %3118 = vmatprep.subr.bf16.mxu0 0
        %3119 = vmatpush1.bf16.msra.mxu0 0
        %3120 = vmatprep.subr.bf16.mxu0 0
        %3121 = vmatpush1.bf16.msra.mxu0 0
        %3122 = vmatprep.subr.bf16.mxu0 0
        %3123 = vmatpush1.bf16.msra.mxu0 0
        %3124 = vmatprep.subr.bf16.mxu0 0
        %3125 = vmatpush1.bf16.msra.mxu0 0
        %3126 = vmatprep.subr.bf16.mxu0 0
        %3127 = vmatpush1.bf16.msra.mxu0 0
        %3128 = vmatprep.subr.bf16.mxu0 0
        %3129 = vmatpush1.bf16.msra.mxu0 0
        %3130 = vmatprep.subr.bf16.mxu0 0
        %3131 = vmatpush1.bf16.msra.mxu0 0
        %3132 = vmatprep.subr.bf16.mxu0 0
        %3133 = vmatpush1.bf16.msra.mxu0 0
        %3134 = vmatprep.subr.bf16.mxu0 0
        %3135 = vmatpush1.bf16.msra.mxu0 0
        %3136 = vmatprep.mubr.bf16.mxu0 0
        %3137 = vmatmul.mubr.bf16.gmra.mrb[0].mxu0 %v3029
        %v3138 = vpop.f32.mrb[0].mxu0
        %v3139 = vadd.f32 %v3010, %v3138
        %v3140 = vpop.f32.mrb[0].mxu0
        %v3141 = vpop.f32.mrb[0].mxu0
        %v3142 = vadd.f32 %v3010, %v3141
        %v3143 = vpop.f32.mrb[0].mxu0
        %3144 = vmatprep.mubr.bf16.mxu0 0
        %3145 = vmatmul.mubr.bf16.gmra.mrb[0].mxu0 %v3032
        %v3146 = vpop.f32.mrb[0].mxu0
        %v3147 = vadd.f32 %v3010, %v3146
        %v3148 = vpop.f32.mrb[0].mxu0
        %v3149 = vpop.f32.mrb[0].mxu0
        %v3150 = vadd.f32 %v3010, %v3149
        %v3151 = vpop.f32.mrb[0].mxu0
        %3152 = vmatprep.mubr.bf16.mxu0 0
        %3153 = vmatmul.mubr.bf16.gmra.mrb[0].mxu0 %v3035
        %v3154 = vpop.f32.mrb[0].mxu0
        %v3155 = vadd.f32 %v3010, %v3154
        %v3156 = vpop.f32.mrb[0].mxu0
        %v3157 = vpop.f32.mrb[0].mxu0
        %v3158 = vadd.f32 %v3010, %v3157
        %v3159 = vpop.f32.mrb[0].mxu0
        %3160 = vmatprep.mubr.bf16.mxu0 0
        %3161 = vmatmul.mubr.bf16.gmra.mrb[0].mxu0 %v3038
        %v3162 = vpop.f32.mrb[0].mxu0
        %v3163 = vadd.f32 %v3010, %v3162
        %v3164 = vpop.f32.mrb[0].mxu0
        %v3165 = vpop.f32.mrb[0].mxu0
        %v3166 = vadd.f32 %v3010, %v3165
        %v3167 = vpop.f32.mrb[0].mxu0
        %3168 = vmatprep.mubr.bf16.mxu0 0
        %3169 = vmatmul.mubr.bf16.gmra.mrb[0].mxu0 %v3041
        %v3170 = vpop.f32.mrb[0].mxu0
        %v3171 = vadd.f32 %v3010, %v3170
        %v3172 = vpop.f32.mrb[0].mxu0
        %v3173 = vpop.f32.mrb[0].mxu0
        %v3174 = vadd.f32 %v3010, %v3173
        %v3175 = vpop.f32.mrb[0].mxu0
        %3176 = vmatprep.mubr.bf16.mxu0 0
        %3177 = vmatmul.mubr.bf16.gmra.mrb[0].mxu0 %v3044
        %v3178 = vpop.f32.mrb[0].mxu0
        %v3179 = vadd.f32 %v3010, %v3178
        %v3180 = vpop.f32.mrb[0].mxu0
        %v3181 = vpop.f32.mrb[0].mxu0
        %v3182 = vadd.f32 %v3010, %v3181
        %v3183 = vpop.f32.mrb[0].mxu0
        %3184 = vmatprep.mubr.bf16.mxu0 0
        %3185 = vmatmul.mubr.bf16.gmra.mrb[0].mxu0 %v3047
        %v3186 = vpop.f32.mrb[0].mxu0
        %v3187 = vadd.f32 %v3010, %v3186
        %v3188 = vpop.f32.mrb[0].mxu0
        %v3189 = vpop.f32.mrb[0].mxu0
        %v3190 = vadd.f32 %v3010, %v3189
        %v3191 = vpop.f32.mrb[0].mxu0
        %3192 = vmatprep.mubr.bf16.mxu0 0
        %3193 = vmatmul.mubr.bf16.gmra.mrb[0].mxu0 %v3050
        %v3194 = vpop.f32.mrb[0].mxu0
        %v3195 = vadd.f32 %v3010, %v3194
        %v3196 = vpop.f32.mrb[0].mxu0
        %v3197 = vpop.f32.mrb[0].mxu0
        %v3198 = vadd.f32 %v3010, %v3197
        %v3199 = vpop.f32.mrb[0].mxu0
        %3200 = vmatprep.mubr.bf16.mxu0 0
        %3201 = vmatmul.mubr.bf16.gmra.mrb[0].mxu0 %v3053
        %v3202 = vpop.f32.mrb[0].mxu0
        %v3203 = vadd.f32 %v3010, %v3202
        %v3204 = vpop.f32.mrb[0].mxu0
        %v3205 = vpop.f32.mrb[0].mxu0
        %v3206 = vadd.f32 %v3010, %v3205
        %v3207 = vpop.f32.mrb[0].mxu0
        %3208 = vmatprep.mubr.bf16.mxu0 0
        %3209 = vmatmul.mubr.bf16.gmra.mrb[0].mxu0 %v3056
        %v3210 = vpop.f32.mrb[0].mxu0
        %v3211 = vadd.f32 %v3010, %v3210
        %v3212 = vpop.f32.mrb[0].mxu0
        %v3213 = vpop.f32.mrb[0].mxu0
        %v3214 = vadd.f32 %v3010, %v3213
        %v3215 = vpop.f32.mrb[0].mxu0
        %3216 = vmatprep.mubr.bf16.mxu0 0
        %3217 = vmatmul.mubr.bf16.gmra.mrb[0].mxu0 %v3059
        %v3218 = vpop.f32.mrb[0].mxu0
        %v3219 = vadd.f32 %v3010, %v3218
        %v3220 = vpop.f32.mrb[0].mxu0
        %v3221 = vpop.f32.mrb[0].mxu0
        %v3222 = vadd.f32 %v3010, %v3221
        %v3223 = vpop.f32.mrb[0].mxu0
        %3224 = vmatprep.mubr.bf16.mxu0 0
        %3225 = vmatmul.mubr.bf16.gmra.mrb[0].mxu0 %v3062
        %v3226 = vpop.f32.mrb[0].mxu0
        %v3227 = vadd.f32 %v3010, %v3226
        %v3228 = vpop.f32.mrb[0].mxu0
        %v3229 = vpop.f32.mrb[0].mxu0
        %v3230 = vadd.f32 %v3010, %v3229
        %v3231 = vpop.f32.mrb[0].mxu0
        %3232 = vmatprep.mubr.bf16.mxu0 0
        %3233 = vmatmul.mubr.bf16.gmra.mrb[0].mxu0 %v3065
        %v3234 = vpop.f32.mrb[0].mxu0
        %v3235 = vadd.f32 %v3010, %v3234
        %v3236 = vpop.f32.mrb[0].mxu0
        %v3237 = vpop.f32.mrb[0].mxu0
        %v3238 = vadd.f32 %v3010, %v3237
        %v3239 = vpop.f32.mrb[0].mxu0
        %3240 = vmatprep.mubr.bf16.mxu0 0
        %3241 = vmatmul.mubr.bf16.gmra.mrb[0].mxu0 %v3068
        %v3242 = vpop.f32.mrb[0].mxu0
        %v3243 = vadd.f32 %v3010, %v3242
        %v3244 = vpop.f32.mrb[0].mxu0
        %v3245 = vpop.f32.mrb[0].mxu0
        %v3246 = vadd.f32 %v3010, %v3245
        %v3247 = vpop.f32.mrb[0].mxu0
        %3248 = vmatprep.mubr.bf16.mxu0 0
        %3249 = vmatmul.mubr.bf16.gmra.mrb[0].mxu0 %v3071
        %v3250 = vpop.f32.mrb[0].mxu0
        %v3251 = vadd.f32 %v3010, %v3250
        %v3252 = vpop.f32.mrb[0].mxu0
        %v3253 = vpop.f32.mrb[0].mxu0
        %v3254 = vadd.f32 %v3010, %v3253
        %v3255 = vpop.f32.mrb[0].mxu0
        %3256 = vmatprep.mubr.bf16.mxu0 0
        %3257 = vmatmul.mubr.bf16.gmra.mrb[0].mxu0 %v3074
        %v3258 = vpop.f32.mrb[0].mxu0
        %v3259 = vadd.f32 %v3010, %v3258
        %v3260 = vpop.f32.mrb[0].mxu0
        %v3261 = vpop.f32.mrb[0].mxu0
        %v3262 = vadd.f32 %v3010, %v3261
        %v3263 = vpop.f32.mrb[0].mxu0
        %3264 = vmatprep.mubr.bf16.mxu0 0
        %3265 = vmatmul.mubr.bf16.gmra.mrb[0].mxu0 %v3077
        %v3266 = vpop.f32.mrb[0].mxu0
        %v3267 = vadd.f32 %v3010, %v3266
        %v3268 = vpop.f32.mrb[0].mxu0
        %v3269 = vpop.f32.mrb[0].mxu0
        %v3270 = vadd.f32 %v3010, %v3269
        %v3271 = vpop.f32.mrb[0].mxu0
        %3272 = vmatprep.mubr.bf16.mxu0 0
        %3273 = vmatmul.mubr.bf16.gmra.mrb[0].mxu0 %v3080
        %v3274 = vpop.f32.mrb[0].mxu0
        %v3275 = vadd.f32 %v3010, %v3274
        %v3276 = vpop.f32.mrb[0].mxu0
        %v3277 = vpop.f32.mrb[0].mxu0
        %v3278 = vadd.f32 %v3010, %v3277
        %v3279 = vpop.f32.mrb[0].mxu0
        %3280 = vmatprep.mubr.bf16.mxu0 0
        %3281 = vmatmul.mubr.bf16.gmra.mrb[0].mxu0 %v3083
        %v3282 = vpop.f32.mrb[0].mxu0
        %v3283 = vadd.f32 %v3010, %v3282
        %v3284 = vpop.f32.mrb[0].mxu0
        %v3285 = vpop.f32.mrb[0].mxu0
        %v3286 = vadd.f32 %v3010, %v3285
        %v3287 = vpop.f32.mrb[0].mxu0
        %3288 = vmatprep.mubr.bf16.mxu0 0
        %3289 = vmatmul.mubr.bf16.gmra.mrb[0].mxu0 %v3086
        %v3290 = vpop.f32.mrb[0].mxu0
        %v3291 = vadd.f32 %v3010, %v3290
        %v3292 = vpop.f32.mrb[0].mxu0
        %v3293 = vpop.f32.mrb[0].mxu0
        %v3294 = vadd.f32 %v3010, %v3293
        %v3295 = vpop.f32.mrb[0].mxu0
        %3296 = vmatprep.mubr.bf16.mxu0 0
        %3297 = vmatmul.mubr.bf16.gmra.mrb[0].mxu0 %v3089
        %v3298 = vpop.f32.mrb[0].mxu0
        %v3299 = vadd.f32 %v3010, %v3298
        %v3300 = vpop.f32.mrb[0].mxu0
        %v3301 = vpop.f32.mrb[0].mxu0
        %v3302 = vadd.f32 %v3010, %v3301
        %v3303 = vpop.f32.mrb[0].mxu0
        %3304 = vmatprep.mubr.bf16.mxu0 0
        %3305 = vmatmul.mubr.bf16.gmra.mrb[0].mxu0 %v3092
        %v3306 = vpop.f32.mrb[0].mxu0
        %v3307 = vadd.f32 %v3010, %v3306
        %v3308 = vpop.f32.mrb[0].mxu0
        %v3309 = vpop.f32.mrb[0].mxu0
        %v3310 = vadd.f32 %v3010, %v3309
        %v3311 = vpop.f32.mrb[0].mxu0
        %3312 = vmatprep.mubr.bf16.mxu0 0
        %3313 = vmatmul.mubr.bf16.gmra.mrb[0].mxu0 %v3095
        %v3314 = vpop.f32.mrb[0].mxu0
        %v3315 = vadd.f32 %v3010, %v3314
        %v3316 = vpop.f32.mrb[0].mxu0
        %v3317 = vpop.f32.mrb[0].mxu0
        %v3318 = vadd.f32 %v3010, %v3317
        %v3319 = vpop.f32.mrb[0].mxu0
        %3320 = vmatprep.mubr.bf16.mxu0 0
        %3321 = vmatmul.mubr.bf16.gmra.mrb[0].mxu0 %v3098
        %v3322 = vpop.f32.mrb[0].mxu0
        %v3323 = vadd.f32 %v3010, %v3322
        %v3324 = vpop.f32.mrb[0].mxu0
        %v3325 = vpop.f32.mrb[0].mxu0
        %v3326 = vadd.f32 %v3010, %v3325
        %v3327 = vpop.f32.mrb[0].mxu0
        %3328 = vdwg.mxu0
        %v3329 = vmax.f32 %v3139, 0.0
        %v3330 = vmax.f32 %v3142, 0.0
        %v3331 = vmax.f32 %v3147, 0.0
        %v3332 = vmax.f32 %v3150, 0.0
        %v3333 = vmax.f32 %v3155, 0.0
        %v3334 = vmax.f32 %v3158, 0.0
        %v3335 = vmax.f32 %v3163, 0.0
        %v3336 = vmax.f32 %v3166, 0.0
        %v3337 = vmax.f32 %v3171, 0.0
        %v3338 = vmax.f32 %v3174, 0.0
        %v3339 = vmax.f32 %v3179, 0.0
        %v3340 = vmax.f32 %v3182, 0.0
        %v3341 = vmax.f32 %v3187, 0.0
        %v3342 = vmax.f32 %v3190, 0.0
        %v3343 = vmax.f32 %v3195, 0.0
        %v3344 = vmax.f32 %v3198, 0.0
        %v3345 = vmax.f32 %v3203, 0.0
        %v3346 = vmax.f32 %v3206, 0.0
        %v3347 = vmax.f32 %v3211, 0.0
        %v3348 = vmax.f32 %v3214, 0.0
        %v3349 = vmax.f32 %v3219, 0.0
        %v3350 = vmax.f32 %v3222, 0.0
        %v3351 = vmax.f32 %v3227, 0.0
        %v3352 = vmax.f32 %v3230, 0.0
        %v3353 = vmax.f32 %v3235, 0.0
        %v3354 = vmax.f32 %v3238, 0.0
        %v3355 = vmax.f32 %v3243, 0.0
        %v3356 = vmax.f32 %v3246, 0.0
        %v3357 = vmax.f32 %v3251, 0.0
        %v3358 = vmax.f32 %v3254, 0.0
        %v3359 = vmax.f32 %v3259, 0.0
        %v3360 = vmax.f32 %v3262, 0.0
        %v3361 = vmax.f32 %v3267, 0.0
        %v3362 = vmax.f32 %v3270, 0.0
        %v3363 = vmax.f32 %v3275, 0.0
        %v3364 = vmax.f32 %v3278, 0.0
        %v3365 = vmax.f32 %v3283, 0.0
        %v3366 = vmax.f32 %v3286, 0.0
        %v3367 = vmax.f32 %v3291, 0.0
        %v3368 = vmax.f32 %v3294, 0.0
        %v3369 = vmax.f32 %v3299, 0.0
        %v3370 = vmax.f32 %v3302, 0.0
        %v3371 = vmax.f32 %v3307, 0.0
        %v3372 = vmax.f32 %v3310, 0.0
        %v3373 = vmax.f32 %v3315, 0.0
        %v3374 = vmax.f32 %v3318, 0.0
        %v3375 = vmax.f32 %v3323, 0.0
        %v3376 = vmax.f32 %v3326, 0.0
        %v3377 = vmul.f32 %v3329, %v323
        %v3378 = vmul.f32 %v3330, %v324
        %v3379 = vmul.f32 %v3331, %v325
        %v3380 = vmul.f32 %v3332, %v323
        %v3381 = vmul.f32 %v3333, %v324
        %v3382 = vmul.f32 %v3334, %v325
        %v3383 = vmul.f32 %v3335, %v323
        %v3384 = vmul.f32 %v3336, %v324
        %v3385 = vmul.f32 %v3337, %v325
        %v3386 = vmul.f32 %v3338, %v323
        %v3387 = vmul.f32 %v3339, %v324
        %v3388 = vmul.f32 %v3340, %v325
        %v3389 = vmul.f32 %v3341, %v323
        %v3390 = vmul.f32 %v3342, %v324
        %v3391 = vmul.f32 %v3343, %v325
        %v3392 = vmul.f32 %v3344, %v323
        %v3393 = vmul.f32 %v3345, %v324
        %v3394 = vmul.f32 %v3346, %v325
        %v3395 = vmul.f32 %v3347, %v323
        %v3396 = vmul.f32 %v3348, %v324
        %v3397 = vmul.f32 %v3349, %v325
        %v3398 = vmul.f32 %v3350, %v323
        %v3399 = vmul.f32 %v3351, %v324
        %v3400 = vmul.f32 %v3352, %v325
        %v3401 = vmul.f32 %v3353, %v323
        %v3402 = vmul.f32 %v3354, %v324
        %v3403 = vmul.f32 %v3355, %v325
        %v3404 = vmul.f32 %v3356, %v323
        %v3405 = vmul.f32 %v3357, %v324
        %v3406 = vmul.f32 %v3358, %v325
        %v3407 = vmul.f32 %v3359, %v323
        %v3408 = vmul.f32 %v3360, %v324
        %v3409 = vmul.f32 %v3361, %v325
        %v3410 = vmul.f32 %v3362, %v323
        %v3411 = vmul.f32 %v3363, %v324
        %v3412 = vmul.f32 %v3364, %v325
        %v3413 = vmul.f32 %v3365, %v323
        %v3414 = vmul.f32 %v3366, %v324
        %v3415 = vmul.f32 %v3367, %v325
        %v3416 = vmul.f32 %v3368, %v323
        %v3417 = vmul.f32 %v3369, %v324
        %v3418 = vmul.f32 %v3370, %v325
        %v3419 = vmul.f32 %v3371, %v323
        %v3420 = vmul.f32 %v3372, %v324
        %v3421 = vmul.f32 %v3373, %v325
        %v3422 = vmul.f32 %v3374, %v323
        %v3423 = vmul.f32 %v3375, %v324
        %v3424 = vmul.f32 %v3376, %v325
        %3425 = vst.msk [vmem:[#allocation3] sm:$0xff] %vm2927, 0.0
        %3426 = vst.msk [vmem:[#allocation3 + $0x8] sm:$0xff] %vm2927, 0.0
        %3427 = vst.msk [vmem:[#allocation3 + $0x10] sm:$0xff] %vm2927, 0.0
        %s3428 = scalar_lea.vmem [#allocation3], 408
        %3429 = vst.msk [vmem:[%s3428] sm:$0xff] %vm2927, 0.0
        %3430 = vst.msk [vmem:[%s3428 + $0x8] sm:$0xff] %vm2927, 0.0
        %3431 = vst.msk [vmem:[%s3428 + $0x10] sm:$0xff] %vm2927, 0.0
        %s3432 = scalar_lea.vmem [#allocation3], 24
        %3433 = vst.msk [vmem:[%s3432] sm:$0xff] %vm2927, %v3377
        %3434 = vst.msk [vmem:[%s3432 + $0x8] sm:$0xff] %vm2927, %v3378
        %3435 = vst.msk [vmem:[%s3432 + $0x10] sm:$0xff] %vm2927, %v3379
        %3436 = vst.msk [vmem:[%s3432 + $0x18] sm:$0xff] %vm2927, %v3380
        %3437 = vst.msk [vmem:[%s3432 + $0x20] sm:$0xff] %vm2927, %v3381
        %3438 = vst.msk [vmem:[%s3432 + $0x28] sm:$0xff] %vm2927, %v3382
        %3439 = vst.msk [vmem:[%s3432 + $0x30] sm:$0xff] %vm2927, %v3383
        %3440 = vst.msk [vmem:[%s3432 + $0x38] sm:$0xff] %vm2927, %v3384
        %3441 = vst.msk [vmem:[%s3432 + $0x40] sm:$0xff] %vm2927, %v3385
        %3442 = vst.msk [vmem:[%s3432 + $0x48] sm:$0xff] %vm2927, %v3386
        %3443 = vst.msk [vmem:[%s3432 + $0x50] sm:$0xff] %vm2927, %v3387
        %3444 = vst.msk [vmem:[%s3432 + $0x58] sm:$0xff] %vm2927, %v3388
        %3445 = vst.msk [vmem:[%s3432 + $0x60] sm:$0xff] %vm2927, %v3389
        %3446 = vst.msk [vmem:[%s3432 + $0x68] sm:$0xff] %vm2927, %v3390
        %3447 = vst.msk [vmem:[%s3432 + $0x70] sm:$0xff] %vm2927, %v3391
        %3448 = vst.msk [vmem:[%s3432 + $0x78] sm:$0xff] %vm2927, %v3392
        %3449 = vst.msk [vmem:[%s3432 + $0x80] sm:$0xff] %vm2927, %v3393
        %3450 = vst.msk [vmem:[%s3432 + $0x88] sm:$0xff] %vm2927, %v3394
        %3451 = vst.msk [vmem:[%s3432 + $0x90] sm:$0xff] %vm2927, %v3395
        %3452 = vst.msk [vmem:[%s3432 + $0x98] sm:$0xff] %vm2927, %v3396
        %3453 = vst.msk [vmem:[%s3432 + $0xa0] sm:$0xff] %vm2927, %v3397
        %3454 = vst.msk [vmem:[%s3432 + $0xa8] sm:$0xff] %vm2927, %v3398
        %3455 = vst.msk [vmem:[%s3432 + $0xb0] sm:$0xff] %vm2927, %v3399
        %3456 = vst.msk [vmem:[%s3432 + $0xb8] sm:$0xff] %vm2927, %v3400
        %3457 = vst.msk [vmem:[%s3432 + $0xc0] sm:$0xff] %vm2927, %v3401
        %3458 = vst.msk [vmem:[%s3432 + $0xc8] sm:$0xff] %vm2927, %v3402
        %3459 = vst.msk [vmem:[%s3432 + $0xd0] sm:$0xff] %vm2927, %v3403
        %3460 = vst.msk [vmem:[%s3432 + $0xd8] sm:$0xff] %vm2927, %v3404
        %3461 = vst.msk [vmem:[%s3432 + $0xe0] sm:$0xff] %vm2927, %v3405
        %3462 = vst.msk [vmem:[%s3432 + $0xe8] sm:$0xff] %vm2927, %v3406
        %3463 = vst.msk [vmem:[%s3432 + $0xf0] sm:$0xff] %vm2927, %v3407
        %3464 = vst.msk [vmem:[%s3432 + $0xf8] sm:$0xff] %vm2927, %v3408
        %3465 = vst.msk [vmem:[%s3432 + $0x100] sm:$0xff] %vm2927, %v3409
        %3466 = vst.msk [vmem:[%s3432 + $0x108] sm:$0xff] %vm2927, %v3410
        %3467 = vst.msk [vmem:[%s3432 + $0x110] sm:$0xff] %vm2927, %v3411
        %3468 = vst.msk [vmem:[%s3432 + $0x118] sm:$0xff] %vm2927, %v3412
        %3469 = vst.msk [vmem:[%s3432 + $0x120] sm:$0xff] %vm2927, %v3413
        %3470 = vst.msk [vmem:[%s3432 + $0x128] sm:$0xff] %vm2927, %v3414
        %3471 = vst.msk [vmem:[%s3432 + $0x130] sm:$0xff] %vm2927, %v3415
        %3472 = vst.msk [vmem:[%s3432 + $0x138] sm:$0xff] %vm2927, %v3416
        %3473 = vst.msk [vmem:[%s3432 + $0x140] sm:$0xff] %vm2927, %v3417
        %3474 = vst.msk [vmem:[%s3432 + $0x148] sm:$0xff] %vm2927, %v3418
        %3475 = vst.msk [vmem:[%s3432 + $0x150] sm:$0xff] %vm2927, %v3419
        %3476 = vst.msk [vmem:[%s3432 + $0x158] sm:$0xff] %vm2927, %v3420
        %3477 = vst.msk [vmem:[%s3432 + $0x160] sm:$0xff] %vm2927, %v3421
        %3478 = vst.msk [vmem:[%s3432 + $0x168] sm:$0xff] %vm2927, %v3422
        %3479 = vst.msk [vmem:[%s3432 + $0x170] sm:$0xff] %vm2927, %v3423
        %3480 = vst.msk [vmem:[%s3432 + $0x178] sm:$0xff] %vm2927, %v3424
        %v3481 = vld [vmem:[#allocation3] sm:$0xff]
        %v3482 = vld [vmem:[#allocation3 + $0x8] sm:$0xff]
        %v3483 = vld [vmem:[#allocation3 + $0x10] sm:$0xff]
        %v3484 = vld [vmem:[#allocation3 + $0x18] sm:$0xff]
        %v3485 = vld [vmem:[#allocation3 + $0x20] sm:$0xff]
        %v3486 = vld [vmem:[#allocation3 + $0x28] sm:$0xff]
        %v3487 = vld [vmem:[#allocation3 + $0x30] sm:$0xff]
        %v3488 = vld [vmem:[#allocation3 + $0x38] sm:$0xff]
        %v3489 = vld [vmem:[#allocation3 + $0x40] sm:$0xff]
        %v3490 = vld [vmem:[#allocation3 + $0x48] sm:$0xff]
        %v3491 = vld [vmem:[#allocation3 + $0x50] sm:$0xff]
        %v3492 = vld [vmem:[#allocation3 + $0x58] sm:$0xff]
        %v3493 = vld [vmem:[#allocation3 + $0x60] sm:$0xff]
        %v3494 = vld [vmem:[#allocation3 + $0x68] sm:$0xff]
        %v3495 = vld [vmem:[#allocation3 + $0x70] sm:$0xff]
        %v3496 = vld [vmem:[#allocation3 + $0x78] sm:$0xff]
        %v3497 = vld [vmem:[#allocation3 + $0x80] sm:$0xff]
        %v3498 = vld [vmem:[#allocation3 + $0x88] sm:$0xff]
        %v3499 = vld [vmem:[#allocation3 + $0x90] sm:$0xff]
        %v3500 = vld [vmem:[#allocation3 + $0x98] sm:$0xff]
        %v3501 = vld [vmem:[#allocation3 + $0xa0] sm:$0xff]
        %v3502 = vld [vmem:[#allocation3 + $0xa8] sm:$0xff]
        %v3503 = vld [vmem:[#allocation3 + $0xb0] sm:$0xff]
        %v3504 = vld [vmem:[#allocation3 + $0xb8] sm:$0xff]
        %v3505 = vld [vmem:[#allocation3 + $0xc0] sm:$0xff]
        %v3506 = vld [vmem:[#allocation3 + $0xc8] sm:$0xff]
        %v3507 = vld [vmem:[#allocation3 + $0xd0] sm:$0xff]
        %v3508 = vld [vmem:[#allocation3 + $0xd8] sm:$0xff]
        %v3509 = vld [vmem:[#allocation3 + $0xe0] sm:$0xff]
        %v3510 = vld [vmem:[#allocation3 + $0xe8] sm:$0xff]
        %v3511 = vld [vmem:[#allocation3 + $0xf0] sm:$0xff]
        %v3512 = vld [vmem:[#allocation3 + $0xf8] sm:$0xff]
        %v3513 = vld [vmem:[#allocation3 + $0x100] sm:$0xff]
        %v3514 = vld [vmem:[#allocation3 + $0x108] sm:$0xff]
        %v3515 = vld [vmem:[#allocation3 + $0x110] sm:$0xff]
        %v3516 = vld [vmem:[#allocation3 + $0x118] sm:$0xff]
        %v3517 = vld [vmem:[#allocation3 + $0x120] sm:$0xff]
        %v3518 = vld [vmem:[#allocation3 + $0x128] sm:$0xff]
        %v3519 = vld [vmem:[#allocation3 + $0x130] sm:$0xff]
        %v3520 = vld [vmem:[#allocation3 + $0x138] sm:$0xff]
        %v3521 = vld [vmem:[#allocation3 + $0x140] sm:$0xff]
        %v3522 = vld [vmem:[#allocation3 + $0x148] sm:$0xff]
        %v3523 = vld [vmem:[#allocation3 + $0x150] sm:$0xff]
        %v3524 = vld [vmem:[#allocation3 + $0x158] sm:$0xff]
        %v3525 = vld [vmem:[#allocation3 + $0x160] sm:$0xff]
        %v3526 = vld [vmem:[#allocation3 + $0x168] sm:$0xff]
        %v3527 = vld [vmem:[#allocation3 + $0x170] sm:$0xff]
        %v3528 = vld [vmem:[#allocation3 + $0x178] sm:$0xff]
        %v3529 = vrot.slane %v3481, 7
        %v3530 = vrot.slane %v3484, 7
        %v3531 = vrot.slane %v3487, 7
        %v3532 = vrot.slane %v3490, 7
        %v3533 = vrot.slane %v3493, 7
        %v3534 = vrot.slane %v3496, 7
        %v3535 = vrot.slane %v3499, 7
        %v3536 = vrot.slane %v3502, 7
        %v3537 = vrot.slane %v3505, 7
        %v3538 = vrot.slane %v3508, 7
        %v3539 = vrot.slane %v3511, 7
        %v3540 = vrot.slane %v3514, 7
        %v3541 = vrot.slane %v3517, 7
        %v3542 = vrot.slane %v3520, 7
        %v3543 = vrot.slane %v3523, 7
        %v3544 = vrot.slane %v3526, 7
        %v3545 = vrot.slane %v3482, 7
        %v3546 = vrot.slane %v3485, 7
        %v3547 = vrot.slane %v3488, 7
        %v3548 = vrot.slane %v3491, 7
        %v3549 = vrot.slane %v3494, 7
        %v3550 = vrot.slane %v3497, 7
        %v3551 = vrot.slane %v3500, 7
        %v3552 = vrot.slane %v3503, 7
        %v3553 = vrot.slane %v3506, 7
        %v3554 = vrot.slane %v3509, 7
        %v3555 = vrot.slane %v3512, 7
        %v3556 = vrot.slane %v3515, 7
        %v3557 = vrot.slane %v3518, 7
        %v3558 = vrot.slane %v3521, 7
        %v3559 = vrot.slane %v3524, 7
        %v3560 = vrot.slane %v3527, 7
        %v3561 = vrot.slane %v3483, 7
        %v3562 = vrot.slane %v3486, 7
        %v3563 = vrot.slane %v3489, 7
        %v3564 = vrot.slane %v3492, 7
        %v3565 = vrot.slane %v3495, 7
        %v3566 = vrot.slane %v3498, 7
        %v3567 = vrot.slane %v3501, 7
        %v3568 = vrot.slane %v3504, 7
        %v3569 = vrot.slane %v3507, 7
        %v3570 = vrot.slane %v3510, 7
        %v3571 = vrot.slane %v3513, 7
        %v3572 = vrot.slane %v3516, 7
        %v3573 = vrot.slane %v3519, 7
        %v3574 = vrot.slane %v3522, 7
        %v3575 = vrot.slane %v3525, 7
        %v3576 = vrot.slane %v3528, 7
        %v3577 = vsel %vm422, %v3545, %v3561
        %v3578 = vsel %vm422, %v3546, %v3562
        %v3579 = vsel %vm422, %v3547, %v3563
        %v3580 = vsel %vm422, %v3548, %v3564
        %v3581 = vsel %vm422, %v3549, %v3565
        %v3582 = vsel %vm422, %v3550, %v3566
        %v3583 = vsel %vm422, %v3551, %v3567
        %v3584 = vsel %vm422, %v3552, %v3568
        %v3585 = vsel %vm422, %v3553, %v3569
        %v3586 = vsel %vm422, %v3554, %v3570
        %v3587 = vsel %vm422, %v3555, %v3571
        %v3588 = vsel %vm422, %v3556, %v3572
        %v3589 = vsel %vm422, %v3557, %v3573
        %v3590 = vsel %vm422, %v3558, %v3574
        %v3591 = vsel %vm422, %v3559, %v3575
        %v3592 = vsel %vm422, %v3560, %v3576
        %v3593 = vsel %vm422, %v3529, %v3545
        %v3594 = vsel %vm422, %v3530, %v3546
        %v3595 = vsel %vm422, %v3531, %v3547
        %v3596 = vsel %vm422, %v3532, %v3548
        %v3597 = vsel %vm422, %v3533, %v3549
        %v3598 = vsel %vm422, %v3534, %v3550
        %v3599 = vsel %vm422, %v3535, %v3551
        %v3600 = vsel %vm422, %v3536, %v3552
        %v3601 = vsel %vm422, %v3537, %v3553
        %v3602 = vsel %vm422, %v3538, %v3554
        %v3603 = vsel %vm422, %v3539, %v3555
        %v3604 = vsel %vm422, %v3540, %v3556
        %v3605 = vsel %vm422, %v3541, %v3557
        %v3606 = vsel %vm422, %v3542, %v3558
        %v3607 = vsel %vm422, %v3543, %v3559
        %v3608 = vsel %vm422, %v3544, %v3560
        %v3609 = vsel %vm422, %v3561, %v3529
        %v3610 = vsel %vm422, %v3562, %v3530
        %v3611 = vsel %vm422, %v3563, %v3531
        %v3612 = vsel %vm422, %v3564, %v3532
        %v3613 = vsel %vm422, %v3565, %v3533
        %v3614 = vsel %vm422, %v3566, %v3534
        %v3615 = vsel %vm422, %v3567, %v3535
        %v3616 = vsel %vm422, %v3568, %v3536
        %v3617 = vsel %vm422, %v3569, %v3537
        %v3618 = vsel %vm422, %v3570, %v3538
        %v3619 = vsel %vm422, %v3571, %v3539
        %v3620 = vsel %vm422, %v3572, %v3540
        %v3621 = vsel %vm422, %v3573, %v3541
        %v3622 = vsel %vm422, %v3574, %v3542
        %v3623 = vsel %vm422, %v3575, %v3543
        %v3624 = vsel %vm422, %v3576, %v3544
        %v3625 = vrot.slane %v3481, 1
        %v3626 = vrot.slane %v3484, 1
        %v3627 = vrot.slane %v3487, 1
        %v3628 = vrot.slane %v3490, 1
        %v3629 = vrot.slane %v3493, 1
        %v3630 = vrot.slane %v3496, 1
        %v3631 = vrot.slane %v3499, 1
        %v3632 = vrot.slane %v3502, 1
        %v3633 = vrot.slane %v3505, 1
        %v3634 = vrot.slane %v3508, 1
        %v3635 = vrot.slane %v3511, 1
        %v3636 = vrot.slane %v3514, 1
        %v3637 = vrot.slane %v3517, 1
        %v3638 = vrot.slane %v3520, 1
        %v3639 = vrot.slane %v3523, 1
        %v3640 = vrot.slane %v3526, 1
        %v3641 = vrot.slane %v3482, 1
        %v3642 = vrot.slane %v3485, 1
        %v3643 = vrot.slane %v3488, 1
        %v3644 = vrot.slane %v3491, 1
        %v3645 = vrot.slane %v3494, 1
        %v3646 = vrot.slane %v3497, 1
        %v3647 = vrot.slane %v3500, 1
        %v3648 = vrot.slane %v3503, 1
        %v3649 = vrot.slane %v3506, 1
        %v3650 = vrot.slane %v3509, 1
        %v3651 = vrot.slane %v3512, 1
        %v3652 = vrot.slane %v3515, 1
        %v3653 = vrot.slane %v3518, 1
        %v3654 = vrot.slane %v3521, 1
        %v3655 = vrot.slane %v3524, 1
        %v3656 = vrot.slane %v3527, 1
        %v3657 = vrot.slane %v3483, 1
        %v3658 = vrot.slane %v3486, 1
        %v3659 = vrot.slane %v3489, 1
        %v3660 = vrot.slane %v3492, 1
        %v3661 = vrot.slane %v3495, 1
        %v3662 = vrot.slane %v3498, 1
        %v3663 = vrot.slane %v3501, 1
        %v3664 = vrot.slane %v3504, 1
        %v3665 = vrot.slane %v3507, 1
        %v3666 = vrot.slane %v3510, 1
        %v3667 = vrot.slane %v3513, 1
        %v3668 = vrot.slane %v3516, 1
        %v3669 = vrot.slane %v3519, 1
        %v3670 = vrot.slane %v3522, 1
        %v3671 = vrot.slane %v3525, 1
        %v3672 = vrot.slane %v3528, 1
        %v3673 = vsel %vm519, %v3641, %v3657
        %v3674 = vsel %vm519, %v3642, %v3658
        %v3675 = vsel %vm519, %v3643, %v3659
        %v3676 = vsel %vm519, %v3644, %v3660
        %v3677 = vsel %vm519, %v3645, %v3661
        %v3678 = vsel %vm519, %v3646, %v3662
        %v3679 = vsel %vm519, %v3647, %v3663
        %v3680 = vsel %vm519, %v3648, %v3664
        %v3681 = vsel %vm519, %v3649, %v3665
        %v3682 = vsel %vm519, %v3650, %v3666
        %v3683 = vsel %vm519, %v3651, %v3667
        %v3684 = vsel %vm519, %v3652, %v3668
        %v3685 = vsel %vm519, %v3653, %v3669
        %v3686 = vsel %vm519, %v3654, %v3670
        %v3687 = vsel %vm519, %v3655, %v3671
        %v3688 = vsel %vm519, %v3656, %v3672
        %v3689 = vsel %vm519, %v3625, %v3641
        %v3690 = vsel %vm519, %v3626, %v3642
        %v3691 = vsel %vm519, %v3627, %v3643
        %v3692 = vsel %vm519, %v3628, %v3644
        %v3693 = vsel %vm519, %v3629, %v3645
        %v3694 = vsel %vm519, %v3630, %v3646
        %v3695 = vsel %vm519, %v3631, %v3647
        %v3696 = vsel %vm519, %v3632, %v3648
        %v3697 = vsel %vm519, %v3633, %v3649
        %v3698 = vsel %vm519, %v3634, %v3650
        %v3699 = vsel %vm519, %v3635, %v3651
        %v3700 = vsel %vm519, %v3636, %v3652
        %v3701 = vsel %vm519, %v3637, %v3653
        %v3702 = vsel %vm519, %v3638, %v3654
        %v3703 = vsel %vm519, %v3639, %v3655
        %v3704 = vsel %vm519, %v3640, %v3656
        %v3705 = vsel %vm519, %v3657, %v3625
        %v3706 = vsel %vm519, %v3658, %v3626
        %v3707 = vsel %vm519, %v3659, %v3627
        %v3708 = vsel %vm519, %v3660, %v3628
        %v3709 = vsel %vm519, %v3661, %v3629
        %v3710 = vsel %vm519, %v3662, %v3630
        %v3711 = vsel %vm519, %v3663, %v3631
        %v3712 = vsel %vm519, %v3664, %v3632
        %v3713 = vsel %vm519, %v3665, %v3633
        %v3714 = vsel %vm519, %v3666, %v3634
        %v3715 = vsel %vm519, %v3667, %v3635
        %v3716 = vsel %vm519, %v3668, %v3636
        %v3717 = vsel %vm519, %v3669, %v3637
        %v3718 = vsel %vm519, %v3670, %v3638
        %v3719 = vsel %vm519, %v3671, %v3639
        %v3720 = vsel %vm519, %v3672, %v3640
        %v3721 = vld [vmem:[%s3432] sm:$0xff]
        %v3722 = vld [vmem:[%s3432 + $0x8] sm:$0xff]
        %v3723 = vld [vmem:[%s3432 + $0x10] sm:$0xff]
        %v3724 = vld [vmem:[%s3432 + $0x18] sm:$0xff]
        %v3725 = vld [vmem:[%s3432 + $0x20] sm:$0xff]
        %v3726 = vld [vmem:[%s3432 + $0x28] sm:$0xff]
        %v3727 = vld [vmem:[%s3432 + $0x30] sm:$0xff]
        %v3728 = vld [vmem:[%s3432 + $0x38] sm:$0xff]
        %v3729 = vld [vmem:[%s3432 + $0x40] sm:$0xff]
        %v3730 = vld [vmem:[%s3432 + $0x48] sm:$0xff]
        %v3731 = vld [vmem:[%s3432 + $0x50] sm:$0xff]
        %v3732 = vld [vmem:[%s3432 + $0x58] sm:$0xff]
        %v3733 = vld [vmem:[%s3432 + $0x60] sm:$0xff]
        %v3734 = vld [vmem:[%s3432 + $0x68] sm:$0xff]
        %v3735 = vld [vmem:[%s3432 + $0x70] sm:$0xff]
        %v3736 = vld [vmem:[%s3432 + $0x78] sm:$0xff]
        %v3737 = vld [vmem:[%s3432 + $0x80] sm:$0xff]
        %v3738 = vld [vmem:[%s3432 + $0x88] sm:$0xff]
        %v3739 = vld [vmem:[%s3432 + $0x90] sm:$0xff]
        %v3740 = vld [vmem:[%s3432 + $0x98] sm:$0xff]
        %v3741 = vld [vmem:[%s3432 + $0xa0] sm:$0xff]
        %v3742 = vld [vmem:[%s3432 + $0xa8] sm:$0xff]
        %v3743 = vld [vmem:[%s3432 + $0xb0] sm:$0xff]
        %v3744 = vld [vmem:[%s3432 + $0xb8] sm:$0xff]
        %v3745 = vld [vmem:[%s3432 + $0xc0] sm:$0xff]
        %v3746 = vld [vmem:[%s3432 + $0xc8] sm:$0xff]
        %v3747 = vld [vmem:[%s3432 + $0xd0] sm:$0xff]
        %v3748 = vld [vmem:[%s3432 + $0xd8] sm:$0xff]
        %v3749 = vld [vmem:[%s3432 + $0xe0] sm:$0xff]
        %v3750 = vld [vmem:[%s3432 + $0xe8] sm:$0xff]
        %v3751 = vld [vmem:[%s3432 + $0xf0] sm:$0xff]
        %v3752 = vld [vmem:[%s3432 + $0xf8] sm:$0xff]
        %v3753 = vld [vmem:[%s3432 + $0x100] sm:$0xff]
        %v3754 = vld [vmem:[%s3432 + $0x108] sm:$0xff]
        %v3755 = vld [vmem:[%s3432 + $0x110] sm:$0xff]
        %v3756 = vld [vmem:[%s3432 + $0x118] sm:$0xff]
        %v3757 = vld [vmem:[%s3432 + $0x120] sm:$0xff]
        %v3758 = vld [vmem:[%s3432 + $0x128] sm:$0xff]
        %v3759 = vld [vmem:[%s3432 + $0x130] sm:$0xff]
        %v3760 = vld [vmem:[%s3432 + $0x138] sm:$0xff]
        %v3761 = vld [vmem:[%s3432 + $0x140] sm:$0xff]
        %v3762 = vld [vmem:[%s3432 + $0x148] sm:$0xff]
        %v3763 = vld [vmem:[%s3432 + $0x150] sm:$0xff]
        %v3764 = vld [vmem:[%s3432 + $0x158] sm:$0xff]
        %v3765 = vld [vmem:[%s3432 + $0x160] sm:$0xff]
        %v3766 = vld [vmem:[%s3432 + $0x168] sm:$0xff]
        %v3767 = vld [vmem:[%s3432 + $0x170] sm:$0xff]
        %v3768 = vld [vmem:[%s3432 + $0x178] sm:$0xff]
        %v3769 = vrot.slane %v3721, 7
        %v3770 = vrot.slane %v3724, 7
        %v3771 = vrot.slane %v3727, 7
        %v3772 = vrot.slane %v3730, 7
        %v3773 = vrot.slane %v3733, 7
        %v3774 = vrot.slane %v3736, 7
        %v3775 = vrot.slane %v3739, 7
        %v3776 = vrot.slane %v3742, 7
        %v3777 = vrot.slane %v3745, 7
        %v3778 = vrot.slane %v3748, 7
        %v3779 = vrot.slane %v3751, 7
        %v3780 = vrot.slane %v3754, 7
        %v3781 = vrot.slane %v3757, 7
        %v3782 = vrot.slane %v3760, 7
        %v3783 = vrot.slane %v3763, 7
        %v3784 = vrot.slane %v3766, 7
        %v3785 = vrot.slane %v3722, 7
        %v3786 = vrot.slane %v3725, 7
        %v3787 = vrot.slane %v3728, 7
        %v3788 = vrot.slane %v3731, 7
        %v3789 = vrot.slane %v3734, 7
        %v3790 = vrot.slane %v3737, 7
        %v3791 = vrot.slane %v3740, 7
        %v3792 = vrot.slane %v3743, 7
        %v3793 = vrot.slane %v3746, 7
        %v3794 = vrot.slane %v3749, 7
        %v3795 = vrot.slane %v3752, 7
        %v3796 = vrot.slane %v3755, 7
        %v3797 = vrot.slane %v3758, 7
        %v3798 = vrot.slane %v3761, 7
        %v3799 = vrot.slane %v3764, 7
        %v3800 = vrot.slane %v3767, 7
        %v3801 = vrot.slane %v3723, 7
        %v3802 = vrot.slane %v3726, 7
        %v3803 = vrot.slane %v3729, 7
        %v3804 = vrot.slane %v3732, 7
        %v3805 = vrot.slane %v3735, 7
        %v3806 = vrot.slane %v3738, 7
        %v3807 = vrot.slane %v3741, 7
        %v3808 = vrot.slane %v3744, 7
        %v3809 = vrot.slane %v3747, 7
        %v3810 = vrot.slane %v3750, 7
        %v3811 = vrot.slane %v3753, 7
        %v3812 = vrot.slane %v3756, 7
        %v3813 = vrot.slane %v3759, 7
        %v3814 = vrot.slane %v3762, 7
        %v3815 = vrot.slane %v3765, 7
        %v3816 = vrot.slane %v3768, 7
        %v3817 = vsel %vm422, %v3785, %v3801
        %v3818 = vsel %vm422, %v3786, %v3802
        %v3819 = vsel %vm422, %v3787, %v3803
        %v3820 = vsel %vm422, %v3788, %v3804
        %v3821 = vsel %vm422, %v3789, %v3805
        %v3822 = vsel %vm422, %v3790, %v3806
        %v3823 = vsel %vm422, %v3791, %v3807
        %v3824 = vsel %vm422, %v3792, %v3808
        %v3825 = vsel %vm422, %v3793, %v3809
        %v3826 = vsel %vm422, %v3794, %v3810
        %v3827 = vsel %vm422, %v3795, %v3811
        %v3828 = vsel %vm422, %v3796, %v3812
        %v3829 = vsel %vm422, %v3797, %v3813
        %v3830 = vsel %vm422, %v3798, %v3814
        %v3831 = vsel %vm422, %v3799, %v3815
        %v3832 = vsel %vm422, %v3800, %v3816
        %v3833 = vsel %vm422, %v3769, %v3785
        %v3834 = vsel %vm422, %v3770, %v3786
        %v3835 = vsel %vm422, %v3771, %v3787
        %v3836 = vsel %vm422, %v3772, %v3788
        %v3837 = vsel %vm422, %v3773, %v3789
        %v3838 = vsel %vm422, %v3774, %v3790
        %v3839 = vsel %vm422, %v3775, %v3791
        %v3840 = vsel %vm422, %v3776, %v3792
        %v3841 = vsel %vm422, %v3777, %v3793
        %v3842 = vsel %vm422, %v3778, %v3794
        %v3843 = vsel %vm422, %v3779, %v3795
        %v3844 = vsel %vm422, %v3780, %v3796
        %v3845 = vsel %vm422, %v3781, %v3797
        %v3846 = vsel %vm422, %v3782, %v3798
        %v3847 = vsel %vm422, %v3783, %v3799
        %v3848 = vsel %vm422, %v3784, %v3800
        %v3849 = vsel %vm422, %v3801, %v3769
        %v3850 = vsel %vm422, %v3802, %v3770
        %v3851 = vsel %vm422, %v3803, %v3771
        %v3852 = vsel %vm422, %v3804, %v3772
        %v3853 = vsel %vm422, %v3805, %v3773
        %v3854 = vsel %vm422, %v3806, %v3774
        %v3855 = vsel %vm422, %v3807, %v3775
        %v3856 = vsel %vm422, %v3808, %v3776
        %v3857 = vsel %vm422, %v3809, %v3777
        %v3858 = vsel %vm422, %v3810, %v3778
        %v3859 = vsel %vm422, %v3811, %v3779
        %v3860 = vsel %vm422, %v3812, %v3780
        %v3861 = vsel %vm422, %v3813, %v3781
        %v3862 = vsel %vm422, %v3814, %v3782
        %v3863 = vsel %vm422, %v3815, %v3783
        %v3864 = vsel %vm422, %v3816, %v3784
        %v3865 = vrot.slane %v3721, 1
        %v3866 = vrot.slane %v3724, 1
        %v3867 = vrot.slane %v3727, 1
        %v3868 = vrot.slane %v3730, 1
        %v3869 = vrot.slane %v3733, 1
        %v3870 = vrot.slane %v3736, 1
        %v3871 = vrot.slane %v3739, 1
        %v3872 = vrot.slane %v3742, 1
        %v3873 = vrot.slane %v3745, 1
        %v3874 = vrot.slane %v3748, 1
        %v3875 = vrot.slane %v3751, 1
        %v3876 = vrot.slane %v3754, 1
        %v3877 = vrot.slane %v3757, 1
        %v3878 = vrot.slane %v3760, 1
        %v3879 = vrot.slane %v3763, 1
        %v3880 = vrot.slane %v3766, 1
        %v3881 = vrot.slane %v3722, 1
        %v3882 = vrot.slane %v3725, 1
        %v3883 = vrot.slane %v3728, 1
        %v3884 = vrot.slane %v3731, 1
        %v3885 = vrot.slane %v3734, 1
        %v3886 = vrot.slane %v3737, 1
        %v3887 = vrot.slane %v3740, 1
        %v3888 = vrot.slane %v3743, 1
        %v3889 = vrot.slane %v3746, 1
        %v3890 = vrot.slane %v3749, 1
        %v3891 = vrot.slane %v3752, 1
        %v3892 = vrot.slane %v3755, 1
        %v3893 = vrot.slane %v3758, 1
        %v3894 = vrot.slane %v3761, 1
        %v3895 = vrot.slane %v3764, 1
        %v3896 = vrot.slane %v3767, 1
        %v3897 = vrot.slane %v3723, 1
        %v3898 = vrot.slane %v3726, 1
        %v3899 = vrot.slane %v3729, 1
        %v3900 = vrot.slane %v3732, 1
        %v3901 = vrot.slane %v3735, 1
        %v3902 = vrot.slane %v3738, 1
        %v3903 = vrot.slane %v3741, 1
        %v3904 = vrot.slane %v3744, 1
        %v3905 = vrot.slane %v3747, 1
        %v3906 = vrot.slane %v3750, 1
        %v3907 = vrot.slane %v3753, 1
        %v3908 = vrot.slane %v3756, 1
        %v3909 = vrot.slane %v3759, 1
        %v3910 = vrot.slane %v3762, 1
        %v3911 = vrot.slane %v3765, 1
        %v3912 = vrot.slane %v3768, 1
        %v3913 = vsel %vm519, %v3881, %v3897
        %v3914 = vsel %vm519, %v3882, %v3898
        %v3915 = vsel %vm519, %v3883, %v3899
        %v3916 = vsel %vm519, %v3884, %v3900
        %v3917 = vsel %vm519, %v3885, %v3901
        %v3918 = vsel %vm519, %v3886, %v3902
        %v3919 = vsel %vm519, %v3887, %v3903
        %v3920 = vsel %vm519, %v3888, %v3904
        %v3921 = vsel %vm519, %v3889, %v3905
        %v3922 = vsel %vm519, %v3890, %v3906
        %v3923 = vsel %vm519, %v3891, %v3907
        %v3924 = vsel %vm519, %v3892, %v3908
        %v3925 = vsel %vm519, %v3893, %v3909
        %v3926 = vsel %vm519, %v3894, %v3910
        %v3927 = vsel %vm519, %v3895, %v3911
        %v3928 = vsel %vm519, %v3896, %v3912
        %v3929 = vsel %vm519, %v3865, %v3881
        %v3930 = vsel %vm519, %v3866, %v3882
        %v3931 = vsel %vm519, %v3867, %v3883
        %v3932 = vsel %vm519, %v3868, %v3884
        %v3933 = vsel %vm519, %v3869, %v3885
        %v3934 = vsel %vm519, %v3870, %v3886
        %v3935 = vsel %vm519, %v3871, %v3887
        %v3936 = vsel %vm519, %v3872, %v3888
        %v3937 = vsel %vm519, %v3873, %v3889
        %v3938 = vsel %vm519, %v3874, %v3890
        %v3939 = vsel %vm519, %v3875, %v3891
        %v3940 = vsel %vm519, %v3876, %v3892
        %v3941 = vsel %vm519, %v3877, %v3893
        %v3942 = vsel %vm519, %v3878, %v3894
        %v3943 = vsel %vm519, %v3879, %v3895
        %v3944 = vsel %vm519, %v3880, %v3896
        %v3945 = vsel %vm519, %v3897, %v3865
        %v3946 = vsel %vm519, %v3898, %v3866
        %v3947 = vsel %vm519, %v3899, %v3867
        %v3948 = vsel %vm519, %v3900, %v3868
        %v3949 = vsel %vm519, %v3901, %v3869
        %v3950 = vsel %vm519, %v3902, %v3870
        %v3951 = vsel %vm519, %v3903, %v3871
        %v3952 = vsel %vm519, %v3904, %v3872
        %v3953 = vsel %vm519, %v3905, %v3873
        %v3954 = vsel %vm519, %v3906, %v3874
        %v3955 = vsel %vm519, %v3907, %v3875
        %v3956 = vsel %vm519, %v3908, %v3876
        %v3957 = vsel %vm519, %v3909, %v3877
        %v3958 = vsel %vm519, %v3910, %v3878
        %v3959 = vsel %vm519, %v3911, %v3879
        %v3960 = vsel %vm519, %v3912, %v3880
        %s3961 = scalar_lea.vmem [#allocation3], 48
        %v3962 = vld [vmem:[%s3961] sm:$0xff]
        %v3963 = vld [vmem:[%s3961 + $0x8] sm:$0xff]
        %v3964 = vld [vmem:[%s3961 + $0x10] sm:$0xff]
        %v3965 = vld [vmem:[%s3961 + $0x18] sm:$0xff]
        %v3966 = vld [vmem:[%s3961 + $0x20] sm:$0xff]
        %v3967 = vld [vmem:[%s3961 + $0x28] sm:$0xff]
        %v3968 = vld [vmem:[%s3961 + $0x30] sm:$0xff]
        %v3969 = vld [vmem:[%s3961 + $0x38] sm:$0xff]
        %v3970 = vld [vmem:[%s3961 + $0x40] sm:$0xff]
        %v3971 = vld [vmem:[%s3961 + $0x48] sm:$0xff]
        %v3972 = vld [vmem:[%s3961 + $0x50] sm:$0xff]
        %v3973 = vld [vmem:[%s3961 + $0x58] sm:$0xff]
        %v3974 = vld [vmem:[%s3961 + $0x60] sm:$0xff]
        %v3975 = vld [vmem:[%s3961 + $0x68] sm:$0xff]
        %v3976 = vld [vmem:[%s3961 + $0x70] sm:$0xff]
        %v3977 = vld [vmem:[%s3961 + $0x78] sm:$0xff]
        %v3978 = vld [vmem:[%s3961 + $0x80] sm:$0xff]
        %v3979 = vld [vmem:[%s3961 + $0x88] sm:$0xff]
        %v3980 = vld [vmem:[%s3961 + $0x90] sm:$0xff]
        %v3981 = vld [vmem:[%s3961 + $0x98] sm:$0xff]
        %v3982 = vld [vmem:[%s3961 + $0xa0] sm:$0xff]
        %v3983 = vld [vmem:[%s3961 + $0xa8] sm:$0xff]
        %v3984 = vld [vmem:[%s3961 + $0xb0] sm:$0xff]
        %v3985 = vld [vmem:[%s3961 + $0xb8] sm:$0xff]
        %v3986 = vld [vmem:[%s3961 + $0xc0] sm:$0xff]
        %v3987 = vld [vmem:[%s3961 + $0xc8] sm:$0xff]
        %v3988 = vld [vmem:[%s3961 + $0xd0] sm:$0xff]
        %v3989 = vld [vmem:[%s3961 + $0xd8] sm:$0xff]
        %v3990 = vld [vmem:[%s3961 + $0xe0] sm:$0xff]
        %v3991 = vld [vmem:[%s3961 + $0xe8] sm:$0xff]
        %v3992 = vld [vmem:[%s3961 + $0xf0] sm:$0xff]
        %v3993 = vld [vmem:[%s3961 + $0xf8] sm:$0xff]
        %v3994 = vld [vmem:[%s3961 + $0x100] sm:$0xff]
        %v3995 = vld [vmem:[%s3961 + $0x108] sm:$0xff]
        %v3996 = vld [vmem:[%s3961 + $0x110] sm:$0xff]
        %v3997 = vld [vmem:[%s3961 + $0x118] sm:$0xff]
        %v3998 = vld [vmem:[%s3961 + $0x120] sm:$0xff]
        %v3999 = vld [vmem:[%s3961 + $0x128] sm:$0xff]
        %v4000 = vld [vmem:[%s3961 + $0x130] sm:$0xff]
        %v4001 = vld [vmem:[%s3961 + $0x138] sm:$0xff]
        %v4002 = vld [vmem:[%s3961 + $0x140] sm:$0xff]
        %v4003 = vld [vmem:[%s3961 + $0x148] sm:$0xff]
        %v4004 = vld [vmem:[%s3961 + $0x150] sm:$0xff]
        %v4005 = vld [vmem:[%s3961 + $0x158] sm:$0xff]
        %v4006 = vld [vmem:[%s3961 + $0x160] sm:$0xff]
        %v4007 = vld [vmem:[%s3961 + $0x168] sm:$0xff]
        %v4008 = vld [vmem:[%s3961 + $0x170] sm:$0xff]
        %v4009 = vld [vmem:[%s3961 + $0x178] sm:$0xff]
        %v4010 = vrot.slane %v3962, 7
        %v4011 = vrot.slane %v3965, 7
        %v4012 = vrot.slane %v3968, 7
        %v4013 = vrot.slane %v3971, 7
        %v4014 = vrot.slane %v3974, 7
        %v4015 = vrot.slane %v3977, 7
        %v4016 = vrot.slane %v3980, 7
        %v4017 = vrot.slane %v3983, 7
        %v4018 = vrot.slane %v3986, 7
        %v4019 = vrot.slane %v3989, 7
        %v4020 = vrot.slane %v3992, 7
        %v4021 = vrot.slane %v3995, 7
        %v4022 = vrot.slane %v3998, 7
        %v4023 = vrot.slane %v4001, 7
        %v4024 = vrot.slane %v4004, 7
        %v4025 = vrot.slane %v4007, 7
        %v4026 = vrot.slane %v3963, 7
        %v4027 = vrot.slane %v3966, 7
        %v4028 = vrot.slane %v3969, 7
        %v4029 = vrot.slane %v3972, 7
        %v4030 = vrot.slane %v3975, 7
        %v4031 = vrot.slane %v3978, 7
        %v4032 = vrot.slane %v3981, 7
        %v4033 = vrot.slane %v3984, 7
        %v4034 = vrot.slane %v3987, 7
        %v4035 = vrot.slane %v3990, 7
        %v4036 = vrot.slane %v3993, 7
        %v4037 = vrot.slane %v3996, 7
        %v4038 = vrot.slane %v3999, 7
        %v4039 = vrot.slane %v4002, 7
        %v4040 = vrot.slane %v4005, 7
        %v4041 = vrot.slane %v4008, 7
        %v4042 = vrot.slane %v3964, 7
        %v4043 = vrot.slane %v3967, 7
        %v4044 = vrot.slane %v3970, 7
        %v4045 = vrot.slane %v3973, 7
        %v4046 = vrot.slane %v3976, 7
        %v4047 = vrot.slane %v3979, 7
        %v4048 = vrot.slane %v3982, 7
        %v4049 = vrot.slane %v3985, 7
        %v4050 = vrot.slane %v3988, 7
        %v4051 = vrot.slane %v3991, 7
        %v4052 = vrot.slane %v3994, 7
        %v4053 = vrot.slane %v3997, 7
        %v4054 = vrot.slane %v4000, 7
        %v4055 = vrot.slane %v4003, 7
        %v4056 = vrot.slane %v4006, 7
        %v4057 = vrot.slane %v4009, 7
        %v4058 = vsel %vm422, %v4026, %v4042
        %v4059 = vsel %vm422, %v4027, %v4043
        %v4060 = vsel %vm422, %v4028, %v4044
        %v4061 = vsel %vm422, %v4029, %v4045
        %v4062 = vsel %vm422, %v4030, %v4046
        %v4063 = vsel %vm422, %v4031, %v4047
        %v4064 = vsel %vm422, %v4032, %v4048
        %v4065 = vsel %vm422, %v4033, %v4049
        %v4066 = vsel %vm422, %v4034, %v4050
        %v4067 = vsel %vm422, %v4035, %v4051
        %v4068 = vsel %vm422, %v4036, %v4052
        %v4069 = vsel %vm422, %v4037, %v4053
        %v4070 = vsel %vm422, %v4038, %v4054
        %v4071 = vsel %vm422, %v4039, %v4055
        %v4072 = vsel %vm422, %v4040, %v4056
        %v4073 = vsel %vm422, %v4041, %v4057
        %v4074 = vsel %vm422, %v4010, %v4026
        %v4075 = vsel %vm422, %v4011, %v4027
        %v4076 = vsel %vm422, %v4012, %v4028
        %v4077 = vsel %vm422, %v4013, %v4029
        %v4078 = vsel %vm422, %v4014, %v4030
        %v4079 = vsel %vm422, %v4015, %v4031
        %v4080 = vsel %vm422, %v4016, %v4032
        %v4081 = vsel %vm422, %v4017, %v4033
        %v4082 = vsel %vm422, %v4018, %v4034
        %v4083 = vsel %vm422, %v4019, %v4035
        %v4084 = vsel %vm422, %v4020, %v4036
        %v4085 = vsel %vm422, %v4021, %v4037
        %v4086 = vsel %vm422, %v4022, %v4038
        %v4087 = vsel %vm422, %v4023, %v4039
        %v4088 = vsel %vm422, %v4024, %v4040
        %v4089 = vsel %vm422, %v4025, %v4041
        %v4090 = vsel %vm422, %v4042, %v4010
        %v4091 = vsel %vm422, %v4043, %v4011
        %v4092 = vsel %vm422, %v4044, %v4012
        %v4093 = vsel %vm422, %v4045, %v4013
        %v4094 = vsel %vm422, %v4046, %v4014
        %v4095 = vsel %vm422, %v4047, %v4015
        %v4096 = vsel %vm422, %v4048, %v4016
        %v4097 = vsel %vm422, %v4049, %v4017
        %v4098 = vsel %vm422, %v4050, %v4018
        %v4099 = vsel %vm422, %v4051, %v4019
        %v4100 = vsel %vm422, %v4052, %v4020
        %v4101 = vsel %vm422, %v4053, %v4021
        %v4102 = vsel %vm422, %v4054, %v4022
        %v4103 = vsel %vm422, %v4055, %v4023
        %v4104 = vsel %vm422, %v4056, %v4024
        %v4105 = vsel %vm422, %v4057, %v4025
        %v4106 = vrot.slane %v3962, 1
        %v4107 = vrot.slane %v3965, 1
        %v4108 = vrot.slane %v3968, 1
        %v4109 = vrot.slane %v3971, 1
        %v4110 = vrot.slane %v3974, 1
        %v4111 = vrot.slane %v3977, 1
        %v4112 = vrot.slane %v3980, 1
        %v4113 = vrot.slane %v3983, 1
        %v4114 = vrot.slane %v3986, 1
        %v4115 = vrot.slane %v3989, 1
        %v4116 = vrot.slane %v3992, 1
        %v4117 = vrot.slane %v3995, 1
        %v4118 = vrot.slane %v3998, 1
        %v4119 = vrot.slane %v4001, 1
        %v4120 = vrot.slane %v4004, 1
        %v4121 = vrot.slane %v4007, 1
        %v4122 = vrot.slane %v3963, 1
        %v4123 = vrot.slane %v3966, 1
        %v4124 = vrot.slane %v3969, 1
        %v4125 = vrot.slane %v3972, 1
        %v4126 = vrot.slane %v3975, 1
        %v4127 = vrot.slane %v3978, 1
        %v4128 = vrot.slane %v3981, 1
        %v4129 = vrot.slane %v3984, 1
        %v4130 = vrot.slane %v3987, 1
        %v4131 = vrot.slane %v3990, 1
        %v4132 = vrot.slane %v3993, 1
        %v4133 = vrot.slane %v3996, 1
        %v4134 = vrot.slane %v3999, 1
        %v4135 = vrot.slane %v4002, 1
        %v4136 = vrot.slane %v4005, 1
        %v4137 = vrot.slane %v4008, 1
        %v4138 = vrot.slane %v3964, 1
        %v4139 = vrot.slane %v3967, 1
        %v4140 = vrot.slane %v3970, 1
        %v4141 = vrot.slane %v3973, 1
        %v4142 = vrot.slane %v3976, 1
        %v4143 = vrot.slane %v3979, 1
        %v4144 = vrot.slane %v3982, 1
        %v4145 = vrot.slane %v3985, 1
        %v4146 = vrot.slane %v3988, 1
        %v4147 = vrot.slane %v3991, 1
        %v4148 = vrot.slane %v3994, 1
        %v4149 = vrot.slane %v3997, 1
        %v4150 = vrot.slane %v4000, 1
        %v4151 = vrot.slane %v4003, 1
        %v4152 = vrot.slane %v4006, 1
        %v4153 = vrot.slane %v4009, 1
        %v4154 = vsel %vm519, %v4122, %v4138
        %v4155 = vsel %vm519, %v4123, %v4139
        %v4156 = vsel %vm519, %v4124, %v4140
        %v4157 = vsel %vm519, %v4125, %v4141
        %v4158 = vsel %vm519, %v4126, %v4142
        %v4159 = vsel %vm519, %v4127, %v4143
        %v4160 = vsel %vm519, %v4128, %v4144
        %v4161 = vsel %vm519, %v4129, %v4145
        %v4162 = vsel %vm519, %v4130, %v4146
        %v4163 = vsel %vm519, %v4131, %v4147
        %v4164 = vsel %vm519, %v4132, %v4148
        %v4165 = vsel %vm519, %v4133, %v4149
        %v4166 = vsel %vm519, %v4134, %v4150
        %v4167 = vsel %vm519, %v4135, %v4151
        %v4168 = vsel %vm519, %v4136, %v4152
        %v4169 = vsel %vm519, %v4137, %v4153
        %v4170 = vsel %vm519, %v4106, %v4122
        %v4171 = vsel %vm519, %v4107, %v4123
        %v4172 = vsel %vm519, %v4108, %v4124
        %v4173 = vsel %vm519, %v4109, %v4125
        %v4174 = vsel %vm519, %v4110, %v4126
        %v4175 = vsel %vm519, %v4111, %v4127
        %v4176 = vsel %vm519, %v4112, %v4128
        %v4177 = vsel %vm519, %v4113, %v4129
        %v4178 = vsel %vm519, %v4114, %v4130
        %v4179 = vsel %vm519, %v4115, %v4131
        %v4180 = vsel %vm519, %v4116, %v4132
        %v4181 = vsel %vm519, %v4117, %v4133
        %v4182 = vsel %vm519, %v4118, %v4134
        %v4183 = vsel %vm519, %v4119, %v4135
        %v4184 = vsel %vm519, %v4120, %v4136
        %v4185 = vsel %vm519, %v4121, %v4137
        %v4186 = vsel %vm519, %v4138, %v4106
        %v4187 = vsel %vm519, %v4139, %v4107
        %v4188 = vsel %vm519, %v4140, %v4108
        %v4189 = vsel %vm519, %v4141, %v4109
        %v4190 = vsel %vm519, %v4142, %v4110
        %v4191 = vsel %vm519, %v4143, %v4111
        %v4192 = vsel %vm519, %v4144, %v4112
        %v4193 = vsel %vm519, %v4145, %v4113
        %v4194 = vsel %vm519, %v4146, %v4114
        %v4195 = vsel %vm519, %v4147, %v4115
        %v4196 = vsel %vm519, %v4148, %v4116
        %v4197 = vsel %vm519, %v4149, %v4117
        %v4198 = vsel %vm519, %v4150, %v4118
        %v4199 = vsel %vm519, %v4151, %v4119
        %v4200 = vsel %vm519, %v4152, %v4120
        %v4201 = vsel %vm519, %v4153, %v4121
        %4250 = vrot.lane.b32.xlu0 %v3481, 32
        %v4251 = vpop.permute.xlu0 %4250
        %4252 = vrot.lane.b32.xlu0 %v3482, 32
        %v4253 = vpop.permute.xlu0 %4252
        %4254 = vrot.lane.b32.xlu0 %v3483, 32
        %v4255 = vpop.permute.xlu0 %4254
        %4256 = vrot.lane.b32.xlu0 %v3484, 32
        %v4257 = vpop.permute.xlu0 %4256
        %4258 = vrot.lane.b32.xlu0 %v3485, 32
        %v4259 = vpop.permute.xlu0 %4258
        %4260 = vrot.lane.b32.xlu0 %v3486, 32
        %v4261 = vpop.permute.xlu0 %4260
        %4262 = vrot.lane.b32.xlu0 %v3487, 32
        %v4263 = vpop.permute.xlu0 %4262
        %4264 = vrot.lane.b32.xlu0 %v3488, 32
        %v4265 = vpop.permute.xlu0 %4264
        %4266 = vrot.lane.b32.xlu0 %v3489, 32
        %v4267 = vpop.permute.xlu0 %4266
        %4268 = vrot.lane.b32.xlu0 %v3490, 32
        %v4269 = vpop.permute.xlu0 %4268
        %4270 = vrot.lane.b32.xlu0 %v3491, 32
        %v4271 = vpop.permute.xlu0 %4270
        %4272 = vrot.lane.b32.xlu0 %v3492, 32
        %v4273 = vpop.permute.xlu0 %4272
        %4274 = vrot.lane.b32.xlu0 %v3493, 32
        %v4275 = vpop.permute.xlu0 %4274
        %4276 = vrot.lane.b32.xlu0 %v3494, 32
        %v4277 = vpop.permute.xlu0 %4276
        %4278 = vrot.lane.b32.xlu0 %v3495, 32
        %v4279 = vpop.permute.xlu0 %4278
        %4280 = vrot.lane.b32.xlu0 %v3496, 32
        %v4281 = vpop.permute.xlu0 %4280
        %4282 = vrot.lane.b32.xlu0 %v3497, 32
        %v4283 = vpop.permute.xlu0 %4282
        %4284 = vrot.lane.b32.xlu0 %v3498, 32
        %v4285 = vpop.permute.xlu0 %4284
        %4286 = vrot.lane.b32.xlu0 %v3499, 32
        %v4287 = vpop.permute.xlu0 %4286
        %4288 = vrot.lane.b32.xlu0 %v3500, 32
        %v4289 = vpop.permute.xlu0 %4288
        %4290 = vrot.lane.b32.xlu0 %v3501, 32
        %v4291 = vpop.permute.xlu0 %4290
        %4292 = vrot.lane.b32.xlu0 %v3502, 32
        %v4293 = vpop.permute.xlu0 %4292
        %4294 = vrot.lane.b32.xlu0 %v3503, 32
        %v4295 = vpop.permute.xlu0 %4294
        %4296 = vrot.lane.b32.xlu0 %v3504, 32
        %v4297 = vpop.permute.xlu0 %4296
        %4298 = vrot.lane.b32.xlu0 %v3505, 32
        %v4299 = vpop.permute.xlu0 %4298
        %4300 = vrot.lane.b32.xlu0 %v3506, 32
        %v4301 = vpop.permute.xlu0 %4300
        %4302 = vrot.lane.b32.xlu0 %v3507, 32
        %v4303 = vpop.permute.xlu0 %4302
        %4304 = vrot.lane.b32.xlu0 %v3508, 32
        %v4305 = vpop.permute.xlu0 %4304
        %4306 = vrot.lane.b32.xlu0 %v3509, 32
        %v4307 = vpop.permute.xlu0 %4306
        %4308 = vrot.lane.b32.xlu0 %v3510, 32
        %v4309 = vpop.permute.xlu0 %4308
        %4310 = vrot.lane.b32.xlu0 %v3511, 32
        %v4311 = vpop.permute.xlu0 %4310
        %4312 = vrot.lane.b32.xlu0 %v3512, 32
        %v4313 = vpop.permute.xlu0 %4312
        %4314 = vrot.lane.b32.xlu0 %v3513, 32
        %v4315 = vpop.permute.xlu0 %4314
        %4316 = vrot.lane.b32.xlu0 %v3514, 32
        %v4317 = vpop.permute.xlu0 %4316
        %4318 = vrot.lane.b32.xlu0 %v3515, 32
        %v4319 = vpop.permute.xlu0 %4318
        %4320 = vrot.lane.b32.xlu0 %v3516, 32
        %v4321 = vpop.permute.xlu0 %4320
        %4322 = vrot.lane.b32.xlu0 %v3517, 32
        %v4323 = vpop.permute.xlu0 %4322
        %4324 = vrot.lane.b32.xlu0 %v3518, 32
        %v4325 = vpop.permute.xlu0 %4324
        %4326 = vrot.lane.b32.xlu0 %v3519, 32
        %v4327 = vpop.permute.xlu0 %4326
        %4328 = vrot.lane.b32.xlu0 %v3520, 32
        %v4329 = vpop.permute.xlu0 %4328
        %4330 = vrot.lane.b32.xlu0 %v3521, 32
        %v4331 = vpop.permute.xlu0 %4330
        %4332 = vrot.lane.b32.xlu0 %v3522, 32
        %v4333 = vpop.permute.xlu0 %4332
        %4334 = vrot.lane.b32.xlu0 %v3523, 32
        %v4335 = vpop.permute.xlu0 %4334
        %4336 = vrot.lane.b32.xlu0 %v3524, 32
        %v4337 = vpop.permute.xlu0 %4336
        %4338 = vrot.lane.b32.xlu0 %v3525, 32
        %v4339 = vpop.permute.xlu0 %4338
        %4340 = vrot.lane.b32.xlu0 %v3526, 32
        %v4341 = vpop.permute.xlu0 %4340
        %4342 = vrot.lane.b32.xlu0 %v3527, 32
        %v4343 = vpop.permute.xlu0 %4342
        %4344 = vrot.lane.b32.xlu0 %v3528, 32
        %v4345 = vpop.permute.xlu0 %4344
        %4442 = vrot.lane.b32.xlu0 %v3689, 64
        %v4443 = vpop.permute.xlu0 %4442
        %4444 = vrot.lane.b32.xlu0 %v3673, 64
        %v4445 = vpop.permute.xlu0 %4444
        %4446 = vrot.lane.b32.xlu0 %v3705, 64
        %v4447 = vpop.permute.xlu0 %4446
        %4448 = vrot.lane.b32.xlu0 %v3690, 64
        %v4449 = vpop.permute.xlu0 %4448
        %4450 = vrot.lane.b32.xlu0 %v3674, 64
        %v4451 = vpop.permute.xlu0 %4450
        %4452 = vrot.lane.b32.xlu0 %v3706, 64
        %v4453 = vpop.permute.xlu0 %4452
        %4454 = vrot.lane.b32.xlu0 %v3691, 64
        %v4455 = vpop.permute.xlu0 %4454
        %4456 = vrot.lane.b32.xlu0 %v3675, 64
        %v4457 = vpop.permute.xlu0 %4456
        %4458 = vrot.lane.b32.xlu0 %v3707, 64
        %v4459 = vpop.permute.xlu0 %4458
        %4460 = vrot.lane.b32.xlu0 %v3692, 64
        %v4461 = vpop.permute.xlu0 %4460
        %4462 = vrot.lane.b32.xlu0 %v3676, 64
        %v4463 = vpop.permute.xlu0 %4462
        %4464 = vrot.lane.b32.xlu0 %v3708, 64
        %v4465 = vpop.permute.xlu0 %4464
        %4466 = vrot.lane.b32.xlu0 %v3693, 64
        %v4467 = vpop.permute.xlu0 %4466
        %4468 = vrot.lane.b32.xlu0 %v3677, 64
        %v4469 = vpop.permute.xlu0 %4468
        %4470 = vrot.lane.b32.xlu0 %v3709, 64
        %v4471 = vpop.permute.xlu0 %4470
        %4472 = vrot.lane.b32.xlu0 %v3694, 64
        %v4473 = vpop.permute.xlu0 %4472
        %4474 = vrot.lane.b32.xlu0 %v3678, 64
        %v4475 = vpop.permute.xlu0 %4474
        %4476 = vrot.lane.b32.xlu0 %v3710, 64
        %v4477 = vpop.permute.xlu0 %4476
        %4478 = vrot.lane.b32.xlu0 %v3695, 64
        %v4479 = vpop.permute.xlu0 %4478
        %4480 = vrot.lane.b32.xlu0 %v3679, 64
        %v4481 = vpop.permute.xlu0 %4480
        %4482 = vrot.lane.b32.xlu0 %v3711, 64
        %v4483 = vpop.permute.xlu0 %4482
        %4484 = vrot.lane.b32.xlu0 %v3696, 64
        %v4485 = vpop.permute.xlu0 %4484
        %4486 = vrot.lane.b32.xlu0 %v3680, 64
        %v4487 = vpop.permute.xlu0 %4486
        %4488 = vrot.lane.b32.xlu0 %v3712, 64
        %v4489 = vpop.permute.xlu0 %4488
        %4490 = vrot.lane.b32.xlu0 %v3697, 64
        %v4491 = vpop.permute.xlu0 %4490
        %4492 = vrot.lane.b32.xlu0 %v3681, 64
        %v4493 = vpop.permute.xlu0 %4492
        %4494 = vrot.lane.b32.xlu0 %v3713, 64
        %v4495 = vpop.permute.xlu0 %4494
        %4496 = vrot.lane.b32.xlu0 %v3698, 64
        %v4497 = vpop.permute.xlu0 %4496
        %4498 = vrot.lane.b32.xlu0 %v3682, 64
        %v4499 = vpop.permute.xlu0 %4498
        %4500 = vrot.lane.b32.xlu0 %v3714, 64
        %v4501 = vpop.permute.xlu0 %4500
        %4502 = vrot.lane.b32.xlu0 %v3699, 64
        %v4503 = vpop.permute.xlu0 %4502
        %4504 = vrot.lane.b32.xlu0 %v3683, 64
        %v4505 = vpop.permute.xlu0 %4504
        %4506 = vrot.lane.b32.xlu0 %v3715, 64
        %v4507 = vpop.permute.xlu0 %4506
        %4508 = vrot.lane.b32.xlu0 %v3700, 64
        %v4509 = vpop.permute.xlu0 %4508
        %4510 = vrot.lane.b32.xlu0 %v3684, 64
        %v4511 = vpop.permute.xlu0 %4510
        %4512 = vrot.lane.b32.xlu0 %v3716, 64
        %v4513 = vpop.permute.xlu0 %4512
        %4514 = vrot.lane.b32.xlu0 %v3701, 64
        %v4515 = vpop.permute.xlu0 %4514
        %4516 = vrot.lane.b32.xlu0 %v3685, 64
        %v4517 = vpop.permute.xlu0 %4516
        %4518 = vrot.lane.b32.xlu0 %v3717, 64
        %v4519 = vpop.permute.xlu0 %4518
        %4520 = vrot.lane.b32.xlu0 %v3702, 64
        %v4521 = vpop.permute.xlu0 %4520
        %4522 = vrot.lane.b32.xlu0 %v3686, 64
        %v4523 = vpop.permute.xlu0 %4522
        %4524 = vrot.lane.b32.xlu0 %v3718, 64
        %v4525 = vpop.permute.xlu0 %4524
        %4526 = vrot.lane.b32.xlu0 %v3703, 64
        %v4527 = vpop.permute.xlu0 %4526
        %4528 = vrot.lane.b32.xlu0 %v3687, 64
        %v4529 = vpop.permute.xlu0 %4528
        %4530 = vrot.lane.b32.xlu0 %v3719, 64
        %v4531 = vpop.permute.xlu0 %4530
        %4532 = vrot.lane.b32.xlu0 %v3704, 64
        %v4533 = vpop.permute.xlu0 %4532
        %4534 = vrot.lane.b32.xlu0 %v3688, 64
        %v4535 = vpop.permute.xlu0 %4534
        %4536 = vrot.lane.b32.xlu0 %v3720, 64
        %v4537 = vpop.permute.xlu0 %4536
        %4634 = vrot.lane.b32.xlu0 %v3849, 96
        %v4635 = vpop.permute.xlu0 %4634
        %4636 = vrot.lane.b32.xlu0 %v3833, 96
        %v4637 = vpop.permute.xlu0 %4636
        %4638 = vrot.lane.b32.xlu0 %v3817, 96
        %v4639 = vpop.permute.xlu0 %4638
        %4640 = vrot.lane.b32.xlu0 %v3850, 96
        %v4641 = vpop.permute.xlu0 %4640
        %4642 = vrot.lane.b32.xlu0 %v3834, 96
        %v4643 = vpop.permute.xlu0 %4642
        %4644 = vrot.lane.b32.xlu0 %v3818, 96
        %v4645 = vpop.permute.xlu0 %4644
        %4646 = vrot.lane.b32.xlu0 %v3851, 96
        %v4647 = vpop.permute.xlu0 %4646
        %4648 = vrot.lane.b32.xlu0 %v3835, 96
        %v4649 = vpop.permute.xlu0 %4648
        %4650 = vrot.lane.b32.xlu0 %v3819, 96
        %v4651 = vpop.permute.xlu0 %4650
        %4652 = vrot.lane.b32.xlu0 %v3852, 96
        %v4653 = vpop.permute.xlu0 %4652
        %4654 = vrot.lane.b32.xlu0 %v3836, 96
        %v4655 = vpop.permute.xlu0 %4654
        %4656 = vrot.lane.b32.xlu0 %v3820, 96
        %v4657 = vpop.permute.xlu0 %4656
        %4658 = vrot.lane.b32.xlu0 %v3853, 96
        %v4659 = vpop.permute.xlu0 %4658
        %4660 = vrot.lane.b32.xlu0 %v3837, 96
        %v4661 = vpop.permute.xlu0 %4660
        %4662 = vrot.lane.b32.xlu0 %v3821, 96
        %v4663 = vpop.permute.xlu0 %4662
        %4664 = vrot.lane.b32.xlu0 %v3854, 96
        %v4665 = vpop.permute.xlu0 %4664
        %4666 = vrot.lane.b32.xlu0 %v3838, 96
        %v4667 = vpop.permute.xlu0 %4666
        %4668 = vrot.lane.b32.xlu0 %v3822, 96
        %v4669 = vpop.permute.xlu0 %4668
        %4670 = vrot.lane.b32.xlu0 %v3855, 96
        %v4671 = vpop.permute.xlu0 %4670
        %4672 = vrot.lane.b32.xlu0 %v3839, 96
        %v4673 = vpop.permute.xlu0 %4672
        %4674 = vrot.lane.b32.xlu0 %v3823, 96
        %v4675 = vpop.permute.xlu0 %4674
        %4676 = vrot.lane.b32.xlu0 %v3856, 96
        %v4677 = vpop.permute.xlu0 %4676
        %4678 = vrot.lane.b32.xlu0 %v3840, 96
        %v4679 = vpop.permute.xlu0 %4678
        %4680 = vrot.lane.b32.xlu0 %v3824, 96
        %v4681 = vpop.permute.xlu0 %4680
        %4682 = vrot.lane.b32.xlu0 %v3857, 96
        %v4683 = vpop.permute.xlu0 %4682
        %4684 = vrot.lane.b32.xlu0 %v3841, 96
        %v4685 = vpop.permute.xlu0 %4684
        %4686 = vrot.lane.b32.xlu0 %v3825, 96
        %v4687 = vpop.permute.xlu0 %4686
        %4688 = vrot.lane.b32.xlu0 %v3858, 96
        %v4689 = vpop.permute.xlu0 %4688
        %4690 = vrot.lane.b32.xlu0 %v3842, 96
        %v4691 = vpop.permute.xlu0 %4690
        %4692 = vrot.lane.b32.xlu0 %v3826, 96
        %v4693 = vpop.permute.xlu0 %4692
        %4694 = vrot.lane.b32.xlu0 %v3859, 96
        %v4695 = vpop.permute.xlu0 %4694
        %4696 = vrot.lane.b32.xlu0 %v3843, 96
        %v4697 = vpop.permute.xlu0 %4696
        %4698 = vrot.lane.b32.xlu0 %v3827, 96
        %v4699 = vpop.permute.xlu0 %4698
        %4700 = vrot.lane.b32.xlu0 %v3860, 96
        %v4701 = vpop.permute.xlu0 %4700
        %4702 = vrot.lane.b32.xlu0 %v3844, 96
        %v4703 = vpop.permute.xlu0 %4702
        %4704 = vrot.lane.b32.xlu0 %v3828, 96
        %v4705 = vpop.permute.xlu0 %4704
        %4706 = vrot.lane.b32.xlu0 %v3861, 96
        %v4707 = vpop.permute.xlu0 %4706
        %4708 = vrot.lane.b32.xlu0 %v3845, 96
        %v4709 = vpop.permute.xlu0 %4708
        %4710 = vrot.lane.b32.xlu0 %v3829, 96
        %v4711 = vpop.permute.xlu0 %4710
        %4712 = vrot.lane.b32.xlu0 %v3862, 96
        %v4713 = vpop.permute.xlu0 %4712
        %4714 = vrot.lane.b32.xlu0 %v3846, 96
        %v4715 = vpop.permute.xlu0 %4714
        %4716 = vrot.lane.b32.xlu0 %v3830, 96
        %v4717 = vpop.permute.xlu0 %4716
        %4718 = vrot.lane.b32.xlu0 %v3863, 96
        %v4719 = vpop.permute.xlu0 %4718
        %4720 = vrot.lane.b32.xlu0 %v3847, 96
        %v4721 = vpop.permute.xlu0 %4720
        %4722 = vrot.lane.b32.xlu0 %v3831, 96
        %v4723 = vpop.permute.xlu0 %4722
        %4724 = vrot.lane.b32.xlu0 %v3864, 96
        %v4725 = vpop.permute.xlu0 %4724
        %4726 = vrot.lane.b32.xlu0 %v3848, 96
        %v4727 = vpop.permute.xlu0 %4726
        %4728 = vrot.lane.b32.xlu0 %v3832, 96
        %v4729 = vpop.permute.xlu0 %4728
        %4826 = vrot.lane.b32.xlu0 %v3929, 32
        %v4827 = vpop.permute.xlu0 %4826
        %4828 = vrot.lane.b32.xlu0 %v3913, 32
        %v4829 = vpop.permute.xlu0 %4828
        %4830 = vrot.lane.b32.xlu0 %v3945, 32
        %v4831 = vpop.permute.xlu0 %4830
        %4832 = vrot.lane.b32.xlu0 %v3930, 32
        %v4833 = vpop.permute.xlu0 %4832
        %4834 = vrot.lane.b32.xlu0 %v3914, 32
        %v4835 = vpop.permute.xlu0 %4834
        %4836 = vrot.lane.b32.xlu0 %v3946, 32
        %v4837 = vpop.permute.xlu0 %4836
        %4838 = vrot.lane.b32.xlu0 %v3931, 32
        %v4839 = vpop.permute.xlu0 %4838
        %4840 = vrot.lane.b32.xlu0 %v3915, 32
        %v4841 = vpop.permute.xlu0 %4840
        %4842 = vrot.lane.b32.xlu0 %v3947, 32
        %v4843 = vpop.permute.xlu0 %4842
        %4844 = vrot.lane.b32.xlu0 %v3932, 32
        %v4845 = vpop.permute.xlu0 %4844
        %4846 = vrot.lane.b32.xlu0 %v3916, 32
        %v4847 = vpop.permute.xlu0 %4846
        %4848 = vrot.lane.b32.xlu0 %v3948, 32
        %v4849 = vpop.permute.xlu0 %4848
        %4850 = vrot.lane.b32.xlu0 %v3933, 32
        %v4851 = vpop.permute.xlu0 %4850
        %4852 = vrot.lane.b32.xlu0 %v3917, 32
        %v4853 = vpop.permute.xlu0 %4852
        %4854 = vrot.lane.b32.xlu0 %v3949, 32
        %v4855 = vpop.permute.xlu0 %4854
        %4856 = vrot.lane.b32.xlu0 %v3934, 32
        %v4857 = vpop.permute.xlu0 %4856
        %4858 = vrot.lane.b32.xlu0 %v3918, 32
        %v4859 = vpop.permute.xlu0 %4858
        %4860 = vrot.lane.b32.xlu0 %v3950, 32
        %v4861 = vpop.permute.xlu0 %4860
        %4862 = vrot.lane.b32.xlu0 %v3935, 32
        %v4863 = vpop.permute.xlu0 %4862
        %4864 = vrot.lane.b32.xlu0 %v3919, 32
        %v4865 = vpop.permute.xlu0 %4864
        %4866 = vrot.lane.b32.xlu0 %v3951, 32
        %v4867 = vpop.permute.xlu0 %4866
        %4868 = vrot.lane.b32.xlu0 %v3936, 32
        %v4869 = vpop.permute.xlu0 %4868
        %4870 = vrot.lane.b32.xlu0 %v3920, 32
        %v4871 = vpop.permute.xlu0 %4870
        %4872 = vrot.lane.b32.xlu0 %v3952, 32
        %v4873 = vpop.permute.xlu0 %4872
        %4874 = vrot.lane.b32.xlu0 %v3937, 32
        %v4875 = vpop.permute.xlu0 %4874
        %4876 = vrot.lane.b32.xlu0 %v3921, 32
        %v4877 = vpop.permute.xlu0 %4876
        %4878 = vrot.lane.b32.xlu0 %v3953, 32
        %v4879 = vpop.permute.xlu0 %4878
        %4880 = vrot.lane.b32.xlu0 %v3938, 32
        %v4881 = vpop.permute.xlu0 %4880
        %4882 = vrot.lane.b32.xlu0 %v3922, 32
        %v4883 = vpop.permute.xlu0 %4882
        %4884 = vrot.lane.b32.xlu0 %v3954, 32
        %v4885 = vpop.permute.xlu0 %4884
        %4886 = vrot.lane.b32.xlu0 %v3939, 32
        %v4887 = vpop.permute.xlu0 %4886
        %4888 = vrot.lane.b32.xlu0 %v3923, 32
        %v4889 = vpop.permute.xlu0 %4888
        %4890 = vrot.lane.b32.xlu0 %v3955, 32
        %v4891 = vpop.permute.xlu0 %4890
        %4892 = vrot.lane.b32.xlu0 %v3940, 32
        %v4893 = vpop.permute.xlu0 %4892
        %4894 = vrot.lane.b32.xlu0 %v3924, 32
        %v4895 = vpop.permute.xlu0 %4894
        %4896 = vrot.lane.b32.xlu0 %v3956, 32
        %v4897 = vpop.permute.xlu0 %4896
        %4898 = vrot.lane.b32.xlu0 %v3941, 32
        %v4899 = vpop.permute.xlu0 %4898
        %4900 = vrot.lane.b32.xlu0 %v3925, 32
        %v4901 = vpop.permute.xlu0 %4900
        %4902 = vrot.lane.b32.xlu0 %v3957, 32
        %v4903 = vpop.permute.xlu0 %4902
        %4904 = vrot.lane.b32.xlu0 %v3942, 32
        %v4905 = vpop.permute.xlu0 %4904
        %4906 = vrot.lane.b32.xlu0 %v3926, 32
        %v4907 = vpop.permute.xlu0 %4906
        %4908 = vrot.lane.b32.xlu0 %v3958, 32
        %v4909 = vpop.permute.xlu0 %4908
        %4910 = vrot.lane.b32.xlu0 %v3943, 32
        %v4911 = vpop.permute.xlu0 %4910
        %4912 = vrot.lane.b32.xlu0 %v3927, 32
        %v4913 = vpop.permute.xlu0 %4912
        %4914 = vrot.lane.b32.xlu0 %v3959, 32
        %v4915 = vpop.permute.xlu0 %4914
        %4916 = vrot.lane.b32.xlu0 %v3944, 32
        %v4917 = vpop.permute.xlu0 %4916
        %4918 = vrot.lane.b32.xlu0 %v3928, 32
        %v4919 = vpop.permute.xlu0 %4918
        %4920 = vrot.lane.b32.xlu0 %v3960, 32
        %v4921 = vpop.permute.xlu0 %4920
        %5018 = vrot.lane.b32.xlu0 %v4090, 64
        %v5019 = vpop.permute.xlu0 %5018
        %5020 = vrot.lane.b32.xlu0 %v4074, 64
        %v5021 = vpop.permute.xlu0 %5020
        %5022 = vrot.lane.b32.xlu0 %v4058, 64
        %v5023 = vpop.permute.xlu0 %5022
        %5024 = vrot.lane.b32.xlu0 %v4091, 64
        %v5025 = vpop.permute.xlu0 %5024
        %5026 = vrot.lane.b32.xlu0 %v4075, 64
        %v5027 = vpop.permute.xlu0 %5026
        %5028 = vrot.lane.b32.xlu0 %v4059, 64
        %v5029 = vpop.permute.xlu0 %5028
        %5030 = vrot.lane.b32.xlu0 %v4092, 64
        %v5031 = vpop.permute.xlu0 %5030
        %5032 = vrot.lane.b32.xlu0 %v4076, 64
        %v5033 = vpop.permute.xlu0 %5032
        %5034 = vrot.lane.b32.xlu0 %v4060, 64
        %v5035 = vpop.permute.xlu0 %5034
        %5036 = vrot.lane.b32.xlu0 %v4093, 64
        %v5037 = vpop.permute.xlu0 %5036
        %5038 = vrot.lane.b32.xlu0 %v4077, 64
        %v5039 = vpop.permute.xlu0 %5038
        %5040 = vrot.lane.b32.xlu0 %v4061, 64
        %v5041 = vpop.permute.xlu0 %5040
        %5042 = vrot.lane.b32.xlu0 %v4094, 64
        %v5043 = vpop.permute.xlu0 %5042
        %5044 = vrot.lane.b32.xlu0 %v4078, 64
        %v5045 = vpop.permute.xlu0 %5044
        %5046 = vrot.lane.b32.xlu0 %v4062, 64
        %v5047 = vpop.permute.xlu0 %5046
        %5048 = vrot.lane.b32.xlu0 %v4095, 64
        %v5049 = vpop.permute.xlu0 %5048
        %5050 = vrot.lane.b32.xlu0 %v4079, 64
        %v5051 = vpop.permute.xlu0 %5050
        %5052 = vrot.lane.b32.xlu0 %v4063, 64
        %v5053 = vpop.permute.xlu0 %5052
        %5054 = vrot.lane.b32.xlu0 %v4096, 64
        %v5055 = vpop.permute.xlu0 %5054
        %5056 = vrot.lane.b32.xlu0 %v4080, 64
        %v5057 = vpop.permute.xlu0 %5056
        %5058 = vrot.lane.b32.xlu0 %v4064, 64
        %v5059 = vpop.permute.xlu0 %5058
        %5060 = vrot.lane.b32.xlu0 %v4097, 64
        %v5061 = vpop.permute.xlu0 %5060
        %5062 = vrot.lane.b32.xlu0 %v4081, 64
        %v5063 = vpop.permute.xlu0 %5062
        %5064 = vrot.lane.b32.xlu0 %v4065, 64
        %v5065 = vpop.permute.xlu0 %5064
        %5066 = vrot.lane.b32.xlu0 %v4098, 64
        %v5067 = vpop.permute.xlu0 %5066
        %5068 = vrot.lane.b32.xlu0 %v4082, 64
        %v5069 = vpop.permute.xlu0 %5068
        %5070 = vrot.lane.b32.xlu0 %v4066, 64
        %v5071 = vpop.permute.xlu0 %5070
        %5072 = vrot.lane.b32.xlu0 %v4099, 64
        %v5073 = vpop.permute.xlu0 %5072
        %5074 = vrot.lane.b32.xlu0 %v4083, 64
        %v5075 = vpop.permute.xlu0 %5074
        %5076 = vrot.lane.b32.xlu0 %v4067, 64
        %v5077 = vpop.permute.xlu0 %5076
        %5078 = vrot.lane.b32.xlu0 %v4100, 64
        %v5079 = vpop.permute.xlu0 %5078
        %5080 = vrot.lane.b32.xlu0 %v4084, 64
        %v5081 = vpop.permute.xlu0 %5080
        %5082 = vrot.lane.b32.xlu0 %v4068, 64
        %v5083 = vpop.permute.xlu0 %5082
        %5084 = vrot.lane.b32.xlu0 %v4101, 64
        %v5085 = vpop.permute.xlu0 %5084
        %5086 = vrot.lane.b32.xlu0 %v4085, 64
        %v5087 = vpop.permute.xlu0 %5086
        %5088 = vrot.lane.b32.xlu0 %v4069, 64
        %v5089 = vpop.permute.xlu0 %5088
        %5090 = vrot.lane.b32.xlu0 %v4102, 64
        %v5091 = vpop.permute.xlu0 %5090
        %5092 = vrot.lane.b32.xlu0 %v4086, 64
        %v5093 = vpop.permute.xlu0 %5092
        %5094 = vrot.lane.b32.xlu0 %v4070, 64
        %v5095 = vpop.permute.xlu0 %5094
        %5096 = vrot.lane.b32.xlu0 %v4103, 64
        %v5097 = vpop.permute.xlu0 %5096
        %5098 = vrot.lane.b32.xlu0 %v4087, 64
        %v5099 = vpop.permute.xlu0 %5098
        %5100 = vrot.lane.b32.xlu0 %v4071, 64
        %v5101 = vpop.permute.xlu0 %5100
        %5102 = vrot.lane.b32.xlu0 %v4104, 64
        %v5103 = vpop.permute.xlu0 %5102
        %5104 = vrot.lane.b32.xlu0 %v4088, 64
        %v5105 = vpop.permute.xlu0 %5104
        %5106 = vrot.lane.b32.xlu0 %v4072, 64
        %v5107 = vpop.permute.xlu0 %5106
        %5108 = vrot.lane.b32.xlu0 %v4105, 64
        %v5109 = vpop.permute.xlu0 %5108
        %5110 = vrot.lane.b32.xlu0 %v4089, 64
        %v5111 = vpop.permute.xlu0 %5110
        %5112 = vrot.lane.b32.xlu0 %v4073, 64
        %v5113 = vpop.permute.xlu0 %5112
        %5210 = vrot.lane.b32.xlu0 %v3962, 96
        %v5211 = vpop.permute.xlu0 %5210
        %5212 = vrot.lane.b32.xlu0 %v3963, 96
        %v5213 = vpop.permute.xlu0 %5212
        %5214 = vrot.lane.b32.xlu0 %v3964, 96
        %v5215 = vpop.permute.xlu0 %5214
        %5216 = vrot.lane.b32.xlu0 %v3965, 96
        %v5217 = vpop.permute.xlu0 %5216
        %5218 = vrot.lane.b32.xlu0 %v3966, 96
        %v5219 = vpop.permute.xlu0 %5218
        %5220 = vrot.lane.b32.xlu0 %v3967, 96
        %v5221 = vpop.permute.xlu0 %5220
        %5222 = vrot.lane.b32.xlu0 %v3968, 96
        %v5223 = vpop.permute.xlu0 %5222
        %5224 = vrot.lane.b32.xlu0 %v3969, 96
        %v5225 = vpop.permute.xlu0 %5224
        %5226 = vrot.lane.b32.xlu0 %v3970, 96
        %v5227 = vpop.permute.xlu0 %5226
        %5228 = vrot.lane.b32.xlu0 %v3971, 96
        %v5229 = vpop.permute.xlu0 %5228
        %5230 = vrot.lane.b32.xlu0 %v3972, 96
        %v5231 = vpop.permute.xlu0 %5230
        %5232 = vrot.lane.b32.xlu0 %v3973, 96
        %v5233 = vpop.permute.xlu0 %5232
        %5234 = vrot.lane.b32.xlu0 %v3974, 96
        %v5235 = vpop.permute.xlu0 %5234
        %5236 = vrot.lane.b32.xlu0 %v3975, 96
        %v5237 = vpop.permute.xlu0 %5236
        %5238 = vrot.lane.b32.xlu0 %v3976, 96
        %v5239 = vpop.permute.xlu0 %5238
        %5240 = vrot.lane.b32.xlu0 %v3977, 96
        %v5241 = vpop.permute.xlu0 %5240
        %5242 = vrot.lane.b32.xlu0 %v3978, 96
        %v5243 = vpop.permute.xlu0 %5242
        %5244 = vrot.lane.b32.xlu0 %v3979, 96
        %v5245 = vpop.permute.xlu0 %5244
        %5246 = vrot.lane.b32.xlu0 %v3980, 96
        %v5247 = vpop.permute.xlu0 %5246
        %5248 = vrot.lane.b32.xlu0 %v3981, 96
        %v5249 = vpop.permute.xlu0 %5248
        %5250 = vrot.lane.b32.xlu0 %v3982, 96
        %v5251 = vpop.permute.xlu0 %5250
        %5252 = vrot.lane.b32.xlu0 %v3983, 96
        %v5253 = vpop.permute.xlu0 %5252
        %5254 = vrot.lane.b32.xlu0 %v3984, 96
        %v5255 = vpop.permute.xlu0 %5254
        %5256 = vrot.lane.b32.xlu0 %v3985, 96
        %v5257 = vpop.permute.xlu0 %5256
        %5258 = vrot.lane.b32.xlu0 %v3986, 96
        %v5259 = vpop.permute.xlu0 %5258
        %5260 = vrot.lane.b32.xlu0 %v3987, 96
        %v5261 = vpop.permute.xlu0 %5260
        %5262 = vrot.lane.b32.xlu0 %v3988, 96
        %v5263 = vpop.permute.xlu0 %5262
        %5264 = vrot.lane.b32.xlu0 %v3989, 96
        %v5265 = vpop.permute.xlu0 %5264
        %5266 = vrot.lane.b32.xlu0 %v3990, 96
        %v5267 = vpop.permute.xlu0 %5266
        %5268 = vrot.lane.b32.xlu0 %v3991, 96
        %v5269 = vpop.permute.xlu0 %5268
        %5270 = vrot.lane.b32.xlu0 %v3992, 96
        %v5271 = vpop.permute.xlu0 %5270
        %5272 = vrot.lane.b32.xlu0 %v3993, 96
        %v5273 = vpop.permute.xlu0 %5272
        %5274 = vrot.lane.b32.xlu0 %v3994, 96
        %v5275 = vpop.permute.xlu0 %5274
        %5276 = vrot.lane.b32.xlu0 %v3995, 96
        %v5277 = vpop.permute.xlu0 %5276
        %5278 = vrot.lane.b32.xlu0 %v3996, 96
        %v5279 = vpop.permute.xlu0 %5278
        %5280 = vrot.lane.b32.xlu0 %v3997, 96
        %v5281 = vpop.permute.xlu0 %5280
        %5282 = vrot.lane.b32.xlu0 %v3998, 96
        %v5283 = vpop.permute.xlu0 %5282
        %5284 = vrot.lane.b32.xlu0 %v3999, 96
        %v5285 = vpop.permute.xlu0 %5284
        %5286 = vrot.lane.b32.xlu0 %v4000, 96
        %v5287 = vpop.permute.xlu0 %5286
        %5288 = vrot.lane.b32.xlu0 %v4001, 96
        %v5289 = vpop.permute.xlu0 %5288
        %5290 = vrot.lane.b32.xlu0 %v4002, 96
        %v5291 = vpop.permute.xlu0 %5290
        %5292 = vrot.lane.b32.xlu0 %v4003, 96
        %v5293 = vpop.permute.xlu0 %5292
        %5294 = vrot.lane.b32.xlu0 %v4004, 96
        %v5295 = vpop.permute.xlu0 %5294
        %5296 = vrot.lane.b32.xlu0 %v4005, 96
        %v5297 = vpop.permute.xlu0 %5296
        %5298 = vrot.lane.b32.xlu0 %v4006, 96
        %v5299 = vpop.permute.xlu0 %5298
        %5300 = vrot.lane.b32.xlu0 %v4007, 96
        %v5301 = vpop.permute.xlu0 %5300
        %5302 = vrot.lane.b32.xlu0 %v4008, 96
        %v5303 = vpop.permute.xlu0 %5302
        %5304 = vrot.lane.b32.xlu0 %v4009, 96
        %v5305 = vpop.permute.xlu0 %5304
        %v5354 = vsel %vm2927, %v3609, %v4251
        %v5355 = vsel %vm2927, %v3593, %v4253
        %v5356 = vsel %vm2927, %v3577, %v4255
        %v5357 = vsel %vm2927, %v3610, %v4257
        %v5358 = vsel %vm2927, %v3594, %v4259
        %v5359 = vsel %vm2927, %v3578, %v4261
        %v5360 = vsel %vm2927, %v3611, %v4263
        %v5361 = vsel %vm2927, %v3595, %v4265
        %v5362 = vsel %vm2927, %v3579, %v4267
        %v5363 = vsel %vm2927, %v3612, %v4269
        %v5364 = vsel %vm2927, %v3596, %v4271
        %v5365 = vsel %vm2927, %v3580, %v4273
        %v5366 = vsel %vm2927, %v3613, %v4275
        %v5367 = vsel %vm2927, %v3597, %v4277
        %v5368 = vsel %vm2927, %v3581, %v4279
        %v5369 = vsel %vm2927, %v3614, %v4281
        %v5370 = vsel %vm2927, %v3598, %v4283
        %v5371 = vsel %vm2927, %v3582, %v4285
        %v5372 = vsel %vm2927, %v3615, %v4287
        %v5373 = vsel %vm2927, %v3599, %v4289
        %v5374 = vsel %vm2927, %v3583, %v4291
        %v5375 = vsel %vm2927, %v3616, %v4293
        %v5376 = vsel %vm2927, %v3600, %v4295
        %v5377 = vsel %vm2927, %v3584, %v4297
        %v5378 = vsel %vm2927, %v3617, %v4299
        %v5379 = vsel %vm2927, %v3601, %v4301
        %v5380 = vsel %vm2927, %v3585, %v4303
        %v5381 = vsel %vm2927, %v3618, %v4305
        %v5382 = vsel %vm2927, %v3602, %v4307
        %v5383 = vsel %vm2927, %v3586, %v4309
        %v5384 = vsel %vm2927, %v3619, %v4311
        %v5385 = vsel %vm2927, %v3603, %v4313
        %v5386 = vsel %vm2927, %v3587, %v4315
        %v5387 = vsel %vm2927, %v3620, %v4317
        %v5388 = vsel %vm2927, %v3604, %v4319
        %v5389 = vsel %vm2927, %v3588, %v4321
        %v5390 = vsel %vm2927, %v3621, %v4323
        %v5391 = vsel %vm2927, %v3605, %v4325
        %v5392 = vsel %vm2927, %v3589, %v4327
        %v5393 = vsel %vm2927, %v3622, %v4329
        %v5394 = vsel %vm2927, %v3606, %v4331
        %v5395 = vsel %vm2927, %v3590, %v4333
        %v5396 = vsel %vm2927, %v3623, %v4335
        %v5397 = vsel %vm2927, %v3607, %v4337
        %v5398 = vsel %vm2927, %v3591, %v4339
        %v5399 = vsel %vm2927, %v3624, %v4341
        %v5400 = vsel %vm2927, %v3608, %v4343
        %v5401 = vsel %vm2927, %v3592, %v4345
        %vm5402 = vcmask 523264
        %v5403 = vsel %vm5402, %v5354, %v4443
        %v5404 = vsel %vm5402, %v5355, %v4445
        %v5405 = vsel %vm5402, %v5356, %v4447
        %v5406 = vsel %vm5402, %v5357, %v4449
        %v5407 = vsel %vm5402, %v5358, %v4451
        %v5408 = vsel %vm5402, %v5359, %v4453
        %v5409 = vsel %vm5402, %v5360, %v4455
        %v5410 = vsel %vm5402, %v5361, %v4457
        %v5411 = vsel %vm5402, %v5362, %v4459
        %v5412 = vsel %vm5402, %v5363, %v4461
        %v5413 = vsel %vm5402, %v5364, %v4463
        %v5414 = vsel %vm5402, %v5365, %v4465
        %v5415 = vsel %vm5402, %v5366, %v4467
        %v5416 = vsel %vm5402, %v5367, %v4469
        %v5417 = vsel %vm5402, %v5368, %v4471
        %v5418 = vsel %vm5402, %v5369, %v4473
        %v5419 = vsel %vm5402, %v5370, %v4475
        %v5420 = vsel %vm5402, %v5371, %v4477
        %v5421 = vsel %vm5402, %v5372, %v4479
        %v5422 = vsel %vm5402, %v5373, %v4481
        %v5423 = vsel %vm5402, %v5374, %v4483
        %v5424 = vsel %vm5402, %v5375, %v4485
        %v5425 = vsel %vm5402, %v5376, %v4487
        %v5426 = vsel %vm5402, %v5377, %v4489
        %v5427 = vsel %vm5402, %v5378, %v4491
        %v5428 = vsel %vm5402, %v5379, %v4493
        %v5429 = vsel %vm5402, %v5380, %v4495
        %v5430 = vsel %vm5402, %v5381, %v4497
        %v5431 = vsel %vm5402, %v5382, %v4499
        %v5432 = vsel %vm5402, %v5383, %v4501
        %v5433 = vsel %vm5402, %v5384, %v4503
        %v5434 = vsel %vm5402, %v5385, %v4505
        %v5435 = vsel %vm5402, %v5386, %v4507
        %v5436 = vsel %vm5402, %v5387, %v4509
        %v5437 = vsel %vm5402, %v5388, %v4511
        %v5438 = vsel %vm5402, %v5389, %v4513
        %v5439 = vsel %vm5402, %v5390, %v4515
        %v5440 = vsel %vm5402, %v5391, %v4517
        %v5441 = vsel %vm5402, %v5392, %v4519
        %v5442 = vsel %vm5402, %v5393, %v4521
        %v5443 = vsel %vm5402, %v5394, %v4523
        %v5444 = vsel %vm5402, %v5395, %v4525
        %v5445 = vsel %vm5402, %v5396, %v4527
        %v5446 = vsel %vm5402, %v5397, %v4529
        %v5447 = vsel %vm5402, %v5398, %v4531
        %v5448 = vsel %vm5402, %v5399, %v4533
        %v5449 = vsel %vm5402, %v5400, %v4535
        %v5450 = vsel %vm5402, %v5401, %v4537
        %vm5451 = vcmask 785408
        %v5452 = vsel %vm5451, %v5403, %v4635
        %v5453 = vsel %vm5451, %v5404, %v4637
        %v5454 = vsel %vm5451, %v5405, %v4639
        %v5455 = vsel %vm5451, %v5406, %v4641
        %v5456 = vsel %vm5451, %v5407, %v4643
        %v5457 = vsel %vm5451, %v5408, %v4645
        %v5458 = vsel %vm5451, %v5409, %v4647
        %v5459 = vsel %vm5451, %v5410, %v4649
        %v5460 = vsel %vm5451, %v5411, %v4651
        %v5461 = vsel %vm5451, %v5412, %v4653
        %v5462 = vsel %vm5451, %v5413, %v4655
        %v5463 = vsel %vm5451, %v5414, %v4657
        %v5464 = vsel %vm5451, %v5415, %v4659
        %v5465 = vsel %vm5451, %v5416, %v4661
        %v5466 = vsel %vm5451, %v5417, %v4663
        %v5467 = vsel %vm5451, %v5418, %v4665
        %v5468 = vsel %vm5451, %v5419, %v4667
        %v5469 = vsel %vm5451, %v5420, %v4669
        %v5470 = vsel %vm5451, %v5421, %v4671
        %v5471 = vsel %vm5451, %v5422, %v4673
        %v5472 = vsel %vm5451, %v5423, %v4675
        %v5473 = vsel %vm5451, %v5424, %v4677
        %v5474 = vsel %vm5451, %v5425, %v4679
        %v5475 = vsel %vm5451, %v5426, %v4681
        %v5476 = vsel %vm5451, %v5427, %v4683
        %v5477 = vsel %vm5451, %v5428, %v4685
        %v5478 = vsel %vm5451, %v5429, %v4687
        %v5479 = vsel %vm5451, %v5430, %v4689
        %v5480 = vsel %vm5451, %v5431, %v4691
        %v5481 = vsel %vm5451, %v5432, %v4693
        %v5482 = vsel %vm5451, %v5433, %v4695
        %v5483 = vsel %vm5451, %v5434, %v4697
        %v5484 = vsel %vm5451, %v5435, %v4699
        %v5485 = vsel %vm5451, %v5436, %v4701
        %v5486 = vsel %vm5451, %v5437, %v4703
        %v5487 = vsel %vm5451, %v5438, %v4705
        %v5488 = vsel %vm5451, %v5439, %v4707
        %v5489 = vsel %vm5451, %v5440, %v4709
        %v5490 = vsel %vm5451, %v5441, %v4711
        %v5491 = vsel %vm5451, %v5442, %v4713
        %v5492 = vsel %vm5451, %v5443, %v4715
        %v5493 = vsel %vm5451, %v5444, %v4717
        %v5494 = vsel %vm5451, %v5445, %v4719
        %v5495 = vsel %vm5451, %v5446, %v4721
        %v5496 = vsel %vm5451, %v5447, %v4723
        %v5497 = vsel %vm5451, %v5448, %v4725
        %v5498 = vsel %vm5451, %v5449, %v4727
        %v5499 = vsel %vm5451, %v5450, %v4729
        %v5500 = vsel %vm2927, %v3721, %v4827
        %v5501 = vsel %vm2927, %v3722, %v4829
        %v5502 = vsel %vm2927, %v3723, %v4831
        %v5503 = vsel %vm2927, %v3724, %v4833
        %v5504 = vsel %vm2927, %v3725, %v4835
        %v5505 = vsel %vm2927, %v3726, %v4837
        %v5506 = vsel %vm2927, %v3727, %v4839
        %v5507 = vsel %vm2927, %v3728, %v4841
        %v5508 = vsel %vm2927, %v3729, %v4843
        %v5509 = vsel %vm2927, %v3730, %v4845
        %v5510 = vsel %vm2927, %v3731, %v4847
        %v5511 = vsel %vm2927, %v3732, %v4849
        %v5512 = vsel %vm2927, %v3733, %v4851
        %v5513 = vsel %vm2927, %v3734, %v4853
        %v5514 = vsel %vm2927, %v3735, %v4855
        %v5515 = vsel %vm2927, %v3736, %v4857
        %v5516 = vsel %vm2927, %v3737, %v4859
        %v5517 = vsel %vm2927, %v3738, %v4861
        %v5518 = vsel %vm2927, %v3739, %v4863
        %v5519 = vsel %vm2927, %v3740, %v4865
        %v5520 = vsel %vm2927, %v3741, %v4867
        %v5521 = vsel %vm2927, %v3742, %v4869
        %v5522 = vsel %vm2927, %v3743, %v4871
        %v5523 = vsel %vm2927, %v3744, %v4873
        %v5524 = vsel %vm2927, %v3745, %v4875
        %v5525 = vsel %vm2927, %v3746, %v4877
        %v5526 = vsel %vm2927, %v3747, %v4879
        %v5527 = vsel %vm2927, %v3748, %v4881
        %v5528 = vsel %vm2927, %v3749, %v4883
        %v5529 = vsel %vm2927, %v3750, %v4885
        %v5530 = vsel %vm2927, %v3751, %v4887
        %v5531 = vsel %vm2927, %v3752, %v4889
        %v5532 = vsel %vm2927, %v3753, %v4891
        %v5533 = vsel %vm2927, %v3754, %v4893
        %v5534 = vsel %vm2927, %v3755, %v4895
        %v5535 = vsel %vm2927, %v3756, %v4897
        %v5536 = vsel %vm2927, %v3757, %v4899
        %v5537 = vsel %vm2927, %v3758, %v4901
        %v5538 = vsel %vm2927, %v3759, %v4903
        %v5539 = vsel %vm2927, %v3760, %v4905
        %v5540 = vsel %vm2927, %v3761, %v4907
        %v5541 = vsel %vm2927, %v3762, %v4909
        %v5542 = vsel %vm2927, %v3763, %v4911
        %v5543 = vsel %vm2927, %v3764, %v4913
        %v5544 = vsel %vm2927, %v3765, %v4915
        %v5545 = vsel %vm2927, %v3766, %v4917
        %v5546 = vsel %vm2927, %v3767, %v4919
        %v5547 = vsel %vm2927, %v3768, %v4921
        %v5548 = vsel %vm5402, %v5500, %v5019
        %v5549 = vsel %vm5402, %v5501, %v5021
        %v5550 = vsel %vm5402, %v5502, %v5023
        %v5551 = vsel %vm5402, %v5503, %v5025
        %v5552 = vsel %vm5402, %v5504, %v5027
        %v5553 = vsel %vm5402, %v5505, %v5029
        %v5554 = vsel %vm5402, %v5506, %v5031
        %v5555 = vsel %vm5402, %v5507, %v5033
        %v5556 = vsel %vm5402, %v5508, %v5035
        %v5557 = vsel %vm5402, %v5509, %v5037
        %v5558 = vsel %vm5402, %v5510, %v5039
        %v5559 = vsel %vm5402, %v5511, %v5041
        %v5560 = vsel %vm5402, %v5512, %v5043
        %v5561 = vsel %vm5402, %v5513, %v5045
        %v5562 = vsel %vm5402, %v5514, %v5047
        %v5563 = vsel %vm5402, %v5515, %v5049
        %v5564 = vsel %vm5402, %v5516, %v5051
        %v5565 = vsel %vm5402, %v5517, %v5053
        %v5566 = vsel %vm5402, %v5518, %v5055
        %v5567 = vsel %vm5402, %v5519, %v5057
        %v5568 = vsel %vm5402, %v5520, %v5059
        %v5569 = vsel %vm5402, %v5521, %v5061
        %v5570 = vsel %vm5402, %v5522, %v5063
        %v5571 = vsel %vm5402, %v5523, %v5065
        %v5572 = vsel %vm5402, %v5524, %v5067
        %v5573 = vsel %vm5402, %v5525, %v5069
        %v5574 = vsel %vm5402, %v5526, %v5071
        %v5575 = vsel %vm5402, %v5527, %v5073
        %v5576 = vsel %vm5402, %v5528, %v5075
        %v5577 = vsel %vm5402, %v5529, %v5077
        %v5578 = vsel %vm5402, %v5530, %v5079
        %v5579 = vsel %vm5402, %v5531, %v5081
        %v5580 = vsel %vm5402, %v5532, %v5083
        %v5581 = vsel %vm5402, %v5533, %v5085
        %v5582 = vsel %vm5402, %v5534, %v5087
        %v5583 = vsel %vm5402, %v5535, %v5089
        %v5584 = vsel %vm5402, %v5536, %v5091
        %v5585 = vsel %vm5402, %v5537, %v5093
        %v5586 = vsel %vm5402, %v5538, %v5095
        %v5587 = vsel %vm5402, %v5539, %v5097
        %v5588 = vsel %vm5402, %v5540, %v5099
        %v5589 = vsel %vm5402, %v5541, %v5101
        %v5590 = vsel %vm5402, %v5542, %v5103
        %v5591 = vsel %vm5402, %v5543, %v5105
        %v5592 = vsel %vm5402, %v5544, %v5107
        %v5593 = vsel %vm5402, %v5545, %v5109
        %v5594 = vsel %vm5402, %v5546, %v5111
        %v5595 = vsel %vm5402, %v5547, %v5113
        %v5596 = vsel %vm5451, %v5548, %v5211
        %v5597 = vsel %vm5451, %v5549, %v5213
        %v5598 = vsel %vm5451, %v5550, %v5215
        %v5599 = vsel %vm5451, %v5551, %v5217
        %v5600 = vsel %vm5451, %v5552, %v5219
        %v5601 = vsel %vm5451, %v5553, %v5221
        %v5602 = vsel %vm5451, %v5554, %v5223
        %v5603 = vsel %vm5451, %v5555, %v5225
        %v5604 = vsel %vm5451, %v5556, %v5227
        %v5605 = vsel %vm5451, %v5557, %v5229
        %v5606 = vsel %vm5451, %v5558, %v5231
        %v5607 = vsel %vm5451, %v5559, %v5233
        %v5608 = vsel %vm5451, %v5560, %v5235
        %v5609 = vsel %vm5451, %v5561, %v5237
        %v5610 = vsel %vm5451, %v5562, %v5239
        %v5611 = vsel %vm5451, %v5563, %v5241
        %v5612 = vsel %vm5451, %v5564, %v5243
        %v5613 = vsel %vm5451, %v5565, %v5245
        %v5614 = vsel %vm5451, %v5566, %v5247
        %v5615 = vsel %vm5451, %v5567, %v5249
        %v5616 = vsel %vm5451, %v5568, %v5251
        %v5617 = vsel %vm5451, %v5569, %v5253
        %v5618 = vsel %vm5451, %v5570, %v5255
        %v5619 = vsel %vm5451, %v5571, %v5257
        %v5620 = vsel %vm5451, %v5572, %v5259
        %v5621 = vsel %vm5451, %v5573, %v5261
        %v5622 = vsel %vm5451, %v5574, %v5263
        %v5623 = vsel %vm5451, %v5575, %v5265
        %v5624 = vsel %vm5451, %v5576, %v5267
        %v5625 = vsel %vm5451, %v5577, %v5269
        %v5626 = vsel %vm5451, %v5578, %v5271
        %v5627 = vsel %vm5451, %v5579, %v5273
        %v5628 = vsel %vm5451, %v5580, %v5275
        %v5629 = vsel %vm5451, %v5581, %v5277
        %v5630 = vsel %vm5451, %v5582, %v5279
        %v5631 = vsel %vm5451, %v5583, %v5281
        %v5632 = vsel %vm5451, %v5584, %v5283
        %v5633 = vsel %vm5451, %v5585, %v5285
        %v5634 = vsel %vm5451, %v5586, %v5287
        %v5635 = vsel %vm5451, %v5587, %v5289
        %v5636 = vsel %vm5451, %v5588, %v5291
        %v5637 = vsel %vm5451, %v5589, %v5293
        %v5638 = vsel %vm5451, %v5590, %v5295
        %v5639 = vsel %vm5451, %v5591, %v5297
        %v5640 = vsel %vm5451, %v5592, %v5299
        %v5641 = vsel %vm5451, %v5593, %v5301
        %v5642 = vsel %vm5451, %v5594, %v5303
        %v5643 = vsel %vm5451, %v5595, %v5305
        %v5644 = vpack.c.bf16 %v5453, %v5452
        %v5645 = vpack.c.bf16 %v5597, %v5596
        %v5646 = vpack.c.bf16 %v4154, %v4170
        %v5647 = vpack.c.bf16 %v5455, %v5454
        %v5648 = vpack.c.bf16 %v5599, %v5598
        %v5649 = vpack.c.bf16 %v4171, %v4186
        %v5650 = vpack.c.bf16 %v5457, %v5456
        %v5651 = vpack.c.bf16 %v5601, %v5600
        %v5652 = vpack.c.bf16 %v4187, %v4155
        %v5653 = vpack.c.bf16 %v5459, %v5458
        %v5654 = vpack.c.bf16 %v5603, %v5602
        %v5655 = vpack.c.bf16 %v4156, %v4172
        %v5656 = vpack.c.bf16 %v5461, %v5460
        %v5657 = vpack.c.bf16 %v5605, %v5604
        %v5658 = vpack.c.bf16 %v4173, %v4188
        %v5659 = vpack.c.bf16 %v5463, %v5462
        %v5660 = vpack.c.bf16 %v5607, %v5606
        %v5661 = vpack.c.bf16 %v4189, %v4157
        %v5662 = vpack.c.bf16 %v5465, %v5464
        %v5663 = vpack.c.bf16 %v5609, %v5608
        %v5664 = vpack.c.bf16 %v4158, %v4174
        %v5665 = vpack.c.bf16 %v5467, %v5466
        %v5666 = vpack.c.bf16 %v5611, %v5610
        %v5667 = vpack.c.bf16 %v4175, %v4190
        %v5668 = vpack.c.bf16 %v5469, %v5468
        %v5669 = vpack.c.bf16 %v5613, %v5612
        %v5670 = vpack.c.bf16 %v4191, %v4159
        %v5671 = vpack.c.bf16 %v5471, %v5470
        %v5672 = vpack.c.bf16 %v5615, %v5614
        %v5673 = vpack.c.bf16 %v4160, %v4176
        %v5674 = vpack.c.bf16 %v5473, %v5472
        %v5675 = vpack.c.bf16 %v5617, %v5616
        %v5676 = vpack.c.bf16 %v4177, %v4192
        %v5677 = vpack.c.bf16 %v5475, %v5474
        %v5678 = vpack.c.bf16 %v5619, %v5618
        %v5679 = vpack.c.bf16 %v4193, %v4161
        %v5680 = vpack.c.bf16 %v5477, %v5476
        %v5681 = vpack.c.bf16 %v5621, %v5620
        %v5682 = vpack.c.bf16 %v4162, %v4178
        %v5683 = vpack.c.bf16 %v5479, %v5478
        %v5684 = vpack.c.bf16 %v5623, %v5622
        %v5685 = vpack.c.bf16 %v4179, %v4194
        %v5686 = vpack.c.bf16 %v5481, %v5480
        %v5687 = vpack.c.bf16 %v5625, %v5624
        %v5688 = vpack.c.bf16 %v4195, %v4163
        %v5689 = vpack.c.bf16 %v5483, %v5482
        %v5690 = vpack.c.bf16 %v5627, %v5626
        %v5691 = vpack.c.bf16 %v4164, %v4180
        %v5692 = vpack.c.bf16 %v5485, %v5484
        %v5693 = vpack.c.bf16 %v5629, %v5628
        %v5694 = vpack.c.bf16 %v4181, %v4196
        %v5695 = vpack.c.bf16 %v5487, %v5486
        %v5696 = vpack.c.bf16 %v5631, %v5630
        %v5697 = vpack.c.bf16 %v4197, %v4165
        %v5698 = vpack.c.bf16 %v5489, %v5488
        %v5699 = vpack.c.bf16 %v5633, %v5632
        %v5700 = vpack.c.bf16 %v4166, %v4182
        %v5701 = vpack.c.bf16 %v5491, %v5490
        %v5702 = vpack.c.bf16 %v5635, %v5634
        %v5703 = vpack.c.bf16 %v4183, %v4198
        %v5704 = vpack.c.bf16 %v5493, %v5492
        %v5705 = vpack.c.bf16 %v5637, %v5636
        %v5706 = vpack.c.bf16 %v4199, %v4167
        %v5707 = vpack.c.bf16 %v5495, %v5494
        %v5708 = vpack.c.bf16 %v5639, %v5638
        %v5709 = vpack.c.bf16 %v4168, %v4184
        %v5710 = vpack.c.bf16 %v5497, %v5496
        %v5711 = vpack.c.bf16 %v5641, %v5640
        %v5712 = vpack.c.bf16 %v4185, %v4200
        %v5713 = vpack.c.bf16 %v5499, %v5498
        %v5714 = vpack.c.bf16 %v5643, %v5642
        %v5715 = vpack.c.bf16 %v4201, %v4169
        %v5716 = vld [vmem:[%s3] sm:$0xf]
        %v5717 = vld [vmem:[%s3 + $0x4] sm:$0xf]
        %v5718 = vld [vmem:[%s3 + $0x8] sm:$0xf]
        %v5719 = vld [vmem:[%s3 + $0xc] sm:$0xf]
        %v5720 = vld [vmem:[%s3 + $0x10] sm:$0xf]
        %v5721 = vld [vmem:[%s3 + $0x14] sm:$0xf]
        %v5722 = vld [vmem:[%s3 + $0x18] sm:$0xf]
        %v5723 = vld [vmem:[%s3 + $0x1c] sm:$0xf]
        %v5724 = vld [vmem:[%s3 + $0x20] sm:$0xf]
        %v5725 = vld [vmem:[%s3 + $0x24] sm:$0xf]
        %v5726 = vld [vmem:[%s3 + $0x28] sm:$0xf]
        %v5727 = vld [vmem:[%s3 + $0x2c] sm:$0xf]
        %v5728 = vld [vmem:[%s3 + $0x30] sm:$0xf]
        %v5729 = vld [vmem:[%s3 + $0x34] sm:$0xf]
        %v5730 = vld [vmem:[%s3 + $0x38] sm:$0xf]
        %v5731 = vld [vmem:[%s3 + $0x3c] sm:$0xf]
        %v5732 = vld [vmem:[%s3 + $0x40] sm:$0xf]
        %v5733 = vld [vmem:[%s3 + $0x44] sm:$0xf]
        %v5734 = vld [vmem:[%s3 + $0x48] sm:$0xf]
        %v5735 = vld [vmem:[%s3 + $0x4c] sm:$0xf]
        %v5736 = vld [vmem:[%s3 + $0x50] sm:$0xf]
        %v5737 = vld [vmem:[%s3 + $0x54] sm:$0xf]
        %v5738 = vld [vmem:[%s3 + $0x58] sm:$0xf]
        %v5739 = vld [vmem:[%s3 + $0x5c] sm:$0xf]
        %v5740 = vld [vmem:[%s3 + $0x60] sm:$0xf]
        %v5741 = vld [vmem:[%s3 + $0x64] sm:$0xf]
        %v5742 = vld [vmem:[%s3 + $0x68] sm:$0xf]
        %v5743 = vld [vmem:[%s3 + $0x6c] sm:$0xf]
        %v5744 = vld [vmem:[%s3 + $0x70] sm:$0xf]
        %v5745 = vld [vmem:[%s3 + $0x74] sm:$0xf]
        %v5746 = vld [vmem:[%s3 + $0x78] sm:$0xf]
        %v5747 = vld [vmem:[%s3 + $0x7c] sm:$0xf]
        %v5748 = vld [vmem:[%s3 + $0x80] sm:$0xf]
        %v5749 = vld [vmem:[%s3 + $0x84] sm:$0xf]
        %v5750 = vld [vmem:[%s3 + $0x88] sm:$0xf]
        %v5751 = vld [vmem:[%s3 + $0x8c] sm:$0xf]
        %v5752 = vld [vmem:[%s4] sm:$0x1]
        %v5754 = vlaneseq
        %v5755 = vshrl.u32 %v5754, 7
        %v5756 = vsub.s32 0, %v5755
        %v5757 = vrot.slane %v5752, %v5756
        %v5795 = vunpack.c.l.b16 %v5716
        %v5796 = vunpack.c.l.b16 %v5717
        %v5797 = vunpack.c.l.b16 %v5718
        %v5798 = vunpack.c.l.b16 %v5719
        %v5799 = vunpack.c.l.b16 %v5720
        %v5800 = vunpack.c.l.b16 %v5721
        %v5801 = vunpack.c.l.b16 %v5722
        %v5802 = vunpack.c.l.b16 %v5723
        %v5803 = vunpack.c.l.b16 %v5724
        %v5804 = vunpack.c.l.b16 %v5725
        %v5805 = vunpack.c.l.b16 %v5726
        %v5806 = vunpack.c.l.b16 %v5727
        %v5807 = vunpack.c.l.b16 %v5728
        %v5808 = vunpack.c.l.b16 %v5729
        %v5809 = vunpack.c.l.b16 %v5730
        %v5810 = vunpack.c.l.b16 %v5731
        %v5811 = vunpack.c.l.b16 %v5732
        %v5812 = vunpack.c.l.b16 %v5733
        %v5813 = vunpack.c.l.b16 %v5734
        %v5814 = vunpack.c.l.b16 %v5735
        %v5815 = vunpack.c.l.b16 %v5736
        %v5816 = vunpack.c.l.b16 %v5737
        %v5817 = vunpack.c.l.b16 %v5738
        %v5818 = vunpack.c.l.b16 %v5739
        %v5819 = vunpack.c.l.b16 %v5740
        %v5820 = vunpack.c.l.b16 %v5741
        %v5821 = vunpack.c.l.b16 %v5742
        %v5822 = vunpack.c.l.b16 %v5743
        %v5823 = vunpack.c.l.b16 %v5744
        %v5824 = vunpack.c.l.b16 %v5745
        %v5825 = vunpack.c.l.b16 %v5746
        %v5826 = vunpack.c.l.b16 %v5747
        %v5827 = vunpack.c.l.b16 %v5748
        %v5828 = vunpack.c.l.b16 %v5749
        %v5829 = vunpack.c.l.b16 %v5750
        %v5830 = vunpack.c.l.b16 %v5751
        %v5831 = vpack.c.b16 %v5796, %v5795
        %v5832 = vpack.c.b16 %v5798, %v5797
        %v5833 = vpack.c.b16 %v5800, %v5799
        %v5834 = vpack.c.b16 %v5802, %v5801
        %v5835 = vpack.c.b16 %v5804, %v5803
        %v5836 = vpack.c.b16 %v5806, %v5805
        %v5837 = vpack.c.b16 %v5808, %v5807
        %v5838 = vpack.c.b16 %v5810, %v5809
        %v5839 = vpack.c.b16 %v5812, %v5811
        %v5840 = vpack.c.b16 %v5814, %v5813
        %v5841 = vpack.c.b16 %v5816, %v5815
        %v5842 = vpack.c.b16 %v5818, %v5817
        %v5843 = vpack.c.b16 %v5820, %v5819
        %v5844 = vpack.c.b16 %v5822, %v5821
        %v5845 = vpack.c.b16 %v5824, %v5823
        %v5846 = vpack.c.b16 %v5826, %v5825
        %v5847 = vpack.c.b16 %v5828, %v5827
        %v5848 = vpack.c.b16 %v5830, %v5829
        %v5868 = vsel %vm2927, %v5646, 0
        %v5871 = vsel %vm2927, %v5649, 0
        %v5874 = vsel %vm2927, %v5652, 0
        %v5877 = vsel %vm2927, %v5655, 0
        %v5880 = vsel %vm2927, %v5658, 0
        %v5883 = vsel %vm2927, %v5661, 0
        %v5886 = vsel %vm2927, %v5664, 0
        %v5889 = vsel %vm2927, %v5667, 0
        %v5892 = vsel %vm2927, %v5670, 0
        %v5895 = vsel %vm2927, %v5673, 0
        %v5898 = vsel %vm2927, %v5676, 0
        %v5901 = vsel %vm2927, %v5679, 0
        %v5904 = vsel %vm2927, %v5682, 0
        %v5907 = vsel %vm2927, %v5685, 0
        %v5910 = vsel %vm2927, %v5688, 0
        %v5913 = vsel %vm2927, %v5691, 0
        %v5916 = vsel %vm2927, %v5694, 0
        %v5919 = vsel %vm2927, %v5697, 0
        %v5922 = vsel %vm2927, %v5700, 0
        %v5925 = vsel %vm2927, %v5703, 0
        %v5928 = vsel %vm2927, %v5706, 0
        %v5931 = vsel %vm2927, %v5709, 0
        %v5934 = vsel %vm2927, %v5712, 0
        %v5937 = vsel %vm2927, %v5715, 0
        %5939 = vmatprep.subr.bf16.mxu0 0
        %5940 = vmatpush1.bf16.msra.mxu0 %v5831
        %5941 = vmatprep.subr.bf16.mxu0 0
        %5942 = vmatpush1.bf16.msra.mxu0 %v5832
        %5943 = vmatprep.subr.bf16.mxu0 0
        %5944 = vmatpush1.bf16.msra.mxu0 %v5833
        %5945 = vmatprep.subr.bf16.mxu0 0
        %5946 = vmatpush1.bf16.msra.mxu0 %v5834
        %5947 = vmatprep.subr.bf16.mxu0 0
        %5948 = vmatpush1.bf16.msra.mxu0 %v5835
        %5949 = vmatprep.subr.bf16.mxu0 0
        %5950 = vmatpush1.bf16.msra.mxu0 %v5836
        %5951 = vmatprep.subr.bf16.mxu0 0
        %5952 = vmatpush1.bf16.msra.mxu0 %v5837
        %5953 = vmatprep.subr.bf16.mxu0 0
        %5954 = vmatpush1.bf16.msra.mxu0 %v5838
        %5955 = vmatprep.subr.bf16.mxu0 0
        %5956 = vmatpush1.bf16.msra.mxu0 %v5839
        %5957 = vmatprep.subr.bf16.mxu0 0
        %5958 = vmatpush1.bf16.msra.mxu0 %v5840
        %5959 = vmatprep.subr.bf16.mxu0 0
        %5960 = vmatpush1.bf16.msra.mxu0 %v5841
        %5961 = vmatprep.subr.bf16.mxu0 0
        %5962 = vmatpush1.bf16.msra.mxu0 %v5842
        %5963 = vmatprep.subr.bf16.mxu0 0
        %5964 = vmatpush1.bf16.msra.mxu0 %v5843
        %5965 = vmatprep.subr.bf16.mxu0 0
        %5966 = vmatpush1.bf16.msra.mxu0 %v5844
        %5967 = vmatprep.subr.bf16.mxu0 0
        %5968 = vmatpush1.bf16.msra.mxu0 %v5845
        %5969 = vmatprep.subr.bf16.mxu0 0
        %5970 = vmatpush1.bf16.msra.mxu0 %v5846
        %5971 = vmatprep.mubr.bf16.mxu0 %v5645
        %5972 = vmatmul.mubr.bf16.gmra.mrb[0].mxu0 %v5644
        %v5973 = vpop.f32.mrb[0].mxu0
        %v5974 = vadd.f32 %v5757, %v5973
        %v5975 = vpop.f32.mrb[0].mxu0
        %v5976 = vpop.f32.mrb[0].mxu0
        %v5977 = vadd.f32 %v5757, %v5976
        %v5978 = vpop.f32.mrb[0].mxu0
        %5979 = vmatprep.mubr.bf16.mxu0 %v5648
        %5980 = vmatmul.mubr.bf16.gmra.mrb[0].mxu0 %v5647
        %v5981 = vpop.f32.mrb[0].mxu0
        %v5982 = vadd.f32 %v5757, %v5981
        %v5983 = vpop.f32.mrb[0].mxu0
        %v5984 = vpop.f32.mrb[0].mxu0
        %v5985 = vadd.f32 %v5757, %v5984
        %v5986 = vpop.f32.mrb[0].mxu0
        %5987 = vmatprep.mubr.bf16.mxu0 %v5651
        %5988 = vmatmul.mubr.bf16.gmra.mrb[0].mxu0 %v5650
        %v5989 = vpop.f32.mrb[0].mxu0
        %v5990 = vadd.f32 %v5757, %v5989
        %v5991 = vpop.f32.mrb[0].mxu0
        %v5992 = vpop.f32.mrb[0].mxu0
        %v5993 = vadd.f32 %v5757, %v5992
        %v5994 = vpop.f32.mrb[0].mxu0
        %5995 = vmatprep.mubr.bf16.mxu0 %v5654
        %5996 = vmatmul.mubr.bf16.gmra.mrb[0].mxu0 %v5653
        %v5997 = vpop.f32.mrb[0].mxu0
        %v5998 = vadd.f32 %v5757, %v5997
        %v5999 = vpop.f32.mrb[0].mxu0
        %v6000 = vpop.f32.mrb[0].mxu0
        %v6001 = vadd.f32 %v5757, %v6000
        %v6002 = vpop.f32.mrb[0].mxu0
        %6003 = vmatprep.mubr.bf16.mxu0 %v5657
        %6004 = vmatmul.mubr.bf16.gmra.mrb[0].mxu0 %v5656
        %v6005 = vpop.f32.mrb[0].mxu0
        %v6006 = vadd.f32 %v5757, %v6005
        %v6007 = vpop.f32.mrb[0].mxu0
        %v6008 = vpop.f32.mrb[0].mxu0
        %v6009 = vadd.f32 %v5757, %v6008
        %v6010 = vpop.f32.mrb[0].mxu0
        %6011 = vmatprep.mubr.bf16.mxu0 %v5660
        %6012 = vmatmul.mubr.bf16.gmra.mrb[0].mxu0 %v5659
        %v6013 = vpop.f32.mrb[0].mxu0
        %v6014 = vadd.f32 %v5757, %v6013
        %v6015 = vpop.f32.mrb[0].mxu0
        %v6016 = vpop.f32.mrb[0].mxu0
        %v6017 = vadd.f32 %v5757, %v6016
        %v6018 = vpop.f32.mrb[0].mxu0
        %6019 = vmatprep.mubr.bf16.mxu0 %v5663
        %6020 = vmatmul.mubr.bf16.gmra.mrb[0].mxu0 %v5662
        %v6021 = vpop.f32.mrb[0].mxu0
        %v6022 = vadd.f32 %v5757, %v6021
        %v6023 = vpop.f32.mrb[0].mxu0
        %v6024 = vpop.f32.mrb[0].mxu0
        %v6025 = vadd.f32 %v5757, %v6024
        %v6026 = vpop.f32.mrb[0].mxu0
        %6027 = vmatprep.mubr.bf16.mxu0 %v5666
        %6028 = vmatmul.mubr.bf16.gmra.mrb[0].mxu0 %v5665
        %v6029 = vpop.f32.mrb[0].mxu0
        %v6030 = vadd.f32 %v5757, %v6029
        %v6031 = vpop.f32.mrb[0].mxu0
        %v6032 = vpop.f32.mrb[0].mxu0
        %v6033 = vadd.f32 %v5757, %v6032
        %v6034 = vpop.f32.mrb[0].mxu0
        %6035 = vmatprep.mubr.bf16.mxu0 %v5669
        %6036 = vmatmul.mubr.bf16.gmra.mrb[0].mxu0 %v5668
        %v6037 = vpop.f32.mrb[0].mxu0
        %v6038 = vadd.f32 %v5757, %v6037
        %v6039 = vpop.f32.mrb[0].mxu0
        %v6040 = vpop.f32.mrb[0].mxu0
        %v6041 = vadd.f32 %v5757, %v6040
        %v6042 = vpop.f32.mrb[0].mxu0
        %6043 = vmatprep.mubr.bf16.mxu0 %v5672
        %6044 = vmatmul.mubr.bf16.gmra.mrb[0].mxu0 %v5671
        %v6045 = vpop.f32.mrb[0].mxu0
        %v6046 = vadd.f32 %v5757, %v6045
        %v6047 = vpop.f32.mrb[0].mxu0
        %v6048 = vpop.f32.mrb[0].mxu0
        %v6049 = vadd.f32 %v5757, %v6048
        %v6050 = vpop.f32.mrb[0].mxu0
        %6051 = vmatprep.mubr.bf16.mxu0 %v5675
        %6052 = vmatmul.mubr.bf16.gmra.mrb[0].mxu0 %v5674
        %v6053 = vpop.f32.mrb[0].mxu0
        %v6054 = vadd.f32 %v5757, %v6053
        %v6055 = vpop.f32.mrb[0].mxu0
        %v6056 = vpop.f32.mrb[0].mxu0
        %v6057 = vadd.f32 %v5757, %v6056
        %v6058 = vpop.f32.mrb[0].mxu0
        %6059 = vmatprep.mubr.bf16.mxu0 %v5678
        %6060 = vmatmul.mubr.bf16.gmra.mrb[0].mxu0 %v5677
        %v6061 = vpop.f32.mrb[0].mxu0
        %v6062 = vadd.f32 %v5757, %v6061
        %v6063 = vpop.f32.mrb[0].mxu0
        %v6064 = vpop.f32.mrb[0].mxu0
        %v6065 = vadd.f32 %v5757, %v6064
        %v6066 = vpop.f32.mrb[0].mxu0
        %6067 = vmatprep.mubr.bf16.mxu0 %v5681
        %6068 = vmatmul.mubr.bf16.gmra.mrb[0].mxu0 %v5680
        %v6069 = vpop.f32.mrb[0].mxu0
        %v6070 = vadd.f32 %v5757, %v6069
        %v6071 = vpop.f32.mrb[0].mxu0
        %v6072 = vpop.f32.mrb[0].mxu0
        %v6073 = vadd.f32 %v5757, %v6072
        %v6074 = vpop.f32.mrb[0].mxu0
        %6075 = vmatprep.mubr.bf16.mxu0 %v5684
        %6076 = vmatmul.mubr.bf16.gmra.mrb[0].mxu0 %v5683
        %v6077 = vpop.f32.mrb[0].mxu0
        %v6078 = vadd.f32 %v5757, %v6077
        %v6079 = vpop.f32.mrb[0].mxu0
        %v6080 = vpop.f32.mrb[0].mxu0
        %v6081 = vadd.f32 %v5757, %v6080
        %v6082 = vpop.f32.mrb[0].mxu0
        %6083 = vmatprep.mubr.bf16.mxu0 %v5687
        %6084 = vmatmul.mubr.bf16.gmra.mrb[0].mxu0 %v5686
        %v6085 = vpop.f32.mrb[0].mxu0
        %v6086 = vadd.f32 %v5757, %v6085
        %v6087 = vpop.f32.mrb[0].mxu0
        %v6088 = vpop.f32.mrb[0].mxu0
        %v6089 = vadd.f32 %v5757, %v6088
        %v6090 = vpop.f32.mrb[0].mxu0
        %6091 = vmatprep.mubr.bf16.mxu0 %v5690
        %6092 = vmatmul.mubr.bf16.gmra.mrb[0].mxu0 %v5689
        %v6093 = vpop.f32.mrb[0].mxu0
        %v6094 = vadd.f32 %v5757, %v6093
        %v6095 = vpop.f32.mrb[0].mxu0
        %v6096 = vpop.f32.mrb[0].mxu0
        %v6097 = vadd.f32 %v5757, %v6096
        %v6098 = vpop.f32.mrb[0].mxu0
        %6099 = vmatprep.mubr.bf16.mxu0 %v5693
        %6100 = vmatmul.mubr.bf16.gmra.mrb[0].mxu0 %v5692
        %v6101 = vpop.f32.mrb[0].mxu0
        %v6102 = vadd.f32 %v5757, %v6101
        %v6103 = vpop.f32.mrb[0].mxu0
        %v6104 = vpop.f32.mrb[0].mxu0
        %v6105 = vadd.f32 %v5757, %v6104
        %v6106 = vpop.f32.mrb[0].mxu0
        %6107 = vmatprep.mubr.bf16.mxu0 %v5696
        %6108 = vmatmul.mubr.bf16.gmra.mrb[0].mxu0 %v5695
        %v6109 = vpop.f32.mrb[0].mxu0
        %v6110 = vadd.f32 %v5757, %v6109
        %v6111 = vpop.f32.mrb[0].mxu0
        %v6112 = vpop.f32.mrb[0].mxu0
        %v6113 = vadd.f32 %v5757, %v6112
        %v6114 = vpop.f32.mrb[0].mxu0
        %6115 = vmatprep.mubr.bf16.mxu0 %v5699
        %6116 = vmatmul.mubr.bf16.gmra.mrb[0].mxu0 %v5698
        %v6117 = vpop.f32.mrb[0].mxu0
        %v6118 = vadd.f32 %v5757, %v6117
        %v6119 = vpop.f32.mrb[0].mxu0
        %v6120 = vpop.f32.mrb[0].mxu0
        %v6121 = vadd.f32 %v5757, %v6120
        %v6122 = vpop.f32.mrb[0].mxu0
        %6123 = vmatprep.mubr.bf16.mxu0 %v5702
        %6124 = vmatmul.mubr.bf16.gmra.mrb[0].mxu0 %v5701
        %v6125 = vpop.f32.mrb[0].mxu0
        %v6126 = vadd.f32 %v5757, %v6125
        %v6127 = vpop.f32.mrb[0].mxu0
        %v6128 = vpop.f32.mrb[0].mxu0
        %v6129 = vadd.f32 %v5757, %v6128
        %v6130 = vpop.f32.mrb[0].mxu0
        %6131 = vmatprep.mubr.bf16.mxu0 %v5705
        %6132 = vmatmul.mubr.bf16.gmra.mrb[0].mxu0 %v5704
        %v6133 = vpop.f32.mrb[0].mxu0
        %v6134 = vadd.f32 %v5757, %v6133
        %v6135 = vpop.f32.mrb[0].mxu0
        %v6136 = vpop.f32.mrb[0].mxu0
        %v6137 = vadd.f32 %v5757, %v6136
        %v6138 = vpop.f32.mrb[0].mxu0
        %6139 = vmatprep.mubr.bf16.mxu0 %v5708
        %6140 = vmatmul.mubr.bf16.gmra.mrb[0].mxu0 %v5707
        %v6141 = vpop.f32.mrb[0].mxu0
        %v6142 = vadd.f32 %v5757, %v6141
        %v6143 = vpop.f32.mrb[0].mxu0
        %v6144 = vpop.f32.mrb[0].mxu0
        %v6145 = vadd.f32 %v5757, %v6144
        %v6146 = vpop.f32.mrb[0].mxu0
        %6147 = vmatprep.mubr.bf16.mxu0 %v5711
        %6148 = vmatmul.mubr.bf16.gmra.mrb[0].mxu0 %v5710
        %v6149 = vpop.f32.mrb[0].mxu0
        %v6150 = vadd.f32 %v5757, %v6149
        %v6151 = vpop.f32.mrb[0].mxu0
        %v6152 = vpop.f32.mrb[0].mxu0
        %v6153 = vadd.f32 %v5757, %v6152
        %v6154 = vpop.f32.mrb[0].mxu0
        %6155 = vmatprep.mubr.bf16.mxu0 %v5714
        %6156 = vmatmul.mubr.bf16.gmra.mrb[0].mxu0 %v5713
        %v6157 = vpop.f32.mrb[0].mxu0
        %v6158 = vadd.f32 %v5757, %v6157
        %v6159 = vpop.f32.mrb[0].mxu0
        %v6160 = vpop.f32.mrb[0].mxu0
        %v6161 = vadd.f32 %v5757, %v6160
        %v6162 = vpop.f32.mrb[0].mxu0
        %6163 = vdwg.mxu0
        %6164 = vmatprep.subr.bf16.mxu0 0
        %6165 = vmatpush1.bf16.msra.mxu0 %v5847
        %6166 = vmatprep.subr.bf16.mxu0 0
        %6167 = vmatpush1.bf16.msra.mxu0 %v5848
        %6168 = vmatprep.subr.bf16.mxu0 0
        %6169 = vmatpush1.bf16.msra.mxu0 0
        %6170 = vmatprep.subr.bf16.mxu0 0
        %6171 = vmatpush1.bf16.msra.mxu0 0
        %6172 = vmatprep.subr.bf16.mxu0 0
        %6173 = vmatpush1.bf16.msra.mxu0 0
        %6174 = vmatprep.subr.bf16.mxu0 0
        %6175 = vmatpush1.bf16.msra.mxu0 0
        %6176 = vmatprep.subr.bf16.mxu0 0
        %6177 = vmatpush1.bf16.msra.mxu0 0
        %6178 = vmatprep.subr.bf16.mxu0 0
        %6179 = vmatpush1.bf16.msra.mxu0 0
        %6180 = vmatprep.subr.bf16.mxu0 0
        %6181 = vmatpush1.bf16.msra.mxu0 0
        %6182 = vmatprep.subr.bf16.mxu0 0
        %6183 = vmatpush1.bf16.msra.mxu0 0
        %6184 = vmatprep.subr.bf16.mxu0 0
        %6185 = vmatpush1.bf16.msra.mxu0 0
        %6186 = vmatprep.subr.bf16.mxu0 0
        %6187 = vmatpush1.bf16.msra.mxu0 0
        %6188 = vmatprep.subr.bf16.mxu0 0
        %6189 = vmatpush1.bf16.msra.mxu0 0
        %6190 = vmatprep.subr.bf16.mxu0 0
        %6191 = vmatpush1.bf16.msra.mxu0 0
        %6192 = vmatprep.subr.bf16.mxu0 0
        %6193 = vmatpush1.bf16.msra.mxu0 0
        %6194 = vmatprep.subr.bf16.mxu0 0
        %6195 = vmatpush1.bf16.msra.mxu0 0
        %6196 = vmatprep.mubr.bf16.mxu0 0
        %6197 = vmatmul.mubr.bf16.gmra.mrb[0].mxu0 %v5868
        %v6198 = vpop.f32.mrb[0].mxu0
        %v6199 = vadd.f32 %v5974, %v6198
        %v6200 = vpop.f32.mrb[0].mxu0
        %v6201 = vpop.f32.mrb[0].mxu0
        %v6202 = vadd.f32 %v5977, %v6201
        %v6203 = vpop.f32.mrb[0].mxu0
        %6204 = vmatprep.mubr.bf16.mxu0 0
        %6205 = vmatmul.mubr.bf16.gmra.mrb[0].mxu0 %v5871
        %v6206 = vpop.f32.mrb[0].mxu0
        %v6207 = vadd.f32 %v5982, %v6206
        %v6208 = vpop.f32.mrb[0].mxu0
        %v6209 = vpop.f32.mrb[0].mxu0
        %v6210 = vadd.f32 %v5985, %v6209
        %v6211 = vpop.f32.mrb[0].mxu0
        %6212 = vmatprep.mubr.bf16.mxu0 0
        %6213 = vmatmul.mubr.bf16.gmra.mrb[0].mxu0 %v5874
        %v6214 = vpop.f32.mrb[0].mxu0
        %v6215 = vadd.f32 %v5990, %v6214
        %v6216 = vpop.f32.mrb[0].mxu0
        %v6217 = vpop.f32.mrb[0].mxu0
        %v6218 = vadd.f32 %v5993, %v6217
        %v6219 = vpop.f32.mrb[0].mxu0
        %6220 = vmatprep.mubr.bf16.mxu0 0
        %6221 = vmatmul.mubr.bf16.gmra.mrb[0].mxu0 %v5877
        %v6222 = vpop.f32.mrb[0].mxu0
        %v6223 = vadd.f32 %v5998, %v6222
        %v6224 = vpop.f32.mrb[0].mxu0
        %v6225 = vpop.f32.mrb[0].mxu0
        %v6226 = vadd.f32 %v6001, %v6225
        %v6227 = vpop.f32.mrb[0].mxu0
        %6228 = vmatprep.mubr.bf16.mxu0 0
        %6229 = vmatmul.mubr.bf16.gmra.mrb[0].mxu0 %v5880
        %v6230 = vpop.f32.mrb[0].mxu0
        %v6231 = vadd.f32 %v6006, %v6230
        %v6232 = vpop.f32.mrb[0].mxu0
        %v6233 = vpop.f32.mrb[0].mxu0
        %v6234 = vadd.f32 %v6009, %v6233
        %v6235 = vpop.f32.mrb[0].mxu0
        %6236 = vmatprep.mubr.bf16.mxu0 0
        %6237 = vmatmul.mubr.bf16.gmra.mrb[0].mxu0 %v5883
        %v6238 = vpop.f32.mrb[0].mxu0
        %v6239 = vadd.f32 %v6014, %v6238
        %v6240 = vpop.f32.mrb[0].mxu0
        %v6241 = vpop.f32.mrb[0].mxu0
        %v6242 = vadd.f32 %v6017, %v6241
        %v6243 = vpop.f32.mrb[0].mxu0
        %6244 = vmatprep.mubr.bf16.mxu0 0
        %6245 = vmatmul.mubr.bf16.gmra.mrb[0].mxu0 %v5886
        %v6246 = vpop.f32.mrb[0].mxu0
        %v6247 = vadd.f32 %v6022, %v6246
        %v6248 = vpop.f32.mrb[0].mxu0
        %v6249 = vpop.f32.mrb[0].mxu0
        %v6250 = vadd.f32 %v6025, %v6249
        %v6251 = vpop.f32.mrb[0].mxu0
        %6252 = vmatprep.mubr.bf16.mxu0 0
        %6253 = vmatmul.mubr.bf16.gmra.mrb[0].mxu0 %v5889
        %v6254 = vpop.f32.mrb[0].mxu0
        %v6255 = vadd.f32 %v6030, %v6254
        %v6256 = vpop.f32.mrb[0].mxu0
        %v6257 = vpop.f32.mrb[0].mxu0
        %v6258 = vadd.f32 %v6033, %v6257
        %v6259 = vpop.f32.mrb[0].mxu0
        %6260 = vmatprep.mubr.bf16.mxu0 0
        %6261 = vmatmul.mubr.bf16.gmra.mrb[0].mxu0 %v5892
        %v6262 = vpop.f32.mrb[0].mxu0
        %v6263 = vadd.f32 %v6038, %v6262
        %v6264 = vpop.f32.mrb[0].mxu0
        %v6265 = vpop.f32.mrb[0].mxu0
        %v6266 = vadd.f32 %v6041, %v6265
        %v6267 = vpop.f32.mrb[0].mxu0
        %6268 = vmatprep.mubr.bf16.mxu0 0
        %6269 = vmatmul.mubr.bf16.gmra.mrb[0].mxu0 %v5895
        %v6270 = vpop.f32.mrb[0].mxu0
        %v6271 = vadd.f32 %v6046, %v6270
        %v6272 = vpop.f32.mrb[0].mxu0
        %v6273 = vpop.f32.mrb[0].mxu0
        %v6274 = vadd.f32 %v6049, %v6273
        %v6275 = vpop.f32.mrb[0].mxu0
        %6276 = vmatprep.mubr.bf16.mxu0 0
        %6277 = vmatmul.mubr.bf16.gmra.mrb[0].mxu0 %v5898
        %v6278 = vpop.f32.mrb[0].mxu0
        %v6279 = vadd.f32 %v6054, %v6278
        %v6280 = vpop.f32.mrb[0].mxu0
        %v6281 = vpop.f32.mrb[0].mxu0
        %v6282 = vadd.f32 %v6057, %v6281
        %v6283 = vpop.f32.mrb[0].mxu0
        %6284 = vmatprep.mubr.bf16.mxu0 0
        %6285 = vmatmul.mubr.bf16.gmra.mrb[0].mxu0 %v5901
        %v6286 = vpop.f32.mrb[0].mxu0
        %v6287 = vadd.f32 %v6062, %v6286
        %v6288 = vpop.f32.mrb[0].mxu0
        %v6289 = vpop.f32.mrb[0].mxu0
        %v6290 = vadd.f32 %v6065, %v6289
        %v6291 = vpop.f32.mrb[0].mxu0
        %6292 = vmatprep.mubr.bf16.mxu0 0
        %6293 = vmatmul.mubr.bf16.gmra.mrb[0].mxu0 %v5904
        %v6294 = vpop.f32.mrb[0].mxu0
        %v6295 = vadd.f32 %v6070, %v6294
        %v6296 = vpop.f32.mrb[0].mxu0
        %v6297 = vpop.f32.mrb[0].mxu0
        %v6298 = vadd.f32 %v6073, %v6297
        %v6299 = vpop.f32.mrb[0].mxu0
        %6300 = vmatprep.mubr.bf16.mxu0 0
        %6301 = vmatmul.mubr.bf16.gmra.mrb[0].mxu0 %v5907
        %v6302 = vpop.f32.mrb[0].mxu0
        %v6303 = vadd.f32 %v6078, %v6302
        %v6304 = vpop.f32.mrb[0].mxu0
        %v6305 = vpop.f32.mrb[0].mxu0
        %v6306 = vadd.f32 %v6081, %v6305
        %v6307 = vpop.f32.mrb[0].mxu0
        %6308 = vmatprep.mubr.bf16.mxu0 0
        %6309 = vmatmul.mubr.bf16.gmra.mrb[0].mxu0 %v5910
        %v6310 = vpop.f32.mrb[0].mxu0
        %v6311 = vadd.f32 %v6086, %v6310
        %v6312 = vpop.f32.mrb[0].mxu0
        %v6313 = vpop.f32.mrb[0].mxu0
        %v6314 = vadd.f32 %v6089, %v6313
        %v6315 = vpop.f32.mrb[0].mxu0
        %6316 = vmatprep.mubr.bf16.mxu0 0
        %6317 = vmatmul.mubr.bf16.gmra.mrb[0].mxu0 %v5913
        %v6318 = vpop.f32.mrb[0].mxu0
        %v6319 = vadd.f32 %v6094, %v6318
        %v6320 = vpop.f32.mrb[0].mxu0
        %v6321 = vpop.f32.mrb[0].mxu0
        %v6322 = vadd.f32 %v6097, %v6321
        %v6323 = vpop.f32.mrb[0].mxu0
        %6324 = vmatprep.mubr.bf16.mxu0 0
        %6325 = vmatmul.mubr.bf16.gmra.mrb[0].mxu0 %v5916
        %v6326 = vpop.f32.mrb[0].mxu0
        %v6327 = vadd.f32 %v6102, %v6326
        %v6328 = vpop.f32.mrb[0].mxu0
        %v6329 = vpop.f32.mrb[0].mxu0
        %v6330 = vadd.f32 %v6105, %v6329
        %v6331 = vpop.f32.mrb[0].mxu0
        %6332 = vmatprep.mubr.bf16.mxu0 0
        %6333 = vmatmul.mubr.bf16.gmra.mrb[0].mxu0 %v5919
        %v6334 = vpop.f32.mrb[0].mxu0
        %v6335 = vadd.f32 %v6110, %v6334
        %v6336 = vpop.f32.mrb[0].mxu0
        %v6337 = vpop.f32.mrb[0].mxu0
        %v6338 = vadd.f32 %v6113, %v6337
        %v6339 = vpop.f32.mrb[0].mxu0
        %6340 = vmatprep.mubr.bf16.mxu0 0
        %6341 = vmatmul.mubr.bf16.gmra.mrb[0].mxu0 %v5922
        %v6342 = vpop.f32.mrb[0].mxu0
        %v6343 = vadd.f32 %v6118, %v6342
        %v6344 = vpop.f32.mrb[0].mxu0
        %v6345 = vpop.f32.mrb[0].mxu0
        %v6346 = vadd.f32 %v6121, %v6345
        %v6347 = vpop.f32.mrb[0].mxu0
        %6348 = vmatprep.mubr.bf16.mxu0 0
        %6349 = vmatmul.mubr.bf16.gmra.mrb[0].mxu0 %v5925
        %v6350 = vpop.f32.mrb[0].mxu0
        %v6351 = vadd.f32 %v6126, %v6350
        %v6352 = vpop.f32.mrb[0].mxu0
        %v6353 = vpop.f32.mrb[0].mxu0
        %v6354 = vadd.f32 %v6129, %v6353
        %v6355 = vpop.f32.mrb[0].mxu0
        %6356 = vmatprep.mubr.bf16.mxu0 0
        %6357 = vmatmul.mubr.bf16.gmra.mrb[0].mxu0 %v5928
        %v6358 = vpop.f32.mrb[0].mxu0
        %v6359 = vadd.f32 %v6134, %v6358
        %v6360 = vpop.f32.mrb[0].mxu0
        %v6361 = vpop.f32.mrb[0].mxu0
        %v6362 = vadd.f32 %v6137, %v6361
        %v6363 = vpop.f32.mrb[0].mxu0
        %6364 = vmatprep.mubr.bf16.mxu0 0
        %6365 = vmatmul.mubr.bf16.gmra.mrb[0].mxu0 %v5931
        %v6366 = vpop.f32.mrb[0].mxu0
        %v6367 = vadd.f32 %v6142, %v6366
        %v6368 = vpop.f32.mrb[0].mxu0
        %v6369 = vpop.f32.mrb[0].mxu0
        %v6370 = vadd.f32 %v6145, %v6369
        %v6371 = vpop.f32.mrb[0].mxu0
        %6372 = vmatprep.mubr.bf16.mxu0 0
        %6373 = vmatmul.mubr.bf16.gmra.mrb[0].mxu0 %v5934
        %v6374 = vpop.f32.mrb[0].mxu0
        %v6375 = vadd.f32 %v6150, %v6374
        %v6376 = vpop.f32.mrb[0].mxu0
        %v6377 = vpop.f32.mrb[0].mxu0
        %v6378 = vadd.f32 %v6153, %v6377
        %v6379 = vpop.f32.mrb[0].mxu0
        %6380 = vmatprep.mubr.bf16.mxu0 0
        %6381 = vmatmul.mubr.bf16.gmra.mrb[0].mxu0 %v5937
        %v6382 = vpop.f32.mrb[0].mxu0
        %v6383 = vadd.f32 %v6158, %v6382
        %v6384 = vpop.f32.mrb[0].mxu0
        %v6385 = vpop.f32.mrb[0].mxu0
        %v6386 = vadd.f32 %v6161, %v6385
        %v6387 = vpop.f32.mrb[0].mxu0
        %6388 = vdwg.mxu0
        %v6389 = vmax.f32 %v6199, 0.0
        %v6390 = vmax.f32 %v6202, 0.0
        %v6391 = vmax.f32 %v6207, 0.0
        %v6392 = vmax.f32 %v6210, 0.0
        %v6393 = vmax.f32 %v6215, 0.0
        %v6394 = vmax.f32 %v6218, 0.0
        %v6395 = vmax.f32 %v6223, 0.0
        %v6396 = vmax.f32 %v6226, 0.0
        %v6397 = vmax.f32 %v6231, 0.0
        %v6398 = vmax.f32 %v6234, 0.0
        %v6399 = vmax.f32 %v6239, 0.0
        %v6400 = vmax.f32 %v6242, 0.0
        %v6401 = vmax.f32 %v6247, 0.0
        %v6402 = vmax.f32 %v6250, 0.0
        %v6403 = vmax.f32 %v6255, 0.0
        %v6404 = vmax.f32 %v6258, 0.0
        %v6405 = vmax.f32 %v6263, 0.0
        %v6406 = vmax.f32 %v6266, 0.0
        %v6407 = vmax.f32 %v6271, 0.0
        %v6408 = vmax.f32 %v6274, 0.0
        %v6409 = vmax.f32 %v6279, 0.0
        %v6410 = vmax.f32 %v6282, 0.0
        %v6411 = vmax.f32 %v6287, 0.0
        %v6412 = vmax.f32 %v6290, 0.0
        %v6413 = vmax.f32 %v6295, 0.0
        %v6414 = vmax.f32 %v6298, 0.0
        %v6415 = vmax.f32 %v6303, 0.0
        %v6416 = vmax.f32 %v6306, 0.0
        %v6417 = vmax.f32 %v6311, 0.0
        %v6418 = vmax.f32 %v6314, 0.0
        %v6419 = vmax.f32 %v6319, 0.0
        %v6420 = vmax.f32 %v6322, 0.0
        %v6421 = vmax.f32 %v6327, 0.0
        %v6422 = vmax.f32 %v6330, 0.0
        %v6423 = vmax.f32 %v6335, 0.0
        %v6424 = vmax.f32 %v6338, 0.0
        %v6425 = vmax.f32 %v6343, 0.0
        %v6426 = vmax.f32 %v6346, 0.0
        %v6427 = vmax.f32 %v6351, 0.0
        %v6428 = vmax.f32 %v6354, 0.0
        %v6429 = vmax.f32 %v6359, 0.0
        %v6430 = vmax.f32 %v6362, 0.0
        %v6431 = vmax.f32 %v6367, 0.0
        %v6432 = vmax.f32 %v6370, 0.0
        %v6433 = vmax.f32 %v6375, 0.0
        %v6434 = vmax.f32 %v6378, 0.0
        %v6435 = vmax.f32 %v6383, 0.0
        %v6436 = vmax.f32 %v6386, 0.0
        %v6437 = vmax.f32 %v6389, %v6392
        %v6438 = vmax.f32 %v6390, %v6393
        %v6439 = vmax.f32 %v6391, %v6394
        %v6440 = vmax.f32 %v6395, %v6398
        %v6441 = vmax.f32 %v6396, %v6399
        %v6442 = vmax.f32 %v6397, %v6400
        %v6443 = vmax.f32 %v6401, %v6404
        %v6444 = vmax.f32 %v6402, %v6405
        %v6445 = vmax.f32 %v6403, %v6406
        %v6446 = vmax.f32 %v6407, %v6410
        %v6447 = vmax.f32 %v6408, %v6411
        %v6448 = vmax.f32 %v6409, %v6412
        %v6449 = vmax.f32 %v6413, %v6416
        %v6450 = vmax.f32 %v6414, %v6417
        %v6451 = vmax.f32 %v6415, %v6418
        %v6452 = vmax.f32 %v6419, %v6422
        %v6453 = vmax.f32 %v6420, %v6423
        %v6454 = vmax.f32 %v6421, %v6424
        %v6455 = vmax.f32 %v6425, %v6428
        %v6456 = vmax.f32 %v6426, %v6429
        %v6457 = vmax.f32 %v6427, %v6430
        %v6458 = vmax.f32 %v6431, %v6434
        %v6459 = vmax.f32 %v6432, %v6435
        %v6460 = vmax.f32 %v6433, %v6436
        %v6461 = vrot.slane %v6437, 1
        %v6462 = vrot.slane %v6440, 1
        %v6463 = vrot.slane %v6443, 1
        %v6464 = vrot.slane %v6446, 1
        %v6465 = vrot.slane %v6449, 1
        %v6466 = vrot.slane %v6452, 1
        %v6467 = vrot.slane %v6455, 1
        %v6468 = vrot.slane %v6458, 1
        %v6469 = vrot.slane %v6438, 1
        %v6470 = vrot.slane %v6441, 1
        %v6471 = vrot.slane %v6444, 1
        %v6472 = vrot.slane %v6447, 1
        %v6473 = vrot.slane %v6450, 1
        %v6474 = vrot.slane %v6453, 1
        %v6475 = vrot.slane %v6456, 1
        %v6476 = vrot.slane %v6459, 1
        %v6477 = vrot.slane %v6439, 1
        %v6478 = vrot.slane %v6442, 1
        %v6479 = vrot.slane %v6445, 1
        %v6480 = vrot.slane %v6448, 1
        %v6481 = vrot.slane %v6451, 1
        %v6482 = vrot.slane %v6454, 1
        %v6483 = vrot.slane %v6457, 1
        %v6484 = vrot.slane %v6460, 1
        %v6485 = vsel %vm519, %v6469, %v6477
        %v6486 = vsel %vm519, %v6470, %v6478
        %v6487 = vsel %vm519, %v6471, %v6479
        %v6488 = vsel %vm519, %v6472, %v6480
        %v6489 = vsel %vm519, %v6473, %v6481
        %v6490 = vsel %vm519, %v6474, %v6482
        %v6491 = vsel %vm519, %v6475, %v6483
        %v6492 = vsel %vm519, %v6476, %v6484
        %v6493 = vsel %vm519, %v6461, %v6469
        %v6494 = vsel %vm519, %v6462, %v6470
        %v6495 = vsel %vm519, %v6463, %v6471
        %v6496 = vsel %vm519, %v6464, %v6472
        %v6497 = vsel %vm519, %v6465, %v6473
        %v6498 = vsel %vm519, %v6466, %v6474
        %v6499 = vsel %vm519, %v6467, %v6475
        %v6500 = vsel %vm519, %v6468, %v6476
        %v6501 = vsel %vm519, %v6477, %v6461
        %v6502 = vsel %vm519, %v6478, %v6462
        %v6503 = vsel %vm519, %v6479, %v6463
        %v6504 = vsel %vm519, %v6480, %v6464
        %v6505 = vsel %vm519, %v6481, %v6465
        %v6506 = vsel %vm519, %v6482, %v6466
        %v6507 = vsel %vm519, %v6483, %v6467
        %v6508 = vsel %vm519, %v6484, %v6468
        %v6509 = vmax.f32 %v6437, %v6493
        %v6510 = vmax.f32 %v6438, %v6485
        %v6511 = vmax.f32 %v6439, %v6501
        %v6512 = vmax.f32 %v6440, %v6494
        %v6513 = vmax.f32 %v6441, %v6486
        %v6514 = vmax.f32 %v6442, %v6502
        %v6515 = vmax.f32 %v6443, %v6495
        %v6516 = vmax.f32 %v6444, %v6487
        %v6517 = vmax.f32 %v6445, %v6503
        %v6518 = vmax.f32 %v6446, %v6496
        %v6519 = vmax.f32 %v6447, %v6488
        %v6520 = vmax.f32 %v6448, %v6504
        %v6521 = vmax.f32 %v6449, %v6497
        %v6522 = vmax.f32 %v6450, %v6489
        %v6523 = vmax.f32 %v6451, %v6505
        %v6524 = vmax.f32 %v6452, %v6498
        %v6525 = vmax.f32 %v6453, %v6490
        %v6526 = vmax.f32 %v6454, %v6506
        %v6527 = vmax.f32 %v6455, %v6499
        %v6528 = vmax.f32 %v6456, %v6491
        %v6529 = vmax.f32 %v6457, %v6507
        %v6530 = vmax.f32 %v6458, %v6500
        %v6531 = vmax.f32 %v6459, %v6492
        %v6532 = vmax.f32 %v6460, %v6508
        %6533 = vst.msk [vmem:[#allocation4] sm:$0xff] %vm2927, %v6509
        %6534 = vst.msk [vmem:[#allocation4 + $0x8] sm:$0xff] %vm2927, %v6510
        %6535 = vst.msk [vmem:[#allocation4 + $0x10] sm:$0xff] %vm2927, %v6511
        %6536 = vst.msk [vmem:[#allocation4 + $0x18] sm:$0xff] %vm2927, %v6512
        %6537 = vst.msk [vmem:[#allocation4 + $0x20] sm:$0xff] %vm2927, %v6513
        %6538 = vst.msk [vmem:[#allocation4 + $0x28] sm:$0xff] %vm2927, %v6514
        %6539 = vst.msk [vmem:[#allocation4 + $0x30] sm:$0xff] %vm2927, %v6515
        %6540 = vst.msk [vmem:[#allocation4 + $0x38] sm:$0xff] %vm2927, %v6516
        %6541 = vst.msk [vmem:[#allocation4 + $0x40] sm:$0xff] %vm2927, %v6517
        %6542 = vst.msk [vmem:[#allocation4 + $0x48] sm:$0xff] %vm2927, %v6518
        %6543 = vst.msk [vmem:[#allocation4 + $0x50] sm:$0xff] %vm2927, %v6519
        %6544 = vst.msk [vmem:[#allocation4 + $0x58] sm:$0xff] %vm2927, %v6520
        %6545 = vst.msk [vmem:[#allocation4 + $0x60] sm:$0xff] %vm2927, %v6521
        %6546 = vst.msk [vmem:[#allocation4 + $0x68] sm:$0xff] %vm2927, %v6522
        %6547 = vst.msk [vmem:[#allocation4 + $0x70] sm:$0xff] %vm2927, %v6523
        %6548 = vst.msk [vmem:[#allocation4 + $0x78] sm:$0xff] %vm2927, %v6524
        %6549 = vst.msk [vmem:[#allocation4 + $0x80] sm:$0xff] %vm2927, %v6525
        %6550 = vst.msk [vmem:[#allocation4 + $0x88] sm:$0xff] %vm2927, %v6526
        %6551 = vst.msk [vmem:[#allocation4 + $0x90] sm:$0xff] %vm2927, %v6527
        %6552 = vst.msk [vmem:[#allocation4 + $0x98] sm:$0xff] %vm2927, %v6528
        %6553 = vst.msk [vmem:[#allocation4 + $0xa0] sm:$0xff] %vm2927, %v6529
        %6554 = vst.msk [vmem:[#allocation4 + $0xa8] sm:$0xff] %vm2927, %v6530
        %6555 = vst.msk [vmem:[#allocation4 + $0xb0] sm:$0xff] %vm2927, %v6531
        %6556 = vst.msk [vmem:[#allocation4 + $0xb8] sm:$0xff] %vm2927, %v6532
        %v6557 = vld [vmem:[#allocation4] ss:$2 sm:$0xff]
        %s6558 = scalar_lea.vmem [#allocation4], 24
        %v6559 = vld [vmem:[%s6558] ss:$2 sm:$0xff]
        %s6560 = scalar_lea.vmem [#allocation4], 48
        %v6561 = vld [vmem:[%s6560] ss:$2 sm:$0xff]
        %s6562 = scalar_lea.vmem [#allocation4], 72
        %v6563 = vld [vmem:[%s6562] ss:$2 sm:$0xff]
        %s6564 = scalar_lea.vmem [#allocation4], 96
        %v6565 = vld [vmem:[%s6564] ss:$2 sm:$0xff]
        %s6566 = scalar_lea.vmem [#allocation4], 120
        %v6567 = vld [vmem:[%s6566] ss:$2 sm:$0xff]
        %s6568 = scalar_lea.vmem [#allocation4], 144
        %v6569 = vld [vmem:[%s6568] ss:$2 sm:$0xff]
        %s6570 = scalar_lea.vmem [#allocation4], 168
        %v6571 = vld [vmem:[%s6570] ss:$2 sm:$0xff]
        %6572 = vst.msk [vmem:[%s217] sm:$0xff] %vm2927, %v6557
        %6573 = vst.msk [vmem:[%s217 + $0x8] sm:$0xff] %vm2927, %v6559
        %6574 = vst.msk [vmem:[%s217 + $0x10] sm:$0xff] %vm2927, %v6561
        %6575 = vst.msk [vmem:[%s217 + $0x18] sm:$0xff] %vm2927, %v6563
        %6576 = vst.msk [vmem:[%s217 + $0x20] sm:$0xff] %vm2927, %v6565
        %6577 = vst.msk [vmem:[%s217 + $0x28] sm:$0xff] %vm2927, %v6567
        %6578 = vst.msk [vmem:[%s217 + $0x30] sm:$0xff] %vm2927, %v6569
        %6579 = vst.msk [vmem:[%s217 + $0x38] sm:$0xff] %vm2927, %v6571
        %s6580 = sand.u32 %s137, 1
        %s6581 = scalar_lea.sflag [#allocation6], %s6580
        %s6582 = sand.u32 %s137, 1
        %s6583 = smul.addr %s6582, 64
        %s6584 = scalar_lea.vmem [#allocation5], %s6583
        // Predicated region
        $region41: #{conv3x3_block_x2.1} parent=39 // pred_check
          %p6585 = pneg %p147
        $region42: #{conv3x3_block_x2.1} parent=39 // pred_check_branch
          %6587 = sbr.rel (%p6585) target = $region44
        $region43: #{conv3x3_block_x2.1} parent=39 // pred_region
          %s6589 = ssub.s32 1024, 1024
          %6590 = vsyncadd %s6581, %s6589
          %s6591 = smul.addr %s19, 8
          %s6592 = smul.addr %s6591, 128
          %s6593 = scalar_lea.hbm %s5, %s6592
          %s6594 = sshll.u32 %s6584, 4
          %s6595 = int_to_ptr.vmem [resolvable:$true] %s6594
          %6600 = dma.vmem_to_hbm [thread:$0]  %s6595, 1024, %s6593, %s6581, 128, 128, 8
        $region44: #{conv3x3_block_x2.1} parent=39 // pred_fallthru
          _
      $region40: #{conv3x3_block_x2.1} parent=5 // pred_fallthru
        _
      %p6601 = scmp.le.s32.totalorder 2, %s14
      // Predicated region
      $region45: #{conv3x3_block_x2.1} parent=5 // pred_check
        %p6602 = pneg %p6601
      $region46: #{conv3x3_block_x2.1} parent=5 // pred_check_branch
        %6604 = sbr.rel (%p6602) target = $region48
      $region47: #{conv3x3_block_x2.1} parent=5 // pred_region
        %s6605 = ssub.s32 %s14, 2
        // Predicated region
        $region49: #{conv3x3_block_x2.1} parent=47 // pred_check
          %p6606 = pneg %p153
        $region50: #{conv3x3_block_x2.1} parent=47 // pred_check_branch
          %6608 = sbr.rel (%p6606) target = $region52
        $region51: #{conv3x3_block_x2.1} parent=47 // pred_region
          %s6609 = sand.u32 %s138, 1
          %s6610 = scalar_lea.sflag [#allocation6], %s6609
          %s6611 = sand.u32 %s138, 1
          %s6612 = smul.addr %s6611, 64
          %s6613 = scalar_lea.vmem [#allocation5], %s6612
          %6614 = dma.done %s6610, 1024
        $region52: #{conv3x3_block_x2.1} parent=47 // pred_fallthru
          _
      $region48: #{conv3x3_block_x2.1} parent=5 // pred_fallthru
        _
    $region6: #{conv3x3_block_x2.1} parent=1 // loop_footer
      %s18 = sadd.s32 1, %s14
    $region7: #{conv3x3_block_x2.1} parent=1 // loop_footer_branch
      %13 = sbr.rel target = $region3
    $region8: #{conv3x3_block_x2.1} parent=1 // loop_exit
      _
    %6615 = vsyncpa [#allocation6], 1
    %s6616 = scalar_lea.sflag [#allocation6], 1
    %6617 = vsyncpa %s6616, 1

</llo_original>
